<compile_context>
chip_gen: v7x
topology: tpu7x:2x2x1
jax: 0.10.0
libtpu: 0.0.40
codegen_flags: <defaults>
</compile_context>

<pallas_src>
import jax
import jax.numpy as jnp
from jax import lax
from jax.experimental import pallas as pl
from jax.experimental.pallas import tpu as pltpu

# ---------------- synthetic (small) VampNet config ----------------
B = 2
T_SAMPLES = 2048
HOP = 256                          # codec hop size
T_FRAMES = T_SAMPLES // HOP        # 8 frames
N_CODEBOOKS_CODEC = 8              # total codec codebooks
N_CODEBOOKS_COARSE = 4             # coarse model uses the first 4
LATENT_DIM = 8                     # per-codebook latent dim
CODEBOOK_SIZE = 128
D_MODEL = 128
N_HEADS = 2
HEAD_DIM = D_MODEL // N_HEADS
N_LAYERS = 2
FF_DIM = 4 * D_MODEL               # GatedGELU: split into two halves of 2*D
REL_BUCKETS = 32
REL_MAX_DIST = 128
EXTRACT_LAYER = -1


# ---------------- Pallas kernel 1: codec encode + VQ + from_codes + out_proj ----------------
def _encode_embed_kernel(frames_ref, w_enc_ref, b_enc_ref, cbt_ref, cb_ref,
                         w_emb_ref, b_emb_ref, o_ref):
    # synthetic codec encoder: frame projection, kept entirely in VMEM (no HBM intermediate)
    enc = (jnp.dot(frames_ref[...], w_enc_ref[...],
                   preferred_element_type=jnp.float32)
           + b_enc_ref[...])                                            # (M, n_cb_codec*d)

    M = enc.shape[0]
    w_emb = w_emb_ref[...]                                              # (n_cb_coarse*d, D)
    x0 = jnp.zeros((M, D_MODEL), jnp.float32)

    # per-coarse-codebook VQ argmin + nearest-centroid gather, folded straight into the
    # embedding out_proj so every accumulation/store is lane-dense (width D_MODEL=128).
    for i in range(N_CODEBOOKS_COARSE):
        lat = enc[:, i * LATENT_DIM:(i + 1) * LATENT_DIM]               # (M, d)
        ct = cbt_ref[i]                                                 # (d, K)
        cbi = cb_ref[i]                                                 # (K, d)
        csq = jnp.sum(ct * ct, axis=0, keepdims=True)                   # (1, K)
        # squared distance up to per-row |x|^2 constant (irrelevant for argmin)
        scores = (-2.0 * jnp.dot(lat, ct, preferred_element_type=jnp.float32)
                  + csq)                                                # (M, K)
        m = jnp.min(scores, axis=-1, keepdims=True)
        iota = lax.broadcasted_iota(jnp.int32, scores.shape, 1)
        idx = jnp.min(jnp.where(scores <= m, iota, CODEBOOK_SIZE),
                      axis=-1, keepdims=True)                           # argmin, lowest index
        onehot = (iota == idx).astype(jnp.float32)                      # (M, K)
        centroid = jnp.dot(onehot, cbi,
                           preferred_element_type=jnp.float32)          # (M, d) = codebook[idx]
        x0 = x0 + jnp.dot(centroid,
                          w_emb[i * LATENT_DIM:(i + 1) * LATENT_DIM, :],
                          preferred_element_type=jnp.float32)           # (M, D)

    o_ref[...] = x0 + b_emb_ref[...]


def encode_embed(frames, params):
    M = frames.shape[0]
    cb = params["codebooks"][:N_CODEBOOKS_COARSE]                       # (n_cb, K, d)
    cb_t = jnp.transpose(cb, (0, 2, 1))                                 # (n_cb, d, K)
    n_lat = N_CODEBOOKS_CODEC * LATENT_DIM
    return pl.pallas_call(
        _encode_embed_kernel,
        out_shape=jax.ShapeDtypeStruct((M, D_MODEL), jnp.float32),
        grid=(1,),
        in_specs=[
            pl.BlockSpec((M, HOP), lambda i: (0, 0)),
            pl.BlockSpec((HOP, n_lat), lambda i: (0, 0)),
            pl.BlockSpec((1, n_lat), lambda i: (0, 0)),
            pl.BlockSpec((N_CODEBOOKS_COARSE, LATENT_DIM, CODEBOOK_SIZE),
                         lambda i: (0, 0, 0)),
            pl.BlockSpec((N_CODEBOOKS_COARSE, CODEBOOK_SIZE, LATENT_DIM),
                         lambda i: (0, 0, 0)),
            pl.BlockSpec((N_CODEBOOKS_COARSE * LATENT_DIM, D_MODEL), lambda i: (0, 0)),
            pl.BlockSpec((1, D_MODEL), lambda i: (0, 0)),
        ],
        out_specs=pl.BlockSpec((M, D_MODEL), lambda i: (0, 0)),
    )(frames, params["w_enc"], params["b_enc"].reshape(1, -1),
      cb_t, cb, params["w_emb"], params["b_emb"].reshape(1, -1))


# ---------------- Pallas kernel 2: fused transformer stack ----------------
def _stack_kernel(x0_ref, g1_ref, wqkv_ref, wo_ref, bias_ref, g2_ref,
                  w1_ref, w2_ref, o_ref):
    l = pl.program_id(1)
    eps = 1e-6

    # layer 0: load the embedded input into the resident output block
    @pl.when(l == 0)
    def _():
        o_ref[...] = x0_ref[...]

    x = o_ref[0]                                                        # (T, D), resident

    # --- RMSNorm 1 + fused QKV projection (single (T,D)@(D,3D) matmul) ---
    y = x * lax.rsqrt(jnp.mean(x * x, axis=-1, keepdims=True) + eps) * g1_ref[0]
    qkv = jnp.dot(y, wqkv_ref[0], preferred_element_type=jnp.float32)   # (T, 3D)
    q = qkv[:, :D_MODEL]
    k = qkv[:, D_MODEL:2 * D_MODEL]
    v = qkv[:, 2 * D_MODEL:]

    # --- MHA with T5-style relative position bias.  Per-head outputs are folded
    #     directly into the output projection (attn_concat @ wo == sum_h attn_h @ wo_h),
    #     so there is no concat / lane-sparse intermediate. ---
    wo = wo_ref[0]                                                      # (D, D)
    attn_proj = jnp.zeros((x.shape[0], D_MODEL), jnp.float32)
    for h in range(N_HEADS):
        sl = slice(h * HEAD_DIM, (h + 1) * HEAD_DIM)
        s = lax.dot_general(q[:, sl], k[:, sl], (((1,), (1,)), ((), ())),
                            preferred_element_type=jnp.float32)         # (T, T)
        s = s + bias_ref[h]
        s = s - jnp.max(s, axis=-1, keepdims=True)
        p = jnp.exp(s)
        p = p * pl.reciprocal(jnp.sum(p, axis=-1, keepdims=True), approx=True)
        pv = jnp.dot(p, v[:, sl], preferred_element_type=jnp.float32)   # (T, hd)
        attn_proj = attn_proj + jnp.dot(pv, wo[sl, :],
                                        preferred_element_type=jnp.float32)  # (T, D)
    x = x + attn_proj

    # --- RMSNorm 2 + GatedGELU feed-forward ---
    y2 = x * lax.rsqrt(jnp.mean(x * x, axis=-1, keepdims=True) + eps) * g2_ref[0]
    h12 = jnp.dot(y2, w1_ref[0], preferred_element_type=jnp.float32)    # (T, 4D)
    half = FF_DIM // 2
    a, gate = h12[:, :half], h12[:, half:]
    # TODO(synk): VampNet's GatedGELU may use exact erf GELU; tanh approximation kept here.
    ff = jnp.dot(a * jax.nn.gelu(gate, approximate=True), w2_ref[0],
                 preferred_element_type=jnp.float32)

    o_ref[0] = x + ff


def transformer_stack(x0, params, pos_bias):
    Bb, T, D = x0.shape
    lp = params["layers"]
    L = lp["wqkv"].shape[0]
    # only layers up to (and including) the extracted layer affect the result
    n_run = (EXTRACT_LAYER % L) + 1
    H = pos_bias.shape[0]
    return pl.pallas_call(
        _stack_kernel,
        out_shape=jax.ShapeDtypeStruct((Bb, T, D), jnp.float32),
        grid=(Bb, n_run),
        in_specs=[
            pl.BlockSpec((1, T, D), lambda b, l: (b, 0, 0)),            # x0 (fetched once per b)
            pl.BlockSpec((1, 1, D), lambda b, l: (l, 0, 0)),            # rms1 gain
            pl.BlockSpec((1, D, 3 * D), lambda b, l: (l, 0, 0)),        # fused QKV weight
            pl.BlockSpec((1, D, D), lambda b, l: (l, 0, 0)),            # output proj
            pl.BlockSpec((H, T, T), lambda b, l: (0, 0, 0)),            # shared rel-pos bias
            pl.BlockSpec((1, 1, D), lambda b, l: (l, 0, 0)),            # rms2 gain
            pl.BlockSpec((1, D, FF_DIM), lambda b, l: (l, 0, 0)),       # FFN in
            pl.BlockSpec((1, FF_DIM // 2, D), lambda b, l: (l, 0, 0)),  # FFN out
        ],
        out_specs=pl.BlockSpec((1, T, D), lambda b, l: (b, 0, 0)),      # resident over l
        compiler_params=pltpu.CompilerParams(
            dimension_semantics=("parallel", "arbitrary")),
    )(x0, lp["rms1"], lp["wqkv"], lp["wo"], pos_bias, lp["rms2"], lp["w1"], lp["w2"])


# ---------------- glue: T5-style relative position bias (plain JAX, computed once) ----------------
def _t5_relative_bucket(rel_pos, num_buckets, max_distance):
    num_buckets = num_buckets // 2
    ret = (rel_pos > 0).astype(jnp.int32) * num_buckets
    n = jnp.abs(rel_pos)
    max_exact = num_buckets // 2
    is_small = n < max_exact
    large = max_exact + (
        jnp.log(n.astype(jnp.float32) / max_exact + 1e-6)
        / jnp.log(max_distance / max_exact)
        * (num_buckets - max_exact)).astype(jnp.int32)
    large = jnp.minimum(large, num_buckets - 1)
    return ret + jnp.where(is_small, n, large)


def compute_position_bias(rel_table, T):
    ctx = jnp.arange(T)[:, None]
    mem = jnp.arange(T)[None, :]
    buckets = _t5_relative_bucket(mem - ctx, REL_BUCKETS, REL_MAX_DIST)  # (T, T)
    bias = rel_table[buckets]                                            # (T, T, H)
    return jnp.transpose(bias, (2, 0, 1))                                # (H, T, T)


# ---------------- deterministic synthetic parameters ----------------
def init_params(key):
    keys = iter(jax.random.split(key, 64))

    def dense(shape):
        return jax.random.normal(next(keys), shape, jnp.float32) / jnp.sqrt(shape[0])

    p = {
        # synthetic codec "encoder": framing + linear projection
        "w_enc": dense((HOP, N_CODEBOOKS_CODEC * LATENT_DIM)),
        "b_enc": jnp.zeros((N_CODEBOOKS_CODEC * LATENT_DIM,), jnp.float32),
        # codec quantizer codebooks (n_cb, K, d)
        "codebooks": jax.random.normal(
            next(keys), (N_CODEBOOKS_CODEC, CODEBOOK_SIZE, LATENT_DIM), jnp.float32),
        # coarse embedding 1x1 conv (channels-last linear)
        "w_emb": dense((N_CODEBOOKS_COARSE * LATENT_DIM, D_MODEL)),
        "b_emb": jnp.zeros((D_MODEL,), jnp.float32),
        # relative-attention bias table (owned by first layer, shared by all)
        "rel_table": jax.random.normal(next(keys), (REL_BUCKETS, N_HEADS), jnp.float32) * 0.02,
    }
    g1, wqkv, wo, g2, w1, w2 = [], [], [], [], [], []
    for _ in range(N_LAYERS):
        g1.append(jnp.ones((1, D_MODEL), jnp.float32))
        wqkv.append(dense((D_MODEL, 3 * D_MODEL)))       # fused [Wq | Wk | Wv]
        wo.append(dense((D_MODEL, D_MODEL)))
        g2.append(jnp.ones((1, D_MODEL), jnp.float32))
        w1.append(dense((D_MODEL, FF_DIM)))
        w2.append(dense((FF_DIM // 2, D_MODEL)))
    # stack along a leading layer axis so one pallas_call can index layers via index_map
    p["layers"] = {
        "rms1": jnp.stack(g1), "wqkv": jnp.stack(wqkv), "wo": jnp.stack(wo),
        "rms2": jnp.stack(g2), "w1": jnp.stack(w1), "w2": jnp.stack(w2),
    }
    return p


# ---------------- full forward (VampNetModule.forward) ----------------
def vampnet_forward(params, wav):
    Bb = wav.shape[0]

    # codec.encode + z[:, :coarse.n_codebooks] + embedding.from_codes + out_proj,
    # all inside one fused Pallas kernel producing the lane-dense (B*T, D) activation.
    frames = wav[:, 0, :].reshape(Bb * T_FRAMES, HOP)
    x0 = encode_embed(frames, params).reshape(Bb, T_FRAMES, D_MODEL)

    # coarse transformer stack with return_activations=True; extract_layer == -1 means
    # only the final layer's activation is needed, so it is the only one written out.
    pos_bias = compute_position_bias(params["rel_table"], T_FRAMES)
    return transformer_stack(x0, params, pos_bias)                      # (B, T_frames, D)


if __name__ == "__main__":
    key = jax.random.PRNGKey(0)
    pkey, wkey = jax.random.split(key)
    params = init_params(pkey)
    wav = jax.random.normal(wkey, (B, 1, T_SAMPLES), jnp.float32)

    out = jax.jit(vampnet_forward)(params, wav)
    out = jax.block_until_ready(out)

    assert out.shape == (B, T_FRAMES, D_MODEL), out.shape
    assert bool(jnp.all(jnp.isfinite(out)))
    print("KERNEL_OK")
</pallas_src>

<mosaic_0001>
module attributes {stable_mosaic.version = 11 : i64} {
  func.func @_encode_embed_kernel(%arg0: i32, %arg1: memref<16x256xf32, #tpu.memory_space<vmem>>, %arg2: memref<256x64xf32, #tpu.memory_space<vmem>>, %arg3: memref<1x64xf32, #tpu.memory_space<vmem>>, %arg4: memref<4x8x128xf32, #tpu.memory_space<vmem>>, %arg5: memref<4x128x8xf32, #tpu.memory_space<vmem>>, %arg6: memref<32x128xf32, #tpu.memory_space<vmem>>, %arg7: memref<1x128xf32, #tpu.memory_space<vmem>>, %arg8: memref<16x128xf32, #tpu.memory_space<vmem>>) attributes {dimension_semantics = [#tpu.dimension_semantics<arbitrary>], iteration_bounds = array<i64: 1>, scalar_prefetch = 0 : i64, scratch_operands = 0 : i64, tpu.core_type = #tpu.core_type<tc>, window_params = [{pipeline_mode = #tpu.pipeline_mode<synchronous>, transform_indices = @transform_0, window_bounds = array<i64: 16, 256>}, {pipeline_mode = #tpu.pipeline_mode<synchronous>, transform_indices = @transform_1, window_bounds = array<i64: 256, 64>}, {pipeline_mode = #tpu.pipeline_mode<synchronous>, transform_indices = @transform_2, window_bounds = array<i64: 1, 64>}, {pipeline_mode = #tpu.pipeline_mode<synchronous>, transform_indices = @transform_3, window_bounds = array<i64: 4, 8, 128>}, {pipeline_mode = #tpu.pipeline_mode<synchronous>, transform_indices = @transform_4, window_bounds = array<i64: 4, 128, 8>}, {pipeline_mode = #tpu.pipeline_mode<synchronous>, transform_indices = @transform_5, window_bounds = array<i64: 32, 128>}, {pipeline_mode = #tpu.pipeline_mode<synchronous>, transform_indices = @transform_6, window_bounds = array<i64: 1, 128>}, {pipeline_mode = #tpu.pipeline_mode<synchronous>, transform_indices = @transform_7, window_bounds = array<i64: 16, 128>}]} {
    %c0 = arith.constant 0 : index
    %c0_0 = arith.constant 0 : index
    %0 = vector.load %arg1[%c0, %c0_0] : memref<16x256xf32, #tpu.memory_space<vmem>>, vector<16x256xf32>
    %c0_1 = arith.constant 0 : index
    %c0_2 = arith.constant 0 : index
    %1 = vector.load %arg2[%c0_1, %c0_2] : memref<256x64xf32, #tpu.memory_space<vmem>>, vector<256x64xf32>
    %cst = arith.constant dense<0.000000e+00> : vector<16x64xf32>
    %2 = tpu.matmul %0, %1, %cst {dimension_numbers = #tpu.dot_dimension_numbers<[1], [0], [0], [1], [0, 0, 1, 1], [], []>} : vector<16x256xf32>, vector<256x64xf32>, vector<16x64xf32> -> vector<16x64xf32>
    %c0_3 = arith.constant 0 : index
    %c0_4 = arith.constant 0 : index
    %3 = vector.load %arg3[%c0_3, %c0_4] : memref<1x64xf32, #tpu.memory_space<vmem>>, vector<1x64xf32>
    %4 = vector.broadcast %3 : vector<1x64xf32> to vector<16x64xf32>
    %5 = arith.addf %2, %4 : vector<16x64xf32>
    %c0_5 = arith.constant 0 : index
    %c0_6 = arith.constant 0 : index
    %6 = vector.load %arg6[%c0_5, %c0_6] : memref<32x128xf32, #tpu.memory_space<vmem>>, vector<32x128xf32>
    %cst_7 = arith.constant 0.000000e+00 : f32
    %7 = vector.broadcast %cst_7 : f32 to vector<16x128xf32>
    %8 = vector.extract_strided_slice %5 {offsets = [0, 0], sizes = [16, 8], strides = [1, 1]} : vector<16x64xf32> to vector<16x8xf32>
    %c0_8 = arith.constant 0 : index
    %c0_9 = arith.constant 0 : index
    %c0_10 = arith.constant 0 : index
    %9 = vector.load %arg4[%c0_8, %c0_9, %c0_10] : memref<4x8x128xf32, #tpu.memory_space<vmem>>, vector<1x8x128xf32>
    %10 = vector.shape_cast %9 : vector<1x8x128xf32> to vector<8x128xf32>
    %c0_11 = arith.constant 0 : index
    %c0_12 = arith.constant 0 : index
    %c0_13 = arith.constant 0 : index
    %11 = vector.load %arg5[%c0_11, %c0_12, %c0_13] : memref<4x128x8xf32, #tpu.memory_space<vmem>>, vector<1x128x8xf32>
    %12 = vector.shape_cast %11 : vector<1x128x8xf32> to vector<128x8xf32>
    %13 = arith.mulf %10, %10 : vector<8x128xf32>
    %cst_14 = arith.constant dense<0.000000e+00> : vector<128xf32>
    %14 = vector.multi_reduction <add>, %13, %cst_14 [0] : vector<8x128xf32> to vector<128xf32>
    %15 = vector.shape_cast %14 : vector<128xf32> to vector<1x128xf32>
    %cst_15 = arith.constant dense<0.000000e+00> : vector<16x128xf32>
    %16 = tpu.matmul %8, %10, %cst_15 {dimension_numbers = #tpu.dot_dimension_numbers<[1], [0], [0], [1], [0, 0, 1, 1], [], []>} : vector<16x8xf32>, vector<8x128xf32>, vector<16x128xf32> -> vector<16x128xf32>
    %cst_16 = arith.constant -2.000000e+00 : f32
    %17 = vector.broadcast %cst_16 : f32 to vector<16x128xf32>
    %18 = arith.mulf %17, %16 : vector<16x128xf32>
    %19 = vector.broadcast %15 : vector<1x128xf32> to vector<16x128xf32>
    %20 = arith.addf %18, %19 : vector<16x128xf32>
    %cst_17 = arith.constant dense<0x7F800000> : vector<16xf32>
    %21 = vector.multi_reduction <minimumf>, %20, %cst_17 [1] : vector<16x128xf32> to vector<16xf32>
    %22 = vector.shape_cast %21 : vector<16xf32> to vector<16x1xf32>
    %23 = tpu.iota {dimensions = array<i32: 1>} : vector<16x128xi32>
    %24 = vector.broadcast %22 : vector<16x1xf32> to vector<16x128xf32>
    %25 = arith.cmpf ole, %20, %24 : vector<16x128xf32>
    %c128_i32 = arith.constant 128 : i32
    %26 = vector.broadcast %c128_i32 : i32 to vector<16x128xi32>
    %27 = arith.select %25, %23, %26 : vector<16x128xi1>, vector<16x128xi32>
    %cst_18 = arith.constant dense<2147483647> : vector<16xi32>
    %28 = vector.multi_reduction <minsi>, %27, %cst_18 [1] : vector<16x128xi32> to vector<16xi32>
    %29 = vector.shape_cast %28 : vector<16xi32> to vector<16x1xi32>
    %30 = vector.broadcast %29 : vector<16x1xi32> to vector<16x128xi32>
    %31 = arith.cmpi eq, %23, %30 : vector<16x128xi32>
    %32 = arith.extui %31 : vector<16x128xi1> to vector<16x128xi32>
    %33 = arith.sitofp %32 : vector<16x128xi32> to vector<16x128xf32>
    %cst_19 = arith.constant dense<0.000000e+00> : vector<16x8xf32>
    %34 = tpu.matmul %33, %12, %cst_19 {dimension_numbers = #tpu.dot_dimension_numbers<[1], [0], [0], [1], [0, 0, 1, 1], [], []>} : vector<16x128xf32>, vector<128x8xf32>, vector<16x8xf32> -> vector<16x8xf32>
    %35 = vector.extract_strided_slice %6 {offsets = [0, 0], sizes = [8, 128], strides = [1, 1]} : vector<32x128xf32> to vector<8x128xf32>
    %cst_20 = arith.constant dense<0.000000e+00> : vector<16x128xf32>
    %36 = tpu.matmul %34, %35, %cst_20 {dimension_numbers = #tpu.dot_dimension_numbers<[1], [0], [0], [1], [0, 0, 1, 1], [], []>} : vector<16x8xf32>, vector<8x128xf32>, vector<16x128xf32> -> vector<16x128xf32>
    %37 = arith.addf %7, %36 : vector<16x128xf32>
    %38 = vector.extract_strided_slice %5 {offsets = [0, 8], sizes = [16, 8], strides = [1, 1]} : vector<16x64xf32> to vector<16x8xf32>
    %c1 = arith.constant 1 : index
    %c0_21 = arith.constant 0 : index
    %c0_22 = arith.constant 0 : index
    %39 = vector.load %arg4[%c1, %c0_21, %c0_22] : memref<4x8x128xf32, #tpu.memory_space<vmem>>, vector<1x8x128xf32>
    %40 = vector.shape_cast %39 : vector<1x8x128xf32> to vector<8x128xf32>
    %c1_23 = arith.constant 1 : index
    %c0_24 = arith.constant 0 : index
    %c0_25 = arith.constant 0 : index
    %41 = vector.load %arg5[%c1_23, %c0_24, %c0_25] : memref<4x128x8xf32, #tpu.memory_space<vmem>>, vector<1x128x8xf32>
    %42 = vector.shape_cast %41 : vector<1x128x8xf32> to vector<128x8xf32>
    %43 = arith.mulf %40, %40 : vector<8x128xf32>
    %cst_26 = arith.constant dense<0.000000e+00> : vector<128xf32>
    %44 = vector.multi_reduction <add>, %43, %cst_26 [0] : vector<8x128xf32> to vector<128xf32>
    %45 = vector.shape_cast %44 : vector<128xf32> to vector<1x128xf32>
    %cst_27 = arith.constant dense<0.000000e+00> : vector<16x128xf32>
    %46 = tpu.matmul %38, %40, %cst_27 {dimension_numbers = #tpu.dot_dimension_numbers<[1], [0], [0], [1], [0, 0, 1, 1], [], []>} : vector<16x8xf32>, vector<8x128xf32>, vector<16x128xf32> -> vector<16x128xf32>
    %cst_28 = arith.constant -2.000000e+00 : f32
    %47 = vector.broadcast %cst_28 : f32 to vector<16x128xf32>
    %48 = arith.mulf %47, %46 : vector<16x128xf32>
    %49 = vector.broadcast %45 : vector<1x128xf32> to vector<16x128xf32>
    %50 = arith.addf %48, %49 : vector<16x128xf32>
    %cst_29 = arith.constant dense<0x7F800000> : vector<16xf32>
    %51 = vector.multi_reduction <minimumf>, %50, %cst_29 [1] : vector<16x128xf32> to vector<16xf32>
    %52 = vector.shape_cast %51 : vector<16xf32> to vector<16x1xf32>
    %53 = tpu.iota {dimensions = array<i32: 1>} : vector<16x128xi32>
    %54 = vector.broadcast %52 : vector<16x1xf32> to vector<16x128xf32>
    %55 = arith.cmpf ole, %50, %54 : vector<16x128xf32>
    %c128_i32_30 = arith.constant 128 : i32
    %56 = vector.broadcast %c128_i32_30 : i32 to vector<16x128xi32>
    %57 = arith.select %55, %53, %56 : vector<16x128xi1>, vector<16x128xi32>
    %cst_31 = arith.constant dense<2147483647> : vector<16xi32>
    %58 = vector.multi_reduction <minsi>, %57, %cst_31 [1] : vector<16x128xi32> to vector<16xi32>
    %59 = vector.shape_cast %58 : vector<16xi32> to vector<16x1xi32>
    %60 = vector.broadcast %59 : vector<16x1xi32> to vector<16x128xi32>
    %61 = arith.cmpi eq, %53, %60 : vector<16x128xi32>
    %62 = arith.extui %61 : vector<16x128xi1> to vector<16x128xi32>
    %63 = arith.sitofp %62 : vector<16x128xi32> to vector<16x128xf32>
    %cst_32 = arith.constant dense<0.000000e+00> : vector<16x8xf32>
    %64 = tpu.matmul %63, %42, %cst_32 {dimension_numbers = #tpu.dot_dimension_numbers<[1], [0], [0], [1], [0, 0, 1, 1], [], []>} : vector<16x128xf32>, vector<128x8xf32>, vector<16x8xf32> -> vector<16x8xf32>
    %65 = vector.extract_strided_slice %6 {offsets = [8, 0], sizes = [8, 128], strides = [1, 1]} : vector<32x128xf32> to vector<8x128xf32>
    %cst_33 = arith.constant dense<0.000000e+00> : vector<16x128xf32>
    %66 = tpu.matmul %64, %65, %cst_33 {dimension_numbers = #tpu.dot_dimension_numbers<[1], [0], [0], [1], [0, 0, 1, 1], [], []>} : vector<16x8xf32>, vector<8x128xf32>, vector<16x128xf32> -> vector<16x128xf32>
    %67 = arith.addf %37, %66 : vector<16x128xf32>
    %68 = vector.extract_strided_slice %5 {offsets = [0, 16], sizes = [16, 8], strides = [1, 1]} : vector<16x64xf32> to vector<16x8xf32>
    %c2 = arith.constant 2 : index
    %c0_34 = arith.constant 0 : index
    %c0_35 = arith.constant 0 : index
    %69 = vector.load %arg4[%c2, %c0_34, %c0_35] : memref<4x8x128xf32, #tpu.memory_space<vmem>>, vector<1x8x128xf32>
    %70 = vector.shape_cast %69 : vector<1x8x128xf32> to vector<8x128xf32>
    %c2_36 = arith.constant 2 : index
    %c0_37 = arith.constant 0 : index
    %c0_38 = arith.constant 0 : index
    %71 = vector.load %arg5[%c2_36, %c0_37, %c0_38] : memref<4x128x8xf32, #tpu.memory_space<vmem>>, vector<1x128x8xf32>
    %72 = vector.shape_cast %71 : vector<1x128x8xf32> to vector<128x8xf32>
    %73 = arith.mulf %70, %70 : vector<8x128xf32>
    %cst_39 = arith.constant dense<0.000000e+00> : vector<128xf32>
    %74 = vector.multi_reduction <add>, %73, %cst_39 [0] : vector<8x128xf32> to vector<128xf32>
    %75 = vector.shape_cast %74 : vector<128xf32> to vector<1x128xf32>
    %cst_40 = arith.constant dense<0.000000e+00> : vector<16x128xf32>
    %76 = tpu.matmul %68, %70, %cst_40 {dimension_numbers = #tpu.dot_dimension_numbers<[1], [0], [0], [1], [0, 0, 1, 1], [], []>} : vector<16x8xf32>, vector<8x128xf32>, vector<16x128xf32> -> vector<16x128xf32>
    %cst_41 = arith.constant -2.000000e+00 : f32
    %77 = vector.broadcast %cst_41 : f32 to vector<16x128xf32>
    %78 = arith.mulf %77, %76 : vector<16x128xf32>
    %79 = vector.broadcast %75 : vector<1x128xf32> to vector<16x128xf32>
    %80 = arith.addf %78, %79 : vector<16x128xf32>
    %cst_42 = arith.constant dense<0x7F800000> : vector<16xf32>
    %81 = vector.multi_reduction <minimumf>, %80, %cst_42 [1] : vector<16x128xf32> to vector<16xf32>
    %82 = vector.shape_cast %81 : vector<16xf32> to vector<16x1xf32>
    %83 = tpu.iota {dimensions = array<i32: 1>} : vector<16x128xi32>
    %84 = vector.broadcast %82 : vector<16x1xf32> to vector<16x128xf32>
    %85 = arith.cmpf ole, %80, %84 : vector<16x128xf32>
    %c128_i32_43 = arith.constant 128 : i32
    %86 = vector.broadcast %c128_i32_43 : i32 to vector<16x128xi32>
    %87 = arith.select %85, %83, %86 : vector<16x128xi1>, vector<16x128xi32>
    %cst_44 = arith.constant dense<2147483647> : vector<16xi32>
    %88 = vector.multi_reduction <minsi>, %87, %cst_44 [1] : vector<16x128xi32> to vector<16xi32>
    %89 = vector.shape_cast %88 : vector<16xi32> to vector<16x1xi32>
    %90 = vector.broadcast %89 : vector<16x1xi32> to vector<16x128xi32>
    %91 = arith.cmpi eq, %83, %90 : vector<16x128xi32>
    %92 = arith.extui %91 : vector<16x128xi1> to vector<16x128xi32>
    %93 = arith.sitofp %92 : vector<16x128xi32> to vector<16x128xf32>
    %cst_45 = arith.constant dense<0.000000e+00> : vector<16x8xf32>
    %94 = tpu.matmul %93, %72, %cst_45 {dimension_numbers = #tpu.dot_dimension_numbers<[1], [0], [0], [1], [0, 0, 1, 1], [], []>} : vector<16x128xf32>, vector<128x8xf32>, vector<16x8xf32> -> vector<16x8xf32>
    %95 = vector.extract_strided_slice %6 {offsets = [16, 0], sizes = [8, 128], strides = [1, 1]} : vector<32x128xf32> to vector<8x128xf32>
    %cst_46 = arith.constant dense<0.000000e+00> : vector<16x128xf32>
    %96 = tpu.matmul %94, %95, %cst_46 {dimension_numbers = #tpu.dot_dimension_numbers<[1], [0], [0], [1], [0, 0, 1, 1], [], []>} : vector<16x8xf32>, vector<8x128xf32>, vector<16x128xf32> -> vector<16x128xf32>
    %97 = arith.addf %67, %96 : vector<16x128xf32>
    %98 = vector.extract_strided_slice %5 {offsets = [0, 24], sizes = [16, 8], strides = [1, 1]} : vector<16x64xf32> to vector<16x8xf32>
    %c3 = arith.constant 3 : index
    %c0_47 = arith.constant 0 : index
    %c0_48 = arith.constant 0 : index
    %99 = vector.load %arg4[%c3, %c0_47, %c0_48] : memref<4x8x128xf32, #tpu.memory_space<vmem>>, vector<1x8x128xf32>
    %100 = vector.shape_cast %99 : vector<1x8x128xf32> to vector<8x128xf32>
    %c3_49 = arith.constant 3 : index
    %c0_50 = arith.constant 0 : index
    %c0_51 = arith.constant 0 : index
    %101 = vector.load %arg5[%c3_49, %c0_50, %c0_51] : memref<4x128x8xf32, #tpu.memory_space<vmem>>, vector<1x128x8xf32>
    %102 = vector.shape_cast %101 : vector<1x128x8xf32> to vector<128x8xf32>
    %103 = arith.mulf %100, %100 : vector<8x128xf32>
    %cst_52 = arith.constant dense<0.000000e+00> : vector<128xf32>
    %104 = vector.multi_reduction <add>, %103, %cst_52 [0] : vector<8x128xf32> to vector<128xf32>
    %105 = vector.shape_cast %104 : vector<128xf32> to vector<1x128xf32>
    %cst_53 = arith.constant dense<0.000000e+00> : vector<16x128xf32>
    %106 = tpu.matmul %98, %100, %cst_53 {dimension_numbers = #tpu.dot_dimension_numbers<[1], [0], [0], [1], [0, 0, 1, 1], [], []>} : vector<16x8xf32>, vector<8x128xf32>, vector<16x128xf32> -> vector<16x128xf32>
    %cst_54 = arith.constant -2.000000e+00 : f32
    %107 = vector.broadcast %cst_54 : f32 to vector<16x128xf32>
    %108 = arith.mulf %107, %106 : vector<16x128xf32>
    %109 = vector.broadcast %105 : vector<1x128xf32> to vector<16x128xf32>
    %110 = arith.addf %108, %109 : vector<16x128xf32>
    %cst_55 = arith.constant dense<0x7F800000> : vector<16xf32>
    %111 = vector.multi_reduction <minimumf>, %110, %cst_55 [1] : vector<16x128xf32> to vector<16xf32>
    %112 = vector.shape_cast %111 : vector<16xf32> to vector<16x1xf32>
    %113 = tpu.iota {dimensions = array<i32: 1>} : vector<16x128xi32>
    %114 = vector.broadcast %112 : vector<16x1xf32> to vector<16x128xf32>
    %115 = arith.cmpf ole, %110, %114 : vector<16x128xf32>
    %c128_i32_56 = arith.constant 128 : i32
    %116 = vector.broadcast %c128_i32_56 : i32 to vector<16x128xi32>
    %117 = arith.select %115, %113, %116 : vector<16x128xi1>, vector<16x128xi32>
    %cst_57 = arith.constant dense<2147483647> : vector<16xi32>
    %118 = vector.multi_reduction <minsi>, %117, %cst_57 [1] : vector<16x128xi32> to vector<16xi32>
    %119 = vector.shape_cast %118 : vector<16xi32> to vector<16x1xi32>
    %120 = vector.broadcast %119 : vector<16x1xi32> to vector<16x128xi32>
    %121 = arith.cmpi eq, %113, %120 : vector<16x128xi32>
    %122 = arith.extui %121 : vector<16x128xi1> to vector<16x128xi32>
    %123 = arith.sitofp %122 : vector<16x128xi32> to vector<16x128xf32>
    %cst_58 = arith.constant dense<0.000000e+00> : vector<16x8xf32>
    %124 = tpu.matmul %123, %102, %cst_58 {dimension_numbers = #tpu.dot_dimension_numbers<[1], [0], [0], [1], [0, 0, 1, 1], [], []>} : vector<16x128xf32>, vector<128x8xf32>, vector<16x8xf32> -> vector<16x8xf32>
    %125 = vector.extract_strided_slice %6 {offsets = [24, 0], sizes = [8, 128], strides = [1, 1]} : vector<32x128xf32> to vector<8x128xf32>
    %cst_59 = arith.constant dense<0.000000e+00> : vector<16x128xf32>
    %126 = tpu.matmul %124, %125, %cst_59 {dimension_numbers = #tpu.dot_dimension_numbers<[1], [0], [0], [1], [0, 0, 1, 1], [], []>} : vector<16x8xf32>, vector<8x128xf32>, vector<16x128xf32> -> vector<16x128xf32>
    %127 = arith.addf %97, %126 : vector<16x128xf32>
    %c0_60 = arith.constant 0 : index
    %c0_61 = arith.constant 0 : index
    %128 = vector.load %arg7[%c0_60, %c0_61] : memref<1x128xf32, #tpu.memory_space<vmem>>, vector<1x128xf32>
    %129 = vector.broadcast %128 : vector<1x128xf32> to vector<16x128xf32>
    %130 = arith.addf %127, %129 : vector<16x128xf32>
    %c0_62 = arith.constant 0 : index
    %c0_63 = arith.constant 0 : index
    %131 = vector.load %arg8[%c0_62, %c0_63] : memref<16x128xf32, #tpu.memory_space<vmem>>, vector<16x128xf32>
    tpu.vector_store %arg8[%c0_62, %c0_63], %130 {strides = array<i32>} : memref<16x128xf32, #tpu.memory_space<vmem>>, vector<16x128xf32>,
    return
  }
  func.func @transform_0(%arg0: i32) -> (i32, i32) {
    %c0_i32 = arith.constant 0 : i32
    %c0_i32_0 = arith.constant 0 : i32
    %c0_i32_1 = arith.constant 0 : i32
    return %c0_i32, %c0_i32_0 : i32, i32
  }
  func.func @transform_1(%arg0: i32) -> (i32, i32) {
    %c0_i32 = arith.constant 0 : i32
    %c0_i32_0 = arith.constant 0 : i32
    %c0_i32_1 = arith.constant 0 : i32
    return %c0_i32, %c0_i32_0 : i32, i32
  }
  func.func @transform_2(%arg0: i32) -> (i32, i32) {
    %c0_i32 = arith.constant 0 : i32
    %c0_i32_0 = arith.constant 0 : i32
    %c0_i32_1 = arith.constant 0 : i32
    return %c0_i32, %c0_i32_0 : i32, i32
  }
  func.func @transform_3(%arg0: i32) -> (i32, i32, i32) {
    %c0_i32 = arith.constant 0 : i32
    %c0_i32_0 = arith.constant 0 : i32
    %c0_i32_1 = arith.constant 0 : i32
    %c0_i32_2 = arith.constant 0 : i32
    return %c0_i32, %c0_i32_0, %c0_i32_1 : i32, i32, i32
  }
  func.func @transform_4(%arg0: i32) -> (i32, i32, i32) {
    %c0_i32 = arith.constant 0 : i32
    %c0_i32_0 = arith.constant 0 : i32
    %c0_i32_1 = arith.constant 0 : i32
    %c0_i32_2 = arith.constant 0 : i32
    return %c0_i32, %c0_i32_0, %c0_i32_1 : i32, i32, i32
  }
  func.func @transform_5(%arg0: i32) -> (i32, i32) {
    %c0_i32 = arith.constant 0 : i32
    %c0_i32_0 = arith.constant 0 : i32
    %c0_i32_1 = arith.constant 0 : i32
    return %c0_i32, %c0_i32_0 : i32, i32
  }
  func.func @transform_6(%arg0: i32) -> (i32, i32) {
    %c0_i32 = arith.constant 0 : i32
    %c0_i32_0 = arith.constant 0 : i32
    %c0_i32_1 = arith.constant 0 : i32
    return %c0_i32, %c0_i32_0 : i32, i32
  }
  func.func @transform_7(%arg0: i32) -> (i32, i32) {
    %c0_i32 = arith.constant 0 : i32
    %c0_i32_0 = arith.constant 0 : i32
    %c0_i32_1 = arith.constant 0 : i32
    return %c0_i32, %c0_i32_0 : i32, i32
  }
}

module attributes {stable_mosaic.version = 11 : i64} {
  func.func @_stack_kernel(%arg0: i32, %arg1: i32, %arg2: memref<1x8x128xf32, #tpu.memory_space<vmem>>, %arg3: memref<1x1x128xf32, #tpu.memory_space<vmem>>, %arg4: memref<1x128x384xf32, #tpu.memory_space<vmem>>, %arg5: memref<1x128x128xf32, #tpu.memory_space<vmem>>, %arg6: memref<2x8x8xf32, #tpu.memory_space<vmem>>, %arg7: memref<1x1x128xf32, #tpu.memory_space<vmem>>, %arg8: memref<1x128x512xf32, #tpu.memory_space<vmem>>, %arg9: memref<1x256x128xf32, #tpu.memory_space<vmem>>, %arg10: memref<1x8x128xf32, #tpu.memory_space<vmem>>) attributes {dimension_semantics = [#tpu.dimension_semantics<parallel>, #tpu.dimension_semantics<arbitrary>], iteration_bounds = array<i64: 2, 2>, scalar_prefetch = 0 : i64, scratch_operands = 0 : i64, tpu.core_type = #tpu.core_type<tc>, window_params = [{transform_indices = @transform_0, window_bounds = array<i64: 1, 8, 128>}, {transform_indices = @transform_1, window_bounds = array<i64: 1, 1, 128>}, {transform_indices = @transform_2, window_bounds = array<i64: 1, 128, 384>}, {transform_indices = @transform_3, window_bounds = array<i64: 1, 128, 128>}, {pipeline_mode = #tpu.pipeline_mode<synchronous>, transform_indices = @transform_4, window_bounds = array<i64: 2, 8, 8>}, {transform_indices = @transform_5, window_bounds = array<i64: 1, 1, 128>}, {transform_indices = @transform_6, window_bounds = array<i64: 1, 128, 512>}, {transform_indices = @transform_7, window_bounds = array<i64: 1, 256, 128>}, {transform_indices = @transform_8, window_bounds = array<i64: 1, 8, 128>}]} {
    %c0_i32 = arith.constant 0 : i32
    %0 = arith.cmpi eq, %arg1, %c0_i32 : i32
    %1 = arith.extui %0 : i1 to i32
    %c0_i32_0 = arith.constant 0 : i32
    %2 = arith.cmpi ne, %1, %c0_i32_0 : i32
    scf.if %2 {
      %c0_52 = arith.constant 0 : index
      %c0_53 = arith.constant 0 : index
      %c0_54 = arith.constant 0 : index
      %111 = vector.load %arg2[%c0_52, %c0_53, %c0_54] : memref<1x8x128xf32, #tpu.memory_space<vmem>>, vector<1x8x128xf32>
      %c0_55 = arith.constant 0 : index
      %c0_56 = arith.constant 0 : index
      %c0_57 = arith.constant 0 : index
      %112 = vector.load %arg10[%c0_55, %c0_56, %c0_57] : memref<1x8x128xf32, #tpu.memory_space<vmem>>, vector<1x8x128xf32>
      tpu.vector_store %arg10[%c0_55, %c0_56, %c0_57], %111 {strides = array<i32>} : memref<1x8x128xf32, #tpu.memory_space<vmem>>, vector<1x8x128xf32>,
    } else {
    }
    %c0 = arith.constant 0 : index
    %c0_1 = arith.constant 0 : index
    %c0_2 = arith.constant 0 : index
    %3 = vector.load %arg10[%c0, %c0_1, %c0_2] : memref<1x8x128xf32, #tpu.memory_space<vmem>>, vector<1x8x128xf32>
    %4 = vector.shape_cast %3 : vector<1x8x128xf32> to vector<8x128xf32>
    %5 = arith.mulf %4, %4 : vector<8x128xf32>
    %cst = arith.constant dense<0.000000e+00> : vector<8xf32>
    %6 = vector.multi_reduction <add>, %5, %cst [1] : vector<8x128xf32> to vector<8xf32>
    %7 = vector.shape_cast %6 : vector<8xf32> to vector<8x1xf32>
    %cst_3 = arith.constant 1.280000e+02 : f32
    %8 = vector.broadcast %cst_3 : f32 to vector<8x1xf32>
    %9 = arith.divf %7, %8 : vector<8x1xf32>
    %cst_4 = arith.constant 9.99999997E-7 : f32
    %10 = vector.broadcast %cst_4 : f32 to vector<8x1xf32>
    %11 = arith.addf %9, %10 : vector<8x1xf32>
    %12 = math.rsqrt %11 : vector<8x1xf32>
    %13 = vector.broadcast %12 : vector<8x1xf32> to vector<8x128xf32>
    %14 = arith.mulf %4, %13 : vector<8x128xf32>
    %c0_5 = arith.constant 0 : index
    %c0_6 = arith.constant 0 : index
    %c0_7 = arith.constant 0 : index
    %15 = vector.load %arg3[%c0_5, %c0_6, %c0_7] : memref<1x1x128xf32, #tpu.memory_space<vmem>>, vector<1x1x128xf32>
    %16 = vector.shape_cast %15 : vector<1x1x128xf32> to vector<1x128xf32>
    %17 = vector.broadcast %16 : vector<1x128xf32> to vector<8x128xf32>
    %18 = arith.mulf %14, %17 : vector<8x128xf32>
    %c0_8 = arith.constant 0 : index
    %c0_9 = arith.constant 0 : index
    %c0_10 = arith.constant 0 : index
    %19 = vector.load %arg4[%c0_8, %c0_9, %c0_10] : memref<1x128x384xf32, #tpu.memory_space<vmem>>, vector<1x128x384xf32>
    %20 = vector.shape_cast %19 : vector<1x128x384xf32> to vector<128x384xf32>
    %cst_11 = arith.constant dense<0.000000e+00> : vector<8x384xf32>
    %21 = tpu.matmul %18, %20, %cst_11 {dimension_numbers = #tpu.dot_dimension_numbers<[1], [0], [0], [1], [0, 0, 1, 1], [], []>} : vector<8x128xf32>, vector<128x384xf32>, vector<8x384xf32> -> vector<8x384xf32>
    %22 = vector.extract_strided_slice %21 {offsets = [0, 0], sizes = [8, 128], strides = [1, 1]} : vector<8x384xf32> to vector<8x128xf32>
    %23 = vector.extract_strided_slice %21 {offsets = [0, 128], sizes = [8, 128], strides = [1, 1]} : vector<8x384xf32> to vector<8x128xf32>
    %24 = vector.extract_strided_slice %21 {offsets = [0, 256], sizes = [8, 128], strides = [1, 1]} : vector<8x384xf32> to vector<8x128xf32>
    %c0_12 = arith.constant 0 : index
    %c0_13 = arith.constant 0 : index
    %c0_14 = arith.constant 0 : index
    %25 = vector.load %arg5[%c0_12, %c0_13, %c0_14] : memref<1x128x128xf32, #tpu.memory_space<vmem>>, vector<1x128x128xf32>
    %26 = vector.shape_cast %25 : vector<1x128x128xf32> to vector<128x128xf32>
    %cst_15 = arith.constant 0.000000e+00 : f32
    %27 = vector.broadcast %cst_15 : f32 to vector<8x128xf32>
    %28 = vector.extract_strided_slice %22 {offsets = [0, 0], sizes = [8, 64], strides = [1, 1]} : vector<8x128xf32> to vector<8x64xf32>
    %29 = vector.extract_strided_slice %23 {offsets = [0, 0], sizes = [8, 64], strides = [1, 1]} : vector<8x128xf32> to vector<8x64xf32>
    %cst_16 = arith.constant dense<0.000000e+00> : vector<8x8xf32>
    %30 = tpu.matmul %28, %29, %cst_16 {dimension_numbers = #tpu.dot_dimension_numbers<[1], [1], [0], [0], [0, 0, 1, 0], [], []>} : vector<8x64xf32>, vector<8x64xf32>, vector<8x8xf32> -> vector<8x8xf32>
    %c0_17 = arith.constant 0 : index
    %c0_18 = arith.constant 0 : index
    %c0_19 = arith.constant 0 : index
    %31 = vector.load %arg6[%c0_17, %c0_18, %c0_19] : memref<2x8x8xf32, #tpu.memory_space<vmem>>, vector<1x8x8xf32>
    %32 = vector.shape_cast %31 : vector<1x8x8xf32> to vector<8x8xf32>
    %33 = arith.addf %30, %32 : vector<8x8xf32>
    %cst_20 = arith.constant dense<0xFF800000> : vector<8xf32>
    %34 = vector.multi_reduction <maximumf>, %33, %cst_20 [1] : vector<8x8xf32> to vector<8xf32>
    %35 = vector.shape_cast %34 : vector<8xf32> to vector<8x1xf32>
    %36 = vector.broadcast %35 : vector<8x1xf32> to vector<8x8xf32>
    %37 = arith.subf %33, %36 : vector<8x8xf32>
    %38 = math.exp %37 : vector<8x8xf32>
    %cst_21 = arith.constant dense<0.000000e+00> : vector<8xf32>
    %39 = vector.multi_reduction <add>, %38, %cst_21 [1] : vector<8x8xf32> to vector<8xf32>
    %40 = vector.shape_cast %39 : vector<8xf32> to vector<8x1xf32>
    %41 = tpu.reciprocal %40 {approx = true} : vector<8x1xf32> -> vector<8x1xf32>
    %42 = vector.broadcast %41 : vector<8x1xf32> to vector<8x8xf32>
    %43 = arith.mulf %38, %42 : vector<8x8xf32>
    %44 = vector.extract_strided_slice %24 {offsets = [0, 0], sizes = [8, 64], strides = [1, 1]} : vector<8x128xf32> to vector<8x64xf32>
    %cst_22 = arith.constant dense<0.000000e+00> : vector<8x64xf32>
    %45 = tpu.matmul %43, %44, %cst_22 {dimension_numbers = #tpu.dot_dimension_numbers<[1], [0], [0], [1], [0, 0, 1, 1], [], []>} : vector<8x8xf32>, vector<8x64xf32>, vector<8x64xf32> -> vector<8x64xf32>
    %46 = vector.extract_strided_slice %26 {offsets = [0, 0], sizes = [64, 128], strides = [1, 1]} : vector<128x128xf32> to vector<64x128xf32>
    %cst_23 = arith.constant dense<0.000000e+00> : vector<8x128xf32>
    %47 = tpu.matmul %45, %46, %cst_23 {dimension_numbers = #tpu.dot_dimension_numbers<[1], [0], [0], [1], [0, 0, 1, 1], [], []>} : vector<8x64xf32>, vector<64x128xf32>, vector<8x128xf32> -> vector<8x128xf32>
    %48 = arith.addf %27, %47 : vector<8x128xf32>
    %49 = vector.extract_strided_slice %22 {offsets = [0, 64], sizes = [8, 64], strides = [1, 1]} : vector<8x128xf32> to vector<8x64xf32>
    %50 = vector.extract_strided_slice %23 {offsets = [0, 64], sizes = [8, 64], strides = [1, 1]} : vector<8x128xf32> to vector<8x64xf32>
    %cst_24 = arith.constant dense<0.000000e+00> : vector<8x8xf32>
    %51 = tpu.matmul %49, %50, %cst_24 {dimension_numbers = #tpu.dot_dimension_numbers<[1], [1], [0], [0], [0, 0, 1, 0], [], []>} : vector<8x64xf32>, vector<8x64xf32>, vector<8x8xf32> -> vector<8x8xf32>
    %c1 = arith.constant 1 : index
    %c0_25 = arith.constant 0 : index
    %c0_26 = arith.constant 0 : index
    %52 = vector.load %arg6[%c1, %c0_25, %c0_26] : memref<2x8x8xf32, #tpu.memory_space<vmem>>, vector<1x8x8xf32>
    %53 = vector.shape_cast %52 : vector<1x8x8xf32> to vector<8x8xf32>
    %54 = arith.addf %51, %53 : vector<8x8xf32>
    %cst_27 = arith.constant dense<0xFF800000> : vector<8xf32>
    %55 = vector.multi_reduction <maximumf>, %54, %cst_27 [1] : vector<8x8xf32> to vector<8xf32>
    %56 = vector.shape_cast %55 : vector<8xf32> to vector<8x1xf32>
    %57 = vector.broadcast %56 : vector<8x1xf32> to vector<8x8xf32>
    %58 = arith.subf %54, %57 : vector<8x8xf32>
    %59 = math.exp %58 : vector<8x8xf32>
    %cst_28 = arith.constant dense<0.000000e+00> : vector<8xf32>
    %60 = vector.multi_reduction <add>, %59, %cst_28 [1] : vector<8x8xf32> to vector<8xf32>
    %61 = vector.shape_cast %60 : vector<8xf32> to vector<8x1xf32>
    %62 = tpu.reciprocal %61 {approx = true} : vector<8x1xf32> -> vector<8x1xf32>
    %63 = vector.broadcast %62 : vector<8x1xf32> to vector<8x8xf32>
    %64 = arith.mulf %59, %63 : vector<8x8xf32>
    %65 = vector.extract_strided_slice %24 {offsets = [0, 64], sizes = [8, 64], strides = [1, 1]} : vector<8x128xf32> to vector<8x64xf32>
    %cst_29 = arith.constant dense<0.000000e+00> : vector<8x64xf32>
    %66 = tpu.matmul %64, %65, %cst_29 {dimension_numbers = #tpu.dot_dimension_numbers<[1], [0], [0], [1], [0, 0, 1, 1], [], []>} : vector<8x8xf32>, vector<8x64xf32>, vector<8x64xf32> -> vector<8x64xf32>
    %67 = vector.extract_strided_slice %26 {offsets = [64, 0], sizes = [64, 128], strides = [1, 1]} : vector<128x128xf32> to vector<64x128xf32>
    %cst_30 = arith.constant dense<0.000000e+00> : vector<8x128xf32>
    %68 = tpu.matmul %66, %67, %cst_30 {dimension_numbers = #tpu.dot_dimension_numbers<[1], [0], [0], [1], [0, 0, 1, 1], [], []>} : vector<8x64xf32>, vector<64x128xf32>, vector<8x128xf32> -> vector<8x128xf32>
    %69 = arith.addf %48, %68 : vector<8x128xf32>
    %70 = arith.addf %4, %69 : vector<8x128xf32>
    %71 = arith.mulf %70, %70 : vector<8x128xf32>
    %cst_31 = arith.constant dense<0.000000e+00> : vector<8xf32>
    %72 = vector.multi_reduction <add>, %71, %cst_31 [1] : vector<8x128xf32> to vector<8xf32>
    %73 = vector.shape_cast %72 : vector<8xf32> to vector<8x1xf32>
    %cst_32 = arith.constant 1.280000e+02 : f32
    %74 = vector.broadcast %cst_32 : f32 to vector<8x1xf32>
    %75 = arith.divf %73, %74 : vector<8x1xf32>
    %cst_33 = arith.constant 9.99999997E-7 : f32
    %76 = vector.broadcast %cst_33 : f32 to vector<8x1xf32>
    %77 = arith.addf %75, %76 : vector<8x1xf32>
    %78 = math.rsqrt %77 : vector<8x1xf32>
    %79 = vector.broadcast %78 : vector<8x1xf32> to vector<8x128xf32>
    %80 = arith.mulf %70, %79 : vector<8x128xf32>
    %c0_34 = arith.constant 0 : index
    %c0_35 = arith.constant 0 : index
    %c0_36 = arith.constant 0 : index
    %81 = vector.load %arg7[%c0_34, %c0_35, %c0_36] : memref<1x1x128xf32, #tpu.memory_space<vmem>>, vector<1x1x128xf32>
    %82 = vector.shape_cast %81 : vector<1x1x128xf32> to vector<1x128xf32>
    %83 = vector.broadcast %82 : vector<1x128xf32> to vector<8x128xf32>
    %84 = arith.mulf %80, %83 : vector<8x128xf32>
    %c0_37 = arith.constant 0 : index
    %c0_38 = arith.constant 0 : index
    %c0_39 = arith.constant 0 : index
    %85 = vector.load %arg8[%c0_37, %c0_38, %c0_39] : memref<1x128x512xf32, #tpu.memory_space<vmem>>, vector<1x128x512xf32>
    %86 = vector.shape_cast %85 : vector<1x128x512xf32> to vector<128x512xf32>
    %cst_40 = arith.constant dense<0.000000e+00> : vector<8x512xf32>
    %87 = tpu.matmul %84, %86, %cst_40 {dimension_numbers = #tpu.dot_dimension_numbers<[1], [0], [0], [1], [0, 0, 1, 1], [], []>} : vector<8x128xf32>, vector<128x512xf32>, vector<8x512xf32> -> vector<8x512xf32>
    %88 = vector.extract_strided_slice %87 {offsets = [0, 0], sizes = [8, 256], strides = [1, 1]} : vector<8x512xf32> to vector<8x256xf32>
    %89 = vector.extract_strided_slice %87 {offsets = [0, 256], sizes = [8, 256], strides = [1, 1]} : vector<8x512xf32> to vector<8x256xf32>
    %90 = arith.mulf %89, %89 : vector<8x256xf32>
    %91 = arith.mulf %89, %90 : vector<8x256xf32>
    %cst_41 = arith.constant 4.471500e-02 : f32
    %92 = vector.broadcast %cst_41 : f32 to vector<8x256xf32>
    %93 = arith.mulf %92, %91 : vector<8x256xf32>
    %94 = arith.addf %89, %93 : vector<8x256xf32>
    %cst_42 = arith.constant 0.797884583 : f32
    %95 = vector.broadcast %cst_42 : f32 to vector<8x256xf32>
    %96 = arith.mulf %95, %94 : vector<8x256xf32>
    %97 = math.tanh %96 : vector<8x256xf32>
    %cst_43 = arith.constant 1.000000e+00 : f32
    %98 = vector.broadcast %cst_43 : f32 to vector<8x256xf32>
    %99 = arith.addf %98, %97 : vector<8x256xf32>
    %cst_44 = arith.constant 5.000000e-01 : f32
    %100 = vector.broadcast %cst_44 : f32 to vector<8x256xf32>
    %101 = arith.mulf %100, %99 : vector<8x256xf32>
    %102 = arith.mulf %89, %101 : vector<8x256xf32>
    %103 = arith.mulf %88, %102 : vector<8x256xf32>
    %c0_45 = arith.constant 0 : index
    %c0_46 = arith.constant 0 : index
    %c0_47 = arith.constant 0 : index
    %104 = vector.load %arg9[%c0_45, %c0_46, %c0_47] : memref<1x256x128xf32, #tpu.memory_space<vmem>>, vector<1x256x128xf32>
    %105 = vector.shape_cast %104 : vector<1x256x128xf32> to vector<256x128xf32>
    %cst_48 = arith.constant dense<0.000000e+00> : vector<8x128xf32>
    %106 = tpu.matmul %103, %105, %cst_48 {dimension_numbers = #tpu.dot_dimension_numbers<[1], [0], [0], [1], [0, 0, 1, 1], [], []>} : vector<8x256xf32>, vector<256x128xf32>, vector<8x128xf32> -> vector<8x128xf32>
    %107 = arith.addf %70, %106 : vector<8x128xf32>
    %c0_49 = arith.constant 0 : index
    %c0_50 = arith.constant 0 : index
    %c0_51 = arith.constant 0 : index
    %108 = vector.load %arg10[%c0_49, %c0_50, %c0_51] : memref<1x8x128xf32, #tpu.memory_space<vmem>>, vector<1x8x128xf32>
    %109 = vector.shape_cast %108 : vector<1x8x128xf32> to vector<8x128xf32>
    %110 = vector.shape_cast %107 : vector<8x128xf32> to vector<1x8x128xf32>
    tpu.vector_store %arg10[%c0_49, %c0_50, %c0_51], %110 {strides = array<i32>} : memref<1x8x128xf32, #tpu.memory_space<vmem>>, vector<1x8x128xf32>,
    return
  }
  func.func @transform_0(%arg0: i32, %arg1: i32) -> (i32, i32, i32) {
    %c0_i32 = arith.constant 0 : i32
    %c0_i32_0 = arith.constant 0 : i32
    %c0_i32_1 = arith.constant 0 : i32
    return %arg0, %c0_i32, %c0_i32_0 : i32, i32, i32
  }
  func.func @transform_1(%arg0: i32, %arg1: i32) -> (i32, i32, i32) {
    %c0_i32 = arith.constant 0 : i32
    %c0_i32_0 = arith.constant 0 : i32
    %c0_i32_1 = arith.constant 0 : i32
    return %arg1, %c0_i32, %c0_i32_0 : i32, i32, i32
  }
  func.func @transform_2(%arg0: i32, %arg1: i32) -> (i32, i32, i32) {
    %c0_i32 = arith.constant 0 : i32
    %c0_i32_0 = arith.constant 0 : i32
    %c0_i32_1 = arith.constant 0 : i32
    return %arg1, %c0_i32, %c0_i32_0 : i32, i32, i32
  }
  func.func @transform_3(%arg0: i32, %arg1: i32) -> (i32, i32, i32) {
    %c0_i32 = arith.constant 0 : i32
    %c0_i32_0 = arith.constant 0 : i32
    %c0_i32_1 = arith.constant 0 : i32
    return %arg1, %c0_i32, %c0_i32_0 : i32, i32, i32
  }
  func.func @transform_4(%arg0: i32, %arg1: i32) -> (i32, i32, i32) {
    %c0_i32 = arith.constant 0 : i32
    %c0_i32_0 = arith.constant 0 : i32
    %c0_i32_1 = arith.constant 0 : i32
    %c0_i32_2 = arith.constant 0 : i32
    return %c0_i32, %c0_i32_0, %c0_i32_1 : i32, i32, i32
  }
  func.func @transform_5(%arg0: i32, %arg1: i32) -> (i32, i32, i32) {
    %c0_i32 = arith.constant 0 : i32
    %c0_i32_0 = arith.constant 0 : i32
    %c0_i32_1 = arith.constant 0 : i32
    return %arg1, %c0_i32, %c0_i32_0 : i32, i32, i32
  }
  func.func @transform_6(%arg0: i32, %arg1: i32) -> (i32, i32, i32) {
    %c0_i32 = arith.constant 0 : i32
    %c0_i32_0 = arith.constant 0 : i32
    %c0_i32_1 = arith.constant 0 : i32
    return %arg1, %c0_i32, %c0_i32_0 : i32, i32, i32
  }
  func.func @transform_7(%arg0: i32, %arg1: i32) -> (i32, i32, i32) {
    %c0_i32 = arith.constant 0 : i32
    %c0_i32_0 = arith.constant 0 : i32
    %c0_i32_1 = arith.constant 0 : i32
    return %arg1, %c0_i32, %c0_i32_0 : i32, i32, i32
  }
  func.func @transform_8(%arg0: i32, %arg1: i32) -> (i32, i32, i32) {
    %c0_i32 = arith.constant 0 : i32
    %c0_i32_0 = arith.constant 0 : i32
    %c0_i32_1 = arith.constant 0 : i32
    return %arg0, %c0_i32, %c0_i32_0 : i32, i32, i32
  }
}

</mosaic_0001>

<llo_original>
// kernel: squeeze.1
$region0: #{squeeze.1}
  %s0 = inlined_call_operand.vmem [shape: f32[2,2048], index: 0, kind: input, shape index: {}]
  %s1 = inlined_call_operand.vmem [shape: f32[16,256], index: 1, kind: output, shape index: {}]
  $region1: #{squeeze.1} parent=0
    #allocation0 [shape = 'u8[65536]{0}', space=vmem, size = 0x10000, scoped, tag = 'scoped mem for input reshape']
    %s3 = sshllo.u32 0, 2
    %s4 = smul.addr 2, 15
    %s5 = scalar_lea.vmem %s0, %s4
    %v6 = vld [vmem:[%s5] sm:%s3]
    %s7 = scalar_lea.vmem [#allocation0], 120
    %8 = vst [vmem:[%s7] sm:%s3] %v6
    %s9 = smul.addr 2, 14
    %s10 = scalar_lea.vmem %s0, %s9
    %v11 = vld [vmem:[%s10] sm:%s3]
    %s12 = scalar_lea.vmem [#allocation0], 112
    %13 = vst [vmem:[%s12] sm:%s3] %v11
    %s14 = smul.addr 2, 13
    %s15 = scalar_lea.vmem %s0, %s14
    %v16 = vld [vmem:[%s15] sm:%s3]
    %s17 = scalar_lea.vmem [#allocation0], 104
    %18 = vst [vmem:[%s17] sm:%s3] %v16
    %s19 = smul.addr 2, 12
    %s20 = scalar_lea.vmem %s0, %s19
    %v21 = vld [vmem:[%s20] sm:%s3]
    %s22 = scalar_lea.vmem [#allocation0], 96
    %23 = vst [vmem:[%s22] sm:%s3] %v21
    %s24 = smul.addr 2, 11
    %s25 = scalar_lea.vmem %s0, %s24
    %v26 = vld [vmem:[%s25] sm:%s3]
    %s27 = scalar_lea.vmem [#allocation0], 88
    %28 = vst [vmem:[%s27] sm:%s3] %v26
    %s29 = smul.addr 2, 10
    %s30 = scalar_lea.vmem %s0, %s29
    %v31 = vld [vmem:[%s30] sm:%s3]
    %s32 = scalar_lea.vmem [#allocation0], 80
    %33 = vst [vmem:[%s32] sm:%s3] %v31
    %s34 = smul.addr 2, 9
    %s35 = scalar_lea.vmem %s0, %s34
    %v36 = vld [vmem:[%s35] sm:%s3]
    %s37 = scalar_lea.vmem [#allocation0], 72
    %38 = vst [vmem:[%s37] sm:%s3] %v36
    %s39 = smul.addr 2, 8
    %s40 = scalar_lea.vmem %s0, %s39
    %v41 = vld [vmem:[%s40] sm:%s3]
    %s42 = scalar_lea.vmem [#allocation0], 64
    %43 = vst [vmem:[%s42] sm:%s3] %v41
    %s44 = smul.addr 2, 7
    %s45 = scalar_lea.vmem %s0, %s44
    %v46 = vld [vmem:[%s45] sm:%s3]
    %s47 = scalar_lea.vmem [#allocation0], 56
    %48 = vst [vmem:[%s47] sm:%s3] %v46
    %s49 = smul.addr 2, 6
    %s50 = scalar_lea.vmem %s0, %s49
    %v51 = vld [vmem:[%s50] sm:%s3]
    %s52 = scalar_lea.vmem [#allocation0], 48
    %53 = vst [vmem:[%s52] sm:%s3] %v51
    %s54 = smul.addr 2, 5
    %s55 = scalar_lea.vmem %s0, %s54
    %v56 = vld [vmem:[%s55] sm:%s3]
    %s57 = scalar_lea.vmem [#allocation0], 40
    %58 = vst [vmem:[%s57] sm:%s3] %v56
    %s59 = smul.addr 2, 4
    %s60 = scalar_lea.vmem %s0, %s59
    %v61 = vld [vmem:[%s60] sm:%s3]
    %s62 = scalar_lea.vmem [#allocation0], 32
    %63 = vst [vmem:[%s62] sm:%s3] %v61
    %s64 = smul.addr 2, 3
    %s65 = scalar_lea.vmem %s0, %s64
    %v66 = vld [vmem:[%s65] sm:%s3]
    %s67 = scalar_lea.vmem [#allocation0], 24
    %68 = vst [vmem:[%s67] sm:%s3] %v66
    %s69 = smul.addr 2, 2
    %s70 = scalar_lea.vmem %s0, %s69
    %v71 = vld [vmem:[%s70] sm:%s3]
    %s72 = scalar_lea.vmem [#allocation0], 16
    %73 = vst [vmem:[%s72] sm:%s3] %v71
    %s74 = scalar_lea.vmem %s0, 2
    %v75 = vld [vmem:[%s74] sm:%s3]
    %s76 = scalar_lea.vmem [#allocation0], 8
    %77 = vst [vmem:[%s76] sm:%s3] %v75
    %v78 = vld [vmem:[%s0] sm:%s3]
    %79 = vst [vmem:[#allocation0] sm:%s3] %v78
    %v80 = vld [vmem:[#allocation0] sm:$0x3]
    %81 = vst [vmem:[%s1] ss:$16 sm:$0x3] %v80
    %s82 = scalar_lea.vmem [#allocation0], 8
    %v83 = vld [vmem:[%s82] sm:$0x3]
    %s84 = scalar_lea.vmem %s1, 8
    %85 = vst [vmem:[%s84] ss:$16 sm:$0x3] %v83
    %s86 = scalar_lea.vmem [#allocation0], 16
    %v87 = vld [vmem:[%s86] sm:$0x3]
    %s88 = scalar_lea.vmem %s1, 1
    %89 = vst [vmem:[%s88] ss:$16 sm:$0x3] %v87
    %s90 = scalar_lea.vmem [#allocation0], 24
    %v91 = vld [vmem:[%s90] sm:$0x3]
    %s92 = scalar_lea.vmem %s1, 9
    %93 = vst [vmem:[%s92] ss:$16 sm:$0x3] %v91
    %s94 = scalar_lea.vmem [#allocation0], 32
    %v95 = vld [vmem:[%s94] sm:$0x3]
    %s96 = scalar_lea.vmem %s1, 2
    %97 = vst [vmem:[%s96] ss:$16 sm:$0x3] %v95
    %s98 = scalar_lea.vmem [#allocation0], 40
    %v99 = vld [vmem:[%s98] sm:$0x3]
    %s100 = scalar_lea.vmem %s1, 10
    %101 = vst [vmem:[%s100] ss:$16 sm:$0x3] %v99
    %s102 = scalar_lea.vmem [#allocation0], 48
    %v103 = vld [vmem:[%s102] sm:$0x3]
    %s104 = scalar_lea.vmem %s1, 3
    %105 = vst [vmem:[%s104] ss:$16 sm:$0x3] %v103
    %s106 = scalar_lea.vmem [#allocation0], 56
    %v107 = vld [vmem:[%s106] sm:$0x3]
    %s108 = scalar_lea.vmem %s1, 11
    %109 = vst [vmem:[%s108] ss:$16 sm:$0x3] %v107
    %s110 = scalar_lea.vmem [#allocation0], 64
    %v111 = vld [vmem:[%s110] sm:$0x3]
    %s112 = scalar_lea.vmem %s1, 4
    %113 = vst [vmem:[%s112] ss:$16 sm:$0x3] %v111
    %s114 = scalar_lea.vmem [#allocation0], 72
    %v115 = vld [vmem:[%s114] sm:$0x3]
    %s116 = scalar_lea.vmem %s1, 12
    %117 = vst [vmem:[%s116] ss:$16 sm:$0x3] %v115
    %s118 = scalar_lea.vmem [#allocation0], 80
    %v119 = vld [vmem:[%s118] sm:$0x3]
    %s120 = scalar_lea.vmem %s1, 5
    %121 = vst [vmem:[%s120] ss:$16 sm:$0x3] %v119
    %s122 = scalar_lea.vmem [#allocation0], 88
    %v123 = vld [vmem:[%s122] sm:$0x3]
    %s124 = scalar_lea.vmem %s1, 13
    %125 = vst [vmem:[%s124] ss:$16 sm:$0x3] %v123
    %s126 = scalar_lea.vmem [#allocation0], 96
    %v127 = vld [vmem:[%s126] sm:$0x3]
    %s128 = scalar_lea.vmem %s1, 6
    %129 = vst [vmem:[%s128] ss:$16 sm:$0x3] %v127
    %s130 = scalar_lea.vmem [#allocation0], 104
    %v131 = vld [vmem:[%s130] sm:$0x3]
    %s132 = scalar_lea.vmem %s1, 14
    %133 = vst [vmem:[%s132] ss:$16 sm:$0x3] %v131
    %s134 = scalar_lea.vmem [#allocation0], 112
    %v135 = vld [vmem:[%s134] sm:$0x3]
    %s136 = scalar_lea.vmem %s1, 7
    %137 = vst [vmem:[%s136] ss:$16 sm:$0x3] %v135
    %s138 = scalar_lea.vmem [#allocation0], 120
    %v139 = vld [vmem:[%s138] sm:$0x3]
    %s140 = scalar_lea.vmem %s1, 15
    %141 = vst [vmem:[%s140] ss:$16 sm:$0x3] %v139

// kernel: vampnet_forward.3
$region0: #{vampnet_forward.3}
  #allocation0 [shape = 'u32[]', space=smem, size = 0x4, offset = 0x4, fixed_abs, tag = 'smem constant byte address 0x4 - core index']
  #allocation1 [shape = 'u32[144,128]{1,0:T(1,128)}', space=vmem, size = 0x12000, scoped, tag = 'internal scratch']
  %s0 = inlined_call_operand.vmem [shape: f32[2,8,128], index: 0, kind: input, shape index: {}]
  %s1 = inlined_call_operand.vmem [shape: f32[2,1,128], index: 1, kind: input, shape index: {}]
  %s2 = inlined_call_operand.vmem [shape: f32[2,128,384], index: 2, kind: input, shape index: {}]
  %s3 = inlined_call_operand.vmem [shape: f32[2,128,128], index: 3, kind: input, shape index: {}]
  %s4 = inlined_call_operand.vmem [shape: f32[2,8,8], index: 4, kind: input, shape index: {}]
  %s5 = inlined_call_operand.vmem [shape: f32[2,1,128], index: 5, kind: input, shape index: {}]
  %s6 = inlined_call_operand.vmem [shape: f32[2,128,512], index: 6, kind: input, shape index: {}]
  %s7 = inlined_call_operand.vmem [shape: f32[2,256,128], index: 7, kind: input, shape index: {}]
  %s8 = inlined_call_operand.hbm [shape: f32[2,8,128], index: 8, kind: output, shape index: {}]
  %s9 = sld [smem:[#allocation0]]
  $region69: #{vampnet_forward.3} parent=0
    _
  %s11 = ssub.s32 1, %s9
  %s12 = scalar_select 0, %s11, %s9
  $region1: #{vampnet_forward.3} parent=0
    #allocation2 [shape = 'u8[8192]{0}', space=vmem, size = 0x2000, scoped, tag = 'output window, operand 0']
    #allocation3 [shape = 's32[2]{0}', space=sflag, size = 0x8, scoped, tag = 'scoped memory for vampnet_forward.3']
    %13 = vsyncpa [#allocation3], 0
    %s14 = scalar_lea.sflag [#allocation3], 1
    %15 = vsyncpa %s14, 0
    loop: start=0, step=1, limit=6
    $region2: #{vampnet_forward.3} parent=1 // loop_pre_header
      _
    $region3: #{vampnet_forward.3} parent=1 // loop_header
      %s17 = sphi 0, %s21
      %p18 = scmp.ge.s32.totalorder %s17, 6
      %s24 = sphi 0, %s36
      %s25 = sphi 0, %s32
      %s26 = sphi 0, %s24
      %s27 = sphi 0, %s25
      %s28 = sphi 0, %s26
      %s29 = sphi 0, %s27
      %s39 = sphi 0, %s41
      %s42 = sphi 0, %s39
      %s43 = sphi 0, %s42
      %s59 = sphi 0, %s43
      %s65 = sphi 0, %s67
      %s68 = sphi 0, %s65
      %s69 = sphi 0, %s68
      %s85 = sphi 0, %s69
      %s91 = sphi 0, %s93
      %s94 = sphi 0, %s91
      %s95 = sphi 0, %s94
      %s111 = sphi 0, %s95
      %s117 = sphi 0, %s119
      %s120 = sphi 0, %s117
      %s121 = sphi 0, %s120
      %s137 = sphi 0, %s121
      %s141 = sphi 0, %s141
      %s143 = sphi 0, %s141
      %s144 = sphi 0, %s143
      %s158 = sphi 0, %s144
      %s164 = sphi 0, %s166
      %s167 = sphi 0, %s164
      %s168 = sphi 0, %s167
      %s184 = sphi 0, %s168
      %s190 = sphi 0, %s192
      %s193 = sphi 0, %s190
      %s194 = sphi 0, %s193
      %s210 = sphi 0, %s194
      %s216 = sphi 0, %s218
      %s219 = sphi 0, %s216
      %s220 = sphi 0, %s219
      %s236 = sphi 0, %s220
      %s242 = sphi 0, %s244
      %s245 = sphi 0, %s242
      %s246 = sphi 0, %s245
      %s262 = sphi 0, %s246
    $region4: #{vampnet_forward.3} parent=1 // loop_header_branch
      %20 = sbr.rel (%p18) target = $region8
    $region5: #{vampnet_forward.3} parent=1 // loop_body
      %s22 = ssub.s32 %s17, 1
      %s23 = ssub.s32 %s17, 2
      %s30 = sadd.s32 1, %s25
      %p31 = scmp.ge.s32.totalorder %s30, 2
      %s32 = scalar_select %p31, 0, %s30
      %s33 = sadd.s32 1, %s24
      %s34 = scalar_select %p31, %s33, %s24
      %p35 = scmp.ge.s32.totalorder %s34, 2
      %s36 = scalar_select %p35, 0, %s34
      %s37 = ssub.s32 %s24, %s36
      %p38 = scmp.eq.s32.totalorder %s37, 0
      %s40 = sadd.s32 %s39, 1
      %s41 = scalar_select %p38, %s39, %s40
      %p44 = pneg %p38
      %p45 = scmp.eq.s32.totalorder %s17, 3
      %p46 = por %p44, %p45
      %p47 = scmp.ne.s32.totalorder %s39, %s42
      %p48 = scmp.eq.s32.totalorder %s17, 0
      %p49 = por %p47, %p48
      %p50 = scmp.ne.s32.totalorder %s39, %s42
      %p51 = scmp.eq.s32.totalorder %s22, 3
      %p52 = por %p50, %p51
      %p53 = scmp.ne.s32.totalorder %s42, %s43
      %p54 = scmp.eq.s32.totalorder %s22, 0
      %p55 = por %p53, %p54
      %p56 = scmp.ne.s32.totalorder %s42, %s43
      %p57 = scmp.eq.s32.totalorder %s23, 3
      %p58 = por %p56, %p57
      %p60 = scmp.ne.s32.totalorder %s43, %s59
      %p61 = scmp.eq.s32.totalorder %s23, 0
      %p62 = por %p60, %p61
      %s63 = ssub.s32 %s25, %s32
      %p64 = scmp.eq.s32.totalorder %s63, 0
      %s66 = sadd.s32 %s65, 1
      %s67 = scalar_select %p64, %s65, %s66
      %p70 = pneg %p64
      %p71 = scmp.eq.s32.totalorder %s17, 3
      %p72 = por %p70, %p71
      %p73 = scmp.ne.s32.totalorder %s65, %s68
      %p74 = scmp.eq.s32.totalorder %s17, 0
      %p75 = por %p73, %p74
      %p76 = scmp.ne.s32.totalorder %s65, %s68
      %p77 = scmp.eq.s32.totalorder %s22, 3
      %p78 = por %p76, %p77
      %p79 = scmp.ne.s32.totalorder %s68, %s69
      %p80 = scmp.eq.s32.totalorder %s22, 0
      %p81 = por %p79, %p80
      %p82 = scmp.ne.s32.totalorder %s68, %s69
      %p83 = scmp.eq.s32.totalorder %s23, 3
      %p84 = por %p82, %p83
      %p86 = scmp.ne.s32.totalorder %s69, %s85
      %p87 = scmp.eq.s32.totalorder %s23, 0
      %p88 = por %p86, %p87
      %s89 = ssub.s32 %s25, %s32
      %p90 = scmp.eq.s32.totalorder %s89, 0
      %s92 = sadd.s32 %s91, 1
      %s93 = scalar_select %p90, %s91, %s92
      %p96 = pneg %p90
      %p97 = scmp.eq.s32.totalorder %s17, 3
      %p98 = por %p96, %p97
      %p99 = scmp.ne.s32.totalorder %s91, %s94
      %p100 = scmp.eq.s32.totalorder %s17, 0
      %p101 = por %p99, %p100
      %p102 = scmp.ne.s32.totalorder %s91, %s94
      %p103 = scmp.eq.s32.totalorder %s22, 3
      %p104 = por %p102, %p103
      %p105 = scmp.ne.s32.totalorder %s94, %s95
      %p106 = scmp.eq.s32.totalorder %s22, 0
      %p107 = por %p105, %p106
      %p108 = scmp.ne.s32.totalorder %s94, %s95
      %p109 = scmp.eq.s32.totalorder %s23, 3
      %p110 = por %p108, %p109
      %p112 = scmp.ne.s32.totalorder %s95, %s111
      %p113 = scmp.eq.s32.totalorder %s23, 0
      %p114 = por %p112, %p113
      %s115 = ssub.s32 %s25, %s32
      %p116 = scmp.eq.s32.totalorder %s115, 0
      %s118 = sadd.s32 %s117, 1
      %s119 = scalar_select %p116, %s117, %s118
      %p122 = pneg %p116
      %p123 = scmp.eq.s32.totalorder %s17, 3
      %p124 = por %p122, %p123
      %p125 = scmp.ne.s32.totalorder %s117, %s120
      %p126 = scmp.eq.s32.totalorder %s17, 0
      %p127 = por %p125, %p126
      %p128 = scmp.ne.s32.totalorder %s117, %s120
      %p129 = scmp.eq.s32.totalorder %s22, 3
      %p130 = por %p128, %p129
      %p131 = scmp.ne.s32.totalorder %s120, %s121
      %p132 = scmp.eq.s32.totalorder %s22, 0
      %p133 = por %p131, %p132
      %p134 = scmp.ne.s32.totalorder %s120, %s121
      %p135 = scmp.eq.s32.totalorder %s23, 3
      %p136 = por %p134, %p135
      %p138 = scmp.ne.s32.totalorder %s121, %s137
      %p139 = scmp.eq.s32.totalorder %s23, 0
      %p140 = por %p138, %p139
      %s142 = sadd.s32 %s141, 1
      %p145 = scmp.eq.s32.totalorder %s17, 3
      %p146 = scmp.ne.s32.totalorder %s141, %s143
      %p147 = scmp.eq.s32.totalorder %s17, 0
      %p148 = por %p146, %p147
      %p149 = scmp.ne.s32.totalorder %s141, %s143
      %p150 = scmp.eq.s32.totalorder %s22, 3
      %p151 = por %p149, %p150
      %p152 = scmp.ne.s32.totalorder %s143, %s144
      %p153 = scmp.eq.s32.totalorder %s22, 0
      %p154 = por %p152, %p153
      %p155 = scmp.ne.s32.totalorder %s143, %s144
      %p156 = scmp.eq.s32.totalorder %s23, 3
      %p157 = por %p155, %p156
      %p159 = scmp.ne.s32.totalorder %s144, %s158
      %p160 = scmp.eq.s32.totalorder %s23, 0
      %p161 = por %p159, %p160
      %s162 = ssub.s32 %s25, %s32
      %p163 = scmp.eq.s32.totalorder %s162, 0
      %s165 = sadd.s32 %s164, 1
      %s166 = scalar_select %p163, %s164, %s165
      %p169 = pneg %p163
      %p170 = scmp.eq.s32.totalorder %s17, 3
      %p171 = por %p169, %p170
      %p172 = scmp.ne.s32.totalorder %s164, %s167
      %p173 = scmp.eq.s32.totalorder %s17, 0
      %p174 = por %p172, %p173
      %p175 = scmp.ne.s32.totalorder %s164, %s167
      %p176 = scmp.eq.s32.totalorder %s22, 3
      %p177 = por %p175, %p176
      %p178 = scmp.ne.s32.totalorder %s167, %s168
      %p179 = scmp.eq.s32.totalorder %s22, 0
      %p180 = por %p178, %p179
      %p181 = scmp.ne.s32.totalorder %s167, %s168
      %p182 = scmp.eq.s32.totalorder %s23, 3
      %p183 = por %p181, %p182
      %p185 = scmp.ne.s32.totalorder %s168, %s184
      %p186 = scmp.eq.s32.totalorder %s23, 0
      %p187 = por %p185, %p186
      %s188 = ssub.s32 %s25, %s32
      %p189 = scmp.eq.s32.totalorder %s188, 0
      %s191 = sadd.s32 %s190, 1
      %s192 = scalar_select %p189, %s190, %s191
      %p195 = pneg %p189
      %p196 = scmp.eq.s32.totalorder %s17, 3
      %p197 = por %p195, %p196
      %p198 = scmp.ne.s32.totalorder %s190, %s193
      %p199 = scmp.eq.s32.totalorder %s17, 0
      %p200 = por %p198, %p199
      %p201 = scmp.ne.s32.totalorder %s190, %s193
      %p202 = scmp.eq.s32.totalorder %s22, 3
      %p203 = por %p201, %p202
      %p204 = scmp.ne.s32.totalorder %s193, %s194
      %p205 = scmp.eq.s32.totalorder %s22, 0
      %p206 = por %p204, %p205
      %p207 = scmp.ne.s32.totalorder %s193, %s194
      %p208 = scmp.eq.s32.totalorder %s23, 3
      %p209 = por %p207, %p208
      %p211 = scmp.ne.s32.totalorder %s194, %s210
      %p212 = scmp.eq.s32.totalorder %s23, 0
      %p213 = por %p211, %p212
      %s214 = ssub.s32 %s25, %s32
      %p215 = scmp.eq.s32.totalorder %s214, 0
      %s217 = sadd.s32 %s216, 1
      %s218 = scalar_select %p215, %s216, %s217
      %p221 = pneg %p215
      %p222 = scmp.eq.s32.totalorder %s17, 3
      %p223 = por %p221, %p222
      %p224 = scmp.ne.s32.totalorder %s216, %s219
      %p225 = scmp.eq.s32.totalorder %s17, 0
      %p226 = por %p224, %p225
      %p227 = scmp.ne.s32.totalorder %s216, %s219
      %p228 = scmp.eq.s32.totalorder %s22, 3
      %p229 = por %p227, %p228
      %p230 = scmp.ne.s32.totalorder %s219, %s220
      %p231 = scmp.eq.s32.totalorder %s22, 0
      %p232 = por %p230, %p231
      %p233 = scmp.ne.s32.totalorder %s219, %s220
      %p234 = scmp.eq.s32.totalorder %s23, 3
      %p235 = por %p233, %p234
      %p237 = scmp.ne.s32.totalorder %s220, %s236
      %p238 = scmp.eq.s32.totalorder %s23, 0
      %p239 = por %p237, %p238
      %s240 = ssub.s32 %s24, %s36
      %p241 = scmp.eq.s32.totalorder %s240, 0
      %s243 = sadd.s32 %s242, 1
      %s244 = scalar_select %p241, %s242, %s243
      %p247 = pneg %p241
      %p248 = scmp.eq.s32.totalorder %s17, 3
      %p249 = por %p247, %p248
      %p250 = scmp.ne.s32.totalorder %s242, %s245
      %p251 = scmp.eq.s32.totalorder %s17, 0
      %p252 = por %p250, %p251
      %p253 = scmp.ne.s32.totalorder %s242, %s245
      %p254 = scmp.eq.s32.totalorder %s22, 3
      %p255 = por %p253, %p254
      %p256 = scmp.ne.s32.totalorder %s245, %s246
      %p257 = scmp.eq.s32.totalorder %s22, 0
      %p258 = por %p256, %p257
      %p259 = scmp.ne.s32.totalorder %s245, %s246
      %p260 = scmp.eq.s32.totalorder %s23, 3
      %p261 = por %p259, %p260
      %p263 = scmp.ne.s32.totalorder %s246, %s262
      %p264 = scmp.eq.s32.totalorder %s23, 0
      %p265 = por %p263, %p264
      %p266 = scmp.le.s32.totalorder 1, %s17
      %p267 = scmp.lt.s32.totalorder %s17, 5
      %p268 = pnand %p266, %p267
      %p269 = pneg %p268
      // Predicated region
      $region9: #{vampnet_forward.3} parent=5 // pred_check
        _
      $region10: #{vampnet_forward.3} parent=5 // pred_check_branch
        %271 = sbr.rel (%p268) target = $region12
      $region11: #{vampnet_forward.3} parent=5 // pred_region
        %s272 = ssub.s32 %s17, 1
        // Predicated region
        $region13: #{vampnet_forward.3} parent=11 // pred_check
          %p273 = pneg %p154
        $region14: #{vampnet_forward.3} parent=11 // pred_check_branch
          %275 = sbr.rel (%p273) target = $region16
        $region15: #{vampnet_forward.3} parent=11 // pred_region
          _
        $region16: #{vampnet_forward.3} parent=11 // pred_fallthru
          _
      $region12: #{vampnet_forward.3} parent=5 // pred_fallthru
        _
      %p276 = scmp.lt.s32.totalorder %s17, 4
      // Predicated region
      $region17: #{vampnet_forward.3} parent=5 // pred_check
        %p277 = pneg %p276
      $region18: #{vampnet_forward.3} parent=5 // pred_check_branch
        %279 = sbr.rel (%p277) target = $region20
      $region19: #{vampnet_forward.3} parent=5 // pred_region
        // Predicated region
        $region21: #{vampnet_forward.3} parent=19 // pred_check
          %p280 = pneg %p49
        $region22: #{vampnet_forward.3} parent=19 // pred_check_branch
          %282 = sbr.rel (%p280) target = $region24
        $region23: #{vampnet_forward.3} parent=19 // pred_region
          %p283 = scmp.lt.s32.totalorder %s24, 1
          %s284 = scalar_select %p283, %s24, 1
          %s285 = smul.addr %s284, 8
          %s286 = scalar_lea.vmem %s0, %s285
        $region24: #{vampnet_forward.3} parent=19 // pred_fallthru
          _
        // Predicated region
        $region25: #{vampnet_forward.3} parent=19 // pred_check
          %p287 = pneg %p75
        $region26: #{vampnet_forward.3} parent=19 // pred_check_branch
          %289 = sbr.rel (%p287) target = $region28
        $region27: #{vampnet_forward.3} parent=19 // pred_region
          %p290 = scmp.lt.s32.totalorder %s25, 1
          %s291 = scalar_select %p290, %s25, 1
          %s292 = scalar_lea.vmem %s1, %s291
        $region28: #{vampnet_forward.3} parent=19 // pred_fallthru
          _
        // Predicated region
        $region29: #{vampnet_forward.3} parent=19 // pred_check
          %p293 = pneg %p101
        $region30: #{vampnet_forward.3} parent=19 // pred_check_branch
          %295 = sbr.rel (%p293) target = $region32
        $region31: #{vampnet_forward.3} parent=19 // pred_region
          %p296 = scmp.lt.s32.totalorder %s25, 1
          %s297 = scalar_select %p296, %s25, 1
          %s298 = smul.addr %s297, 48
          %s299 = smul.addr %s298, 8
          %s300 = scalar_lea.vmem %s2, %s299
        $region32: #{vampnet_forward.3} parent=19 // pred_fallthru
          _
        // Predicated region
        $region33: #{vampnet_forward.3} parent=19 // pred_check
          %p301 = pneg %p127
        $region34: #{vampnet_forward.3} parent=19 // pred_check_branch
          %303 = sbr.rel (%p301) target = $region36
        $region35: #{vampnet_forward.3} parent=19 // pred_region
          %p304 = scmp.lt.s32.totalorder %s25, 1
          %s305 = scalar_select %p304, %s25, 1
          %s306 = smul.addr %s305, 16
          %s307 = smul.addr %s306, 8
          %s308 = scalar_lea.vmem %s3, %s307
        $region36: #{vampnet_forward.3} parent=19 // pred_fallthru
          _
        // Predicated region
        $region37: #{vampnet_forward.3} parent=19 // pred_check
          %p309 = pneg %p174
        $region38: #{vampnet_forward.3} parent=19 // pred_check_branch
          %311 = sbr.rel (%p309) target = $region40
        $region39: #{vampnet_forward.3} parent=19 // pred_region
          %p312 = scmp.lt.s32.totalorder %s25, 1
          %s313 = scalar_select %p312, %s25, 1
          %s314 = scalar_lea.vmem %s5, %s313
        $region40: #{vampnet_forward.3} parent=19 // pred_fallthru
          _
        // Predicated region
        $region41: #{vampnet_forward.3} parent=19 // pred_check
          %p315 = pneg %p200
        $region42: #{vampnet_forward.3} parent=19 // pred_check_branch
          %317 = sbr.rel (%p315) target = $region44
        $region43: #{vampnet_forward.3} parent=19 // pred_region
          %p318 = scmp.lt.s32.totalorder %s25, 1
          %s319 = scalar_select %p318, %s25, 1
          %s320 = smul.addr %s319, 64
          %s321 = smul.addr %s320, 8
          %s322 = scalar_lea.vmem %s6, %s321
        $region44: #{vampnet_forward.3} parent=19 // pred_fallthru
          _
        // Predicated region
        $region45: #{vampnet_forward.3} parent=19 // pred_check
          %p323 = pneg %p226
        $region46: #{vampnet_forward.3} parent=19 // pred_check_branch
          %325 = sbr.rel (%p323) target = $region48
        $region47: #{vampnet_forward.3} parent=19 // pred_region
          %p326 = scmp.lt.s32.totalorder %s25, 1
          %s327 = scalar_select %p326, %s25, 1
          %s328 = smul.addr %s327, 32
          %s329 = smul.addr %s328, 8
          %s330 = scalar_lea.vmem %s7, %s329
        $region48: #{vampnet_forward.3} parent=19 // pred_fallthru
          _
      $region20: #{vampnet_forward.3} parent=5 // pred_fallthru
        _
      %p331 = scmp.le.s32.totalorder 1, %s17
      %p332 = scmp.lt.s32.totalorder %s17, 5
      %p333 = pnand %p331, %p332
      %p334 = pneg %p333
      // Predicated region
      $region49: #{vampnet_forward.3} parent=5 // pred_check
        _
      $region50: #{vampnet_forward.3} parent=5 // pred_check_branch
        %336 = sbr.rel (%p333) target = $region52
      $region51: #{vampnet_forward.3} parent=5 // pred_region
        %s337 = ssub.s32 %s17, 1
        %p338 = scmp.lt.s32.totalorder %s26, 1
        %s339 = scalar_select %p338, %s26, 1
        %s340 = smul.addr %s339, 8
        %s341 = scalar_lea.vmem %s0, %s340
        %p342 = pneg %p55
        %p343 = pneg %p52
        %p344 = scmp.lt.s32.totalorder %s27, 1
        %s345 = scalar_select %p344, %s27, 1
        %s346 = scalar_lea.vmem %s1, %s345
        %p347 = pneg %p81
        %p348 = pneg %p78
        %p349 = scmp.lt.s32.totalorder %s27, 1
        %s350 = scalar_select %p349, %s27, 1
        %s351 = smul.addr %s350, 48
        %s352 = smul.addr %s351, 8
        %s353 = scalar_lea.vmem %s2, %s352
        %p354 = pneg %p107
        %p355 = pneg %p104
        %p356 = scmp.lt.s32.totalorder %s27, 1
        %s357 = scalar_select %p356, %s27, 1
        %s358 = smul.addr %s357, 16
        %s359 = smul.addr %s358, 8
        %s360 = scalar_lea.vmem %s3, %s359
        %p361 = pneg %p133
        %p362 = pneg %p130
        %p363 = pneg %p154
        %p364 = pneg %p151
        %p365 = scmp.lt.s32.totalorder %s27, 1
        %s366 = scalar_select %p365, %s27, 1
        %s367 = scalar_lea.vmem %s5, %s366
        %p368 = pneg %p180
        %p369 = pneg %p177
        %p370 = scmp.lt.s32.totalorder %s27, 1
        %s371 = scalar_select %p370, %s27, 1
        %s372 = smul.addr %s371, 64
        %s373 = smul.addr %s372, 8
        %s374 = scalar_lea.vmem %s6, %s373
        %p375 = pneg %p206
        %p376 = pneg %p203
        %p377 = scmp.lt.s32.totalorder %s27, 1
        %s378 = scalar_select %p377, %s27, 1
        %s379 = smul.addr %s378, 32
        %s380 = smul.addr %s379, 8
        %s381 = scalar_lea.vmem %s7, %s380
        %p382 = pneg %p232
        %p383 = pneg %p229
        %p384 = pneg %p258
        %p385 = pneg %p255
        %s386 = sand.u32 %s245, 1
        %s387 = scalar_lea.sflag [#allocation3], %s386
        %s388 = sand.u32 %s245, 1
        %s389 = smul.addr %s388, 8
        %s390 = scalar_lea.vmem [#allocation2], %s389
        %p391 = scmp.lt.s32.totalorder %s26, 1
        %s392 = scalar_select %p391, %s26, 1
        %s393 = smul.addr %s392, 8
        %s394 = scalar_lea.vmem %s0, %s393
        %p395 = scmp.lt.s32.totalorder %s27, 1
        %s396 = scalar_select %p395, %s27, 1
        %s397 = scalar_lea.vmem %s1, %s396
        %p398 = scmp.lt.s32.totalorder %s27, 1
        %s399 = scalar_select %p398, %s27, 1
        %s400 = smul.addr %s399, 48
        %s401 = smul.addr %s400, 8
        %s402 = scalar_lea.vmem %s2, %s401
        %p403 = scmp.lt.s32.totalorder %s27, 1
        %s404 = scalar_select %p403, %s27, 1
        %s405 = smul.addr %s404, 16
        %s406 = smul.addr %s405, 8
        %s407 = scalar_lea.vmem %s3, %s406
        %p408 = scmp.lt.s32.totalorder %s27, 1
        %s409 = scalar_select %p408, %s27, 1
        %s410 = scalar_lea.vmem %s5, %s409
        %p411 = scmp.lt.s32.totalorder %s27, 1
        %s412 = scalar_select %p411, %s27, 1
        %s413 = smul.addr %s412, 64
        %s414 = smul.addr %s413, 8
        %s415 = scalar_lea.vmem %s6, %s414
        %p416 = scmp.lt.s32.totalorder %s27, 1
        %s417 = scalar_select %p416, %s27, 1
        %s418 = smul.addr %s417, 32
        %s419 = smul.addr %s418, 8
        %s420 = scalar_lea.vmem %s7, %s419
        %p421 = scmp.eq.s32.totalorder %s27, 0
        // Predicated region
        $region53: #{vampnet_forward.3} parent=51 // pred_check
          %p422 = pneg %p421
        $region54: #{vampnet_forward.3} parent=51 // pred_check_branch
          %424 = sbr.rel (%p422) target = $region56
        $region55: #{vampnet_forward.3} parent=51 // pred_region
          %v425 = vld [vmem:[%s394] sm:$0xff]
          %426 = vst [vmem:[%s390] sm:$0xff] %v425
        $region56: #{vampnet_forward.3} parent=51 // pred_fallthru
          _
        %v427 = vld [vmem:[%s390] sm:$0xff]
        %v428 = vmul.f32 %v427, %v427
        %429 = vadd.xlane.f32.xlu0 %v428
        %v430 = vpop.xlane.xlu0 %429
        %v431 = vrcp.pop 128.0
        %v432 = vmul.f32 %v430, %v431
        %v433 = vadd.f32 %v432, 1e-06
        %v434 = vrsqrt.pop %v433
        %v435 = vmul.f32 %v427, %v434
        %v436 = vld [vmem:[%s397] sm:$0x1]
        %v438 = vlaneseq
        %v439 = vshrl.u32 %v438, 7
        %v440 = vsub.s32 0, %v439
        %v441 = vrot.slane %v436, %v440
        %v443 = vmul.f32 %v435, %v441
        %v444 = vld [vmem:[%s402] sm:$0xff]
        %v445 = vld [vmem:[%s402 + $0x8] sm:$0xff]
        %v446 = vld [vmem:[%s402 + $0x10] sm:$0xff]
        %v447 = vld [vmem:[%s402 + $0x18] sm:$0xff]
        %v448 = vld [vmem:[%s402 + $0x20] sm:$0xff]
        %v449 = vld [vmem:[%s402 + $0x28] sm:$0xff]
        %v450 = vld [vmem:[%s402 + $0x30] sm:$0xff]
        %v451 = vld [vmem:[%s402 + $0x38] sm:$0xff]
        %v452 = vld [vmem:[%s402 + $0x40] sm:$0xff]
        %v453 = vld [vmem:[%s402 + $0x48] sm:$0xff]
        %v454 = vld [vmem:[%s402 + $0x50] sm:$0xff]
        %v455 = vld [vmem:[%s402 + $0x58] sm:$0xff]
        %v456 = vld [vmem:[%s402 + $0x60] sm:$0xff]
        %v457 = vld [vmem:[%s402 + $0x68] sm:$0xff]
        %v458 = vld [vmem:[%s402 + $0x70] sm:$0xff]
        %v459 = vld [vmem:[%s402 + $0x78] sm:$0xff]
        %v460 = vld [vmem:[%s402 + $0x80] sm:$0xff]
        %v461 = vld [vmem:[%s402 + $0x88] sm:$0xff]
        %v462 = vld [vmem:[%s402 + $0x90] sm:$0xff]
        %v463 = vld [vmem:[%s402 + $0x98] sm:$0xff]
        %v464 = vld [vmem:[%s402 + $0xa0] sm:$0xff]
        %v465 = vld [vmem:[%s402 + $0xa8] sm:$0xff]
        %v466 = vld [vmem:[%s402 + $0xb0] sm:$0xff]
        %v467 = vld [vmem:[%s402 + $0xb8] sm:$0xff]
        %v468 = vld [vmem:[%s402 + $0xc0] sm:$0xff]
        %v469 = vld [vmem:[%s402 + $0xc8] sm:$0xff]
        %v470 = vld [vmem:[%s402 + $0xd0] sm:$0xff]
        %v471 = vld [vmem:[%s402 + $0xd8] sm:$0xff]
        %v472 = vld [vmem:[%s402 + $0xe0] sm:$0xff]
        %v473 = vld [vmem:[%s402 + $0xe8] sm:$0xff]
        %v474 = vld [vmem:[%s402 + $0xf0] sm:$0xff]
        %v475 = vld [vmem:[%s402 + $0xf8] sm:$0xff]
        %v476 = vld [vmem:[%s402 + $0x100] sm:$0xff]
        %v477 = vld [vmem:[%s402 + $0x108] sm:$0xff]
        %v478 = vld [vmem:[%s402 + $0x110] sm:$0xff]
        %v479 = vld [vmem:[%s402 + $0x118] sm:$0xff]
        %v480 = vld [vmem:[%s402 + $0x120] sm:$0xff]
        %v481 = vld [vmem:[%s402 + $0x128] sm:$0xff]
        %v482 = vld [vmem:[%s402 + $0x130] sm:$0xff]
        %v483 = vld [vmem:[%s402 + $0x138] sm:$0xff]
        %v484 = vld [vmem:[%s402 + $0x140] sm:$0xff]
        %v485 = vld [vmem:[%s402 + $0x148] sm:$0xff]
        %v486 = vld [vmem:[%s402 + $0x150] sm:$0xff]
        %v487 = vld [vmem:[%s402 + $0x158] sm:$0xff]
        %v488 = vld [vmem:[%s402 + $0x160] sm:$0xff]
        %v489 = vld [vmem:[%s402 + $0x168] sm:$0xff]
        %v490 = vld [vmem:[%s402 + $0x170] sm:$0xff]
        %v491 = vld [vmem:[%s402 + $0x178] sm:$0xff]
        %492 = vmatprep.subr.mxu0 %v445
        %493 = vmatpush1.msra.mxu0 %v444
        %494 = vmatprep.subr.mxu0 %v448
        %495 = vmatpush1.msra.mxu0 %v447
        %496 = vmatprep.subr.mxu0 %v451
        %497 = vmatpush1.msra.mxu0 %v450
        %498 = vmatprep.subr.mxu0 %v454
        %499 = vmatpush1.msra.mxu0 %v453
        %500 = vmatprep.subr.mxu0 %v457
        %501 = vmatpush1.msra.mxu0 %v456
        %502 = vmatprep.subr.mxu0 %v460
        %503 = vmatpush1.msra.mxu0 %v459
        %504 = vmatprep.subr.mxu0 %v463
        %505 = vmatpush1.msra.mxu0 %v462
        %506 = vmatprep.subr.mxu0 %v466
        %507 = vmatpush1.msra.mxu0 %v465
        %508 = vmatprep.subr.mxu0 %v469
        %509 = vmatpush1.msra.mxu0 %v468
        %510 = vmatprep.subr.mxu0 %v472
        %511 = vmatpush1.msra.mxu0 %v471
        %512 = vmatprep.subr.mxu0 %v475
        %513 = vmatpush1.msra.mxu0 %v474
        %514 = vmatprep.subr.mxu0 %v478
        %515 = vmatpush1.msra.mxu0 %v477
        %516 = vmatprep.subr.mxu0 %v481
        %517 = vmatpush1.msra.mxu0 %v480
        %518 = vmatprep.subr.mxu0 %v484
        %519 = vmatpush1.msra.mxu0 %v483
        %520 = vmatprep.subr.mxu0 %v487
        %521 = vmatpush1.msra.mxu0 %v486
        %522 = vmatprep.subr.mxu0 %v490
        %523 = vmatpush1.msra.mxu0 %v489
        %524 = vmatprep.subr.mxu0 0.0
        %525 = vmatpush1.msra.mxu0 0.0
        %526 = vmatprep.subr.mxu0 0.0
        %527 = vmatpush1.msra.mxu0 0.0
        %528 = vmatprep.subr.mxu0 0.0
        %529 = vmatpush1.msra.mxu0 0.0
        %530 = vmatprep.subr.mxu0 0.0
        %531 = vmatpush1.msra.mxu0 0.0
        %532 = vmatprep.subr.mxu0 0.0
        %533 = vmatpush1.msra.mxu0 0.0
        %534 = vmatprep.subr.mxu0 0.0
        %535 = vmatpush1.msra.mxu0 0.0
        %536 = vmatprep.subr.mxu0 0.0
        %537 = vmatpush1.msra.mxu0 0.0
        %538 = vmatprep.subr.mxu0 0.0
        %539 = vmatpush1.msra.mxu0 0.0
        %540 = vmatprep.subr.mxu0 0.0
        %541 = vmatpush1.msra.mxu0 0.0
        %542 = vmatprep.subr.mxu0 0.0
        %543 = vmatpush1.msra.mxu0 0.0
        %544 = vmatprep.subr.mxu0 0.0
        %545 = vmatpush1.msra.mxu0 0.0
        %546 = vmatprep.subr.mxu0 0.0
        %547 = vmatpush1.msra.mxu0 0.0
        %548 = vmatprep.subr.mxu0 0.0
        %549 = vmatpush1.msra.mxu0 0.0
        %550 = vmatprep.subr.mxu0 0.0
        %551 = vmatpush1.msra.mxu0 0.0
        %552 = vmatprep.subr.mxu0 0.0
        %553 = vmatpush1.msra.mxu0 0.0
        %554 = vmatprep.subr.mxu0 0.0
        %555 = vmatpush1.msra.mxu0 0.0
        %556 = vmatprep.mubr.f32.mxu0 0.0
        %557 = vmatmul.mubr.f32.gmra.mrb[0].mxu0 %v443
        %v558 = vpop.f32.mrb[0].mxu0
        %v559 = vadd.f32 0.0, %v558
        %v560 = vpop.f32.mrb[0].mxu0
        %v561 = vadd.f32 0.0, %v560
        %562 = vdwg.mxu0
        %563 = vmatprep.subr.mxu0 0.0
        %564 = vmatpush1.msra.mxu0 %v446
        %565 = vmatprep.subr.mxu0 0.0
        %566 = vmatpush1.msra.mxu0 %v449
        %567 = vmatprep.subr.mxu0 0.0
        %568 = vmatpush1.msra.mxu0 %v452
        %569 = vmatprep.subr.mxu0 0.0
        %570 = vmatpush1.msra.mxu0 %v455
        %571 = vmatprep.subr.mxu0 0.0
        %572 = vmatpush1.msra.mxu0 %v458
        %573 = vmatprep.subr.mxu0 0.0
        %574 = vmatpush1.msra.mxu0 %v461
        %575 = vmatprep.subr.mxu0 0.0
        %576 = vmatpush1.msra.mxu0 %v464
        %577 = vmatprep.subr.mxu0 0.0
        %578 = vmatpush1.msra.mxu0 %v467
        %579 = vmatprep.subr.mxu0 0.0
        %580 = vmatpush1.msra.mxu0 %v470
        %581 = vmatprep.subr.mxu0 0.0
        %582 = vmatpush1.msra.mxu0 %v473
        %583 = vmatprep.subr.mxu0 0.0
        %584 = vmatpush1.msra.mxu0 %v476
        %585 = vmatprep.subr.mxu0 0.0
        %586 = vmatpush1.msra.mxu0 %v479
        %587 = vmatprep.subr.mxu0 0.0
        %588 = vmatpush1.msra.mxu0 %v482
        %589 = vmatprep.subr.mxu0 0.0
        %590 = vmatpush1.msra.mxu0 %v485
        %591 = vmatprep.subr.mxu0 0.0
        %592 = vmatpush1.msra.mxu0 %v488
        %593 = vmatprep.subr.mxu0 0.0
        %594 = vmatpush1.msra.mxu0 %v491
        %595 = vmatprep.subr.mxu0 0.0
        %596 = vmatpush1.msra.mxu0 0.0
        %597 = vmatprep.subr.mxu0 0.0
        %598 = vmatpush1.msra.mxu0 0.0
        %599 = vmatprep.subr.mxu0 0.0
        %600 = vmatpush1.msra.mxu0 0.0
        %601 = vmatprep.subr.mxu0 0.0
        %602 = vmatpush1.msra.mxu0 0.0
        %603 = vmatprep.subr.mxu0 0.0
        %604 = vmatpush1.msra.mxu0 0.0
        %605 = vmatprep.subr.mxu0 0.0
        %606 = vmatpush1.msra.mxu0 0.0
        %607 = vmatprep.subr.mxu0 0.0
        %608 = vmatpush1.msra.mxu0 0.0
        %609 = vmatprep.subr.mxu0 0.0
        %610 = vmatpush1.msra.mxu0 0.0
        %611 = vmatprep.subr.mxu0 0.0
        %612 = vmatpush1.msra.mxu0 0.0
        %613 = vmatprep.subr.mxu0 0.0
        %614 = vmatpush1.msra.mxu0 0.0
        %615 = vmatprep.subr.mxu0 0.0
        %616 = vmatpush1.msra.mxu0 0.0
        %617 = vmatprep.subr.mxu0 0.0
        %618 = vmatpush1.msra.mxu0 0.0
        %619 = vmatprep.subr.mxu0 0.0
        %620 = vmatpush1.msra.mxu0 0.0
        %621 = vmatprep.subr.mxu0 0.0
        %622 = vmatpush1.msra.mxu0 0.0
        %623 = vmatprep.subr.mxu0 0.0
        %624 = vmatpush1.msra.mxu0 0.0
        %625 = vmatprep.subr.mxu0 0.0
        %626 = vmatpush1.msra.mxu0 0.0
        %627 = vmatprep.mubr.f32.mxu0 0.0
        %628 = vmatmul.mubr.f32.gmra.mrb[0].mxu0 %v443
        %v629 = vpop.f32.mrb[0].mxu0
        %v630 = vadd.f32 0.0, %v629
        %v631 = vpop.f32.mrb[0].mxu0
        %632 = vdwg.mxu0
        %v633 = vld [vmem:[%s407] sm:$0xff]
        %v634 = vld [vmem:[%s407 + $0x8] sm:$0xff]
        %v635 = vld [vmem:[%s407 + $0x10] sm:$0xff]
        %v636 = vld [vmem:[%s407 + $0x18] sm:$0xff]
        %v637 = vld [vmem:[%s407 + $0x20] sm:$0xff]
        %v638 = vld [vmem:[%s407 + $0x28] sm:$0xff]
        %v639 = vld [vmem:[%s407 + $0x30] sm:$0xff]
        %v640 = vld [vmem:[%s407 + $0x38] sm:$0xff]
        %v641 = vld [vmem:[%s407 + $0x40] sm:$0xff]
        %v642 = vld [vmem:[%s407 + $0x48] sm:$0xff]
        %v643 = vld [vmem:[%s407 + $0x50] sm:$0xff]
        %v644 = vld [vmem:[%s407 + $0x58] sm:$0xff]
        %v645 = vld [vmem:[%s407 + $0x60] sm:$0xff]
        %v646 = vld [vmem:[%s407 + $0x68] sm:$0xff]
        %v647 = vld [vmem:[%s407 + $0x70] sm:$0xff]
        %v648 = vld [vmem:[%s407 + $0x78] sm:$0xff]
        %v649 = vld [vmem:[%s4] sm:$0xff]
        %vm650 = vcmask 523264
        %v652 = vsel %vm650, %v559, 0
        %v655 = vsel %vm650, %v561, 0
        %657 = vmatprep.subr.mxu0 0.0
        %658 = vmatpush1.xpose.msra.mxu0 %v655
        %659 = vmatprep.subr.mxu0 0.0
        %660 = vmatpush1.xpose.msra.mxu0 0.0
        %661 = vmatprep.subr.mxu0 0.0
        %662 = vmatpush1.xpose.msra.mxu0 0.0
        %663 = vmatprep.subr.mxu0 0.0
        %664 = vmatpush1.xpose.msra.mxu0 0.0
        %665 = vmatprep.subr.mxu0 0.0
        %666 = vmatpush1.xpose.msra.mxu0 0.0
        %667 = vmatprep.subr.mxu0 0.0
        %668 = vmatpush1.xpose.msra.mxu0 0.0
        %669 = vmatprep.subr.mxu0 0.0
        %670 = vmatpush1.xpose.msra.mxu0 0.0
        %671 = vmatprep.subr.mxu0 0.0
        %672 = vmatpush1.xpose.msra.mxu0 0.0
        %673 = vmatprep.subr.mxu0 0.0
        %674 = vmatpush1.xpose.msra.mxu0 0.0
        %675 = vmatprep.subr.mxu0 0.0
        %676 = vmatpush1.xpose.msra.mxu0 0.0
        %677 = vmatprep.subr.mxu0 0.0
        %678 = vmatpush1.xpose.msra.mxu0 0.0
        %679 = vmatprep.subr.mxu0 0.0
        %680 = vmatpush1.xpose.msra.mxu0 0.0
        %681 = vmatprep.subr.mxu0 0.0
        %682 = vmatpush1.xpose.msra.mxu0 0.0
        %683 = vmatprep.subr.mxu0 0.0
        %684 = vmatpush1.xpose.msra.mxu0 0.0
        %685 = vmatprep.subr.mxu0 0.0
        %686 = vmatpush1.xpose.msra.mxu0 0.0
        %687 = vmatprep.subr.mxu0 0.0
        %688 = vmatpush1.xpose.msra.mxu0 0.0
        %689 = vmatprep.subr.mxu0 0.0
        %690 = vmatpush1.xpose.msra.mxu0 0.0
        %691 = vmatprep.subr.mxu0 0.0
        %692 = vmatpush1.xpose.msra.mxu0 0.0
        %693 = vmatprep.subr.mxu0 0.0
        %694 = vmatpush1.xpose.msra.mxu0 0.0
        %695 = vmatprep.subr.mxu0 0.0
        %696 = vmatpush1.xpose.msra.mxu0 0.0
        %697 = vmatprep.subr.mxu0 0.0
        %698 = vmatpush1.xpose.msra.mxu0 0.0
        %699 = vmatprep.subr.mxu0 0.0
        %700 = vmatpush1.xpose.msra.mxu0 0.0
        %701 = vmatprep.subr.mxu0 0.0
        %702 = vmatpush1.xpose.msra.mxu0 0.0
        %703 = vmatprep.subr.mxu0 0.0
        %704 = vmatpush1.xpose.msra.mxu0 0.0
        %705 = vmatprep.subr.mxu0 0.0
        %706 = vmatpush1.xpose.msra.mxu0 0.0
        %707 = vmatprep.subr.mxu0 0.0
        %708 = vmatpush1.xpose.msra.mxu0 0.0
        %709 = vmatprep.subr.mxu0 0.0
        %710 = vmatpush1.xpose.msra.mxu0 0.0
        %711 = vmatprep.subr.mxu0 0.0
        %712 = vmatpush1.xpose.msra.mxu0 0.0
        %713 = vmatprep.subr.mxu0 0.0
        %714 = vmatpush1.xpose.msra.mxu0 0.0
        %715 = vmatprep.subr.mxu0 0.0
        %716 = vmatpush1.xpose.msra.mxu0 0.0
        %717 = vmatprep.subr.mxu0 0.0
        %718 = vmatpush1.xpose.msra.mxu0 0.0
        %719 = vmatprep.subr.mxu0 0.0
        %720 = vmatpush1.xpose.msra.mxu0 0.0
        %721 = vmatprep.mubr.f32.mxu0 0.0
        %722 = vmatmul.mubr.f32.gmra.mrb[0].mxu0 %v652
        %v723 = vpop.f32.mrb[0].mxu0
        %v724 = vadd.f32 %v649, %v723
        %v725 = vpop.f32.mrb[0].mxu0
        %726 = vdwg.mxu0
        %vm727 = vcmask 64512
        %v728 = vsel %vm727, %v724, -inf
        %729 = vmax.xlane.f32.xlu0 %v728
        %v730 = vpop.xlane.xlu0 %729
        %v731 = vsub.f32 %v724, %v730
        %v732 = vmul.f32 %v731, 1.442695
        %v733 = vpow.pop %v732
        %v734 = vsel %vm727, %v733, 0.0
        %735 = vadd.xlane.f32.xlu0 %v734
        %v736 = vpop.xlane.xlu0 %735
        %v737 = vrcp.pop %v736
        %v738 = vmul.f32 %v733, %v737
        %v740 = vsel %vm727, %v738, 0
        %742 = vmatprep.subr.mxu0 0.0
        %743 = vmatpush1.msra.mxu0 %v630
        %744 = vmatprep.subr.mxu0 0.0
        %745 = vmatpush1.msra.mxu0 0.0
        %746 = vmatprep.subr.mxu0 0.0
        %747 = vmatpush1.msra.mxu0 0.0
        %748 = vmatprep.subr.mxu0 0.0
        %749 = vmatpush1.msra.mxu0 0.0
        %750 = vmatprep.subr.mxu0 0.0
        %751 = vmatpush1.msra.mxu0 0.0
        %752 = vmatprep.subr.mxu0 0.0
        %753 = vmatpush1.msra.mxu0 0.0
        %754 = vmatprep.subr.mxu0 0.0
        %755 = vmatpush1.msra.mxu0 0.0
        %756 = vmatprep.subr.mxu0 0.0
        %757 = vmatpush1.msra.mxu0 0.0
        %758 = vmatprep.subr.mxu0 0.0
        %759 = vmatpush1.msra.mxu0 0.0
        %760 = vmatprep.subr.mxu0 0.0
        %761 = vmatpush1.msra.mxu0 0.0
        %762 = vmatprep.subr.mxu0 0.0
        %763 = vmatpush1.msra.mxu0 0.0
        %764 = vmatprep.subr.mxu0 0.0
        %765 = vmatpush1.msra.mxu0 0.0
        %766 = vmatprep.subr.mxu0 0.0
        %767 = vmatpush1.msra.mxu0 0.0
        %768 = vmatprep.subr.mxu0 0.0
        %769 = vmatpush1.msra.mxu0 0.0
        %770 = vmatprep.subr.mxu0 0.0
        %771 = vmatpush1.msra.mxu0 0.0
        %772 = vmatprep.subr.mxu0 0.0
        %773 = vmatpush1.msra.mxu0 0.0
        %774 = vmatprep.subr.mxu0 0.0
        %775 = vmatpush1.msra.mxu0 0.0
        %776 = vmatprep.subr.mxu0 0.0
        %777 = vmatpush1.msra.mxu0 0.0
        %778 = vmatprep.subr.mxu0 0.0
        %779 = vmatpush1.msra.mxu0 0.0
        %780 = vmatprep.subr.mxu0 0.0
        %781 = vmatpush1.msra.mxu0 0.0
        %782 = vmatprep.subr.mxu0 0.0
        %783 = vmatpush1.msra.mxu0 0.0
        %784 = vmatprep.subr.mxu0 0.0
        %785 = vmatpush1.msra.mxu0 0.0
        %786 = vmatprep.subr.mxu0 0.0
        %787 = vmatpush1.msra.mxu0 0.0
        %788 = vmatprep.subr.mxu0 0.0
        %789 = vmatpush1.msra.mxu0 0.0
        %790 = vmatprep.subr.mxu0 0.0
        %791 = vmatpush1.msra.mxu0 0.0
        %792 = vmatprep.subr.mxu0 0.0
        %793 = vmatpush1.msra.mxu0 0.0
        %794 = vmatprep.subr.mxu0 0.0
        %795 = vmatpush1.msra.mxu0 0.0
        %796 = vmatprep.subr.mxu0 0.0
        %797 = vmatpush1.msra.mxu0 0.0
        %798 = vmatprep.subr.mxu0 0.0
        %799 = vmatpush1.msra.mxu0 0.0
        %800 = vmatprep.subr.mxu0 0.0
        %801 = vmatpush1.msra.mxu0 0.0
        %802 = vmatprep.subr.mxu0 0.0
        %803 = vmatpush1.msra.mxu0 0.0
        %804 = vmatprep.subr.mxu0 0.0
        %805 = vmatpush1.msra.mxu0 0.0
        %806 = vmatprep.mubr.f32.mxu0 0.0
        %807 = vmatmul.mubr.f32.gmra.mrb[0].mxu0 %v740
        %v808 = vpop.f32.mrb[0].mxu0
        %v809 = vadd.f32 0.0, %v808
        %v810 = vpop.f32.mrb[0].mxu0
        %811 = vdwg.mxu0
        %s812 = scalar_lea.vmem %s4, 8
        %v813 = vld [vmem:[%s812] sm:$0xff]
        %814 = vrot.lane.b32.xlu0 %v559, 64
        %v815 = vpop.permute.xlu0 %814
        %816 = vrot.lane.b32.xlu0 %v561, 64
        %v817 = vpop.permute.xlu0 %816
        %v818 = vsel %vm650, %v815, 0
        %v820 = vsel %vm650, %v817, 0
        %822 = vmatprep.subr.mxu0 0.0
        %823 = vmatpush1.xpose.msra.mxu0 %v820
        %824 = vmatprep.subr.mxu0 0.0
        %825 = vmatpush1.xpose.msra.mxu0 0.0
        %826 = vmatprep.subr.mxu0 0.0
        %827 = vmatpush1.xpose.msra.mxu0 0.0
        %828 = vmatprep.subr.mxu0 0.0
        %829 = vmatpush1.xpose.msra.mxu0 0.0
        %830 = vmatprep.subr.mxu0 0.0
        %831 = vmatpush1.xpose.msra.mxu0 0.0
        %832 = vmatprep.subr.mxu0 0.0
        %833 = vmatpush1.xpose.msra.mxu0 0.0
        %834 = vmatprep.subr.mxu0 0.0
        %835 = vmatpush1.xpose.msra.mxu0 0.0
        %836 = vmatprep.subr.mxu0 0.0
        %837 = vmatpush1.xpose.msra.mxu0 0.0
        %838 = vmatprep.subr.mxu0 0.0
        %839 = vmatpush1.xpose.msra.mxu0 0.0
        %840 = vmatprep.subr.mxu0 0.0
        %841 = vmatpush1.xpose.msra.mxu0 0.0
        %842 = vmatprep.subr.mxu0 0.0
        %843 = vmatpush1.xpose.msra.mxu0 0.0
        %844 = vmatprep.subr.mxu0 0.0
        %845 = vmatpush1.xpose.msra.mxu0 0.0
        %846 = vmatprep.subr.mxu0 0.0
        %847 = vmatpush1.xpose.msra.mxu0 0.0
        %848 = vmatprep.subr.mxu0 0.0
        %849 = vmatpush1.xpose.msra.mxu0 0.0
        %850 = vmatprep.subr.mxu0 0.0
        %851 = vmatpush1.xpose.msra.mxu0 0.0
        %852 = vmatprep.subr.mxu0 0.0
        %853 = vmatpush1.xpose.msra.mxu0 0.0
        %854 = vmatprep.subr.mxu0 0.0
        %855 = vmatpush1.xpose.msra.mxu0 0.0
        %856 = vmatprep.subr.mxu0 0.0
        %857 = vmatpush1.xpose.msra.mxu0 0.0
        %858 = vmatprep.subr.mxu0 0.0
        %859 = vmatpush1.xpose.msra.mxu0 0.0
        %860 = vmatprep.subr.mxu0 0.0
        %861 = vmatpush1.xpose.msra.mxu0 0.0
        %862 = vmatprep.subr.mxu0 0.0
        %863 = vmatpush1.xpose.msra.mxu0 0.0
        %864 = vmatprep.subr.mxu0 0.0
        %865 = vmatpush1.xpose.msra.mxu0 0.0
        %866 = vmatprep.subr.mxu0 0.0
        %867 = vmatpush1.xpose.msra.mxu0 0.0
        %868 = vmatprep.subr.mxu0 0.0
        %869 = vmatpush1.xpose.msra.mxu0 0.0
        %870 = vmatprep.subr.mxu0 0.0
        %871 = vmatpush1.xpose.msra.mxu0 0.0
        %872 = vmatprep.subr.mxu0 0.0
        %873 = vmatpush1.xpose.msra.mxu0 0.0
        %874 = vmatprep.subr.mxu0 0.0
        %875 = vmatpush1.xpose.msra.mxu0 0.0
        %876 = vmatprep.subr.mxu0 0.0
        %877 = vmatpush1.xpose.msra.mxu0 0.0
        %878 = vmatprep.subr.mxu0 0.0
        %879 = vmatpush1.xpose.msra.mxu0 0.0
        %880 = vmatprep.subr.mxu0 0.0
        %881 = vmatpush1.xpose.msra.mxu0 0.0
        %882 = vmatprep.subr.mxu0 0.0
        %883 = vmatpush1.xpose.msra.mxu0 0.0
        %884 = vmatprep.subr.mxu0 0.0
        %885 = vmatpush1.xpose.msra.mxu0 0.0
        %886 = vmatprep.mubr.f32.mxu0 0.0
        %887 = vmatmul.mubr.f32.gmra.mrb[0].mxu0 %v818
        %v888 = vpop.f32.mrb[0].mxu0
        %v889 = vadd.f32 %v813, %v888
        %v890 = vpop.f32.mrb[0].mxu0
        %891 = vdwg.mxu0
        %v892 = vsel %vm727, %v889, -inf
        %893 = vmax.xlane.f32.xlu0 %v892
        %v894 = vpop.xlane.xlu0 %893
        %v895 = vsub.f32 %v889, %v894
        %v896 = vmul.f32 %v895, 1.442695
        %v897 = vpow.pop %v896
        %v898 = vsel %vm727, %v897, 0.0
        %899 = vadd.xlane.f32.xlu0 %v898
        %v900 = vpop.xlane.xlu0 %899
        %v901 = vrcp.pop %v900
        %v902 = vmul.f32 %v897, %v901
        %904 = vrot.lane.b32.xlu0 %v630, 64
        %v905 = vpop.permute.xlu0 %904
        %v908 = vsel %vm727, %v902, 0
        %910 = vmatprep.subr.mxu0 0.0
        %911 = vmatpush1.msra.mxu0 %v905
        %912 = vmatprep.subr.mxu0 0.0
        %913 = vmatpush1.msra.mxu0 0.0
        %914 = vmatprep.subr.mxu0 0.0
        %915 = vmatpush1.msra.mxu0 0.0
        %916 = vmatprep.subr.mxu0 0.0
        %917 = vmatpush1.msra.mxu0 0.0
        %918 = vmatprep.subr.mxu0 0.0
        %919 = vmatpush1.msra.mxu0 0.0
        %920 = vmatprep.subr.mxu0 0.0
        %921 = vmatpush1.msra.mxu0 0.0
        %922 = vmatprep.subr.mxu0 0.0
        %923 = vmatpush1.msra.mxu0 0.0
        %924 = vmatprep.subr.mxu0 0.0
        %925 = vmatpush1.msra.mxu0 0.0
        %926 = vmatprep.subr.mxu0 0.0
        %927 = vmatpush1.msra.mxu0 0.0
        %928 = vmatprep.subr.mxu0 0.0
        %929 = vmatpush1.msra.mxu0 0.0
        %930 = vmatprep.subr.mxu0 0.0
        %931 = vmatpush1.msra.mxu0 0.0
        %932 = vmatprep.subr.mxu0 0.0
        %933 = vmatpush1.msra.mxu0 0.0
        %934 = vmatprep.subr.mxu0 0.0
        %935 = vmatpush1.msra.mxu0 0.0
        %936 = vmatprep.subr.mxu0 0.0
        %937 = vmatpush1.msra.mxu0 0.0
        %938 = vmatprep.subr.mxu0 0.0
        %939 = vmatpush1.msra.mxu0 0.0
        %940 = vmatprep.subr.mxu0 0.0
        %941 = vmatpush1.msra.mxu0 0.0
        %942 = vmatprep.subr.mxu0 0.0
        %943 = vmatpush1.msra.mxu0 0.0
        %944 = vmatprep.subr.mxu0 0.0
        %945 = vmatpush1.msra.mxu0 0.0
        %946 = vmatprep.subr.mxu0 0.0
        %947 = vmatpush1.msra.mxu0 0.0
        %948 = vmatprep.subr.mxu0 0.0
        %949 = vmatpush1.msra.mxu0 0.0
        %950 = vmatprep.subr.mxu0 0.0
        %951 = vmatpush1.msra.mxu0 0.0
        %952 = vmatprep.subr.mxu0 0.0
        %953 = vmatpush1.msra.mxu0 0.0
        %954 = vmatprep.subr.mxu0 0.0
        %955 = vmatpush1.msra.mxu0 0.0
        %956 = vmatprep.subr.mxu0 0.0
        %957 = vmatpush1.msra.mxu0 0.0
        %958 = vmatprep.subr.mxu0 0.0
        %959 = vmatpush1.msra.mxu0 0.0
        %960 = vmatprep.subr.mxu0 0.0
        %961 = vmatpush1.msra.mxu0 0.0
        %962 = vmatprep.subr.mxu0 0.0
        %963 = vmatpush1.msra.mxu0 0.0
        %964 = vmatprep.subr.mxu0 0.0
        %965 = vmatpush1.msra.mxu0 0.0
        %966 = vmatprep.subr.mxu0 0.0
        %967 = vmatpush1.msra.mxu0 0.0
        %968 = vmatprep.subr.mxu0 0.0
        %969 = vmatpush1.msra.mxu0 0.0
        %970 = vmatprep.subr.mxu0 0.0
        %971 = vmatpush1.msra.mxu0 0.0
        %972 = vmatprep.subr.mxu0 0.0
        %973 = vmatpush1.msra.mxu0 0.0
        %974 = vmatprep.mubr.f32.mxu0 0.0
        %975 = vmatmul.mubr.f32.gmra.mrb[0].mxu0 %v908
        %v976 = vpop.f32.mrb[0].mxu0
        %v977 = vadd.f32 0.0, %v976
        %v978 = vpop.f32.mrb[0].mxu0
        %979 = vdwg.mxu0
        %v981 = vsel %vm650, %v977, 0
        %983 = vmatprep.subr.mxu0 0.0
        %984 = vmatpush1.msra.mxu0 %v641
        %985 = vmatprep.subr.mxu0 0.0
        %986 = vmatpush1.msra.mxu0 %v642
        %987 = vmatprep.subr.mxu0 0.0
        %988 = vmatpush1.msra.mxu0 %v643
        %989 = vmatprep.subr.mxu0 0.0
        %990 = vmatpush1.msra.mxu0 %v644
        %991 = vmatprep.subr.mxu0 0.0
        %992 = vmatpush1.msra.mxu0 %v645
        %993 = vmatprep.subr.mxu0 0.0
        %994 = vmatpush1.msra.mxu0 %v646
        %995 = vmatprep.subr.mxu0 0.0
        %996 = vmatpush1.msra.mxu0 %v647
        %997 = vmatprep.subr.mxu0 0.0
        %998 = vmatpush1.msra.mxu0 %v648
        %999 = vmatprep.subr.mxu0 0.0
        %1000 = vmatpush1.msra.mxu0 0.0
        %1001 = vmatprep.subr.mxu0 0.0
        %1002 = vmatpush1.msra.mxu0 0.0
        %1003 = vmatprep.subr.mxu0 0.0
        %1004 = vmatpush1.msra.mxu0 0.0
        %1005 = vmatprep.subr.mxu0 0.0
        %1006 = vmatpush1.msra.mxu0 0.0
        %1007 = vmatprep.subr.mxu0 0.0
        %1008 = vmatpush1.msra.mxu0 0.0
        %1009 = vmatprep.subr.mxu0 0.0
        %1010 = vmatpush1.msra.mxu0 0.0
        %1011 = vmatprep.subr.mxu0 0.0
        %1012 = vmatpush1.msra.mxu0 0.0
        %1013 = vmatprep.subr.mxu0 0.0
        %1014 = vmatpush1.msra.mxu0 0.0
        %1015 = vmatprep.subr.mxu0 0.0
        %1016 = vmatpush1.msra.mxu0 0.0
        %1017 = vmatprep.subr.mxu0 0.0
        %1018 = vmatpush1.msra.mxu0 0.0
        %1019 = vmatprep.subr.mxu0 0.0
        %1020 = vmatpush1.msra.mxu0 0.0
        %1021 = vmatprep.subr.mxu0 0.0
        %1022 = vmatpush1.msra.mxu0 0.0
        %1023 = vmatprep.subr.mxu0 0.0
        %1024 = vmatpush1.msra.mxu0 0.0
        %1025 = vmatprep.subr.mxu0 0.0
        %1026 = vmatpush1.msra.mxu0 0.0
        %1027 = vmatprep.subr.mxu0 0.0
        %1028 = vmatpush1.msra.mxu0 0.0
        %1029 = vmatprep.subr.mxu0 0.0
        %1030 = vmatpush1.msra.mxu0 0.0
        %1031 = vmatprep.subr.mxu0 0.0
        %1032 = vmatpush1.msra.mxu0 0.0
        %1033 = vmatprep.subr.mxu0 0.0
        %1034 = vmatpush1.msra.mxu0 0.0
        %1035 = vmatprep.subr.mxu0 0.0
        %1036 = vmatpush1.msra.mxu0 0.0
        %1037 = vmatprep.subr.mxu0 0.0
        %1038 = vmatpush1.msra.mxu0 0.0
        %1039 = vmatprep.subr.mxu0 0.0
        %1040 = vmatpush1.msra.mxu0 0.0
        %1041 = vmatprep.subr.mxu0 0.0
        %1042 = vmatpush1.msra.mxu0 0.0
        %1043 = vmatprep.subr.mxu0 0.0
        %1044 = vmatpush1.msra.mxu0 0.0
        %1045 = vmatprep.subr.mxu0 0.0
        %1046 = vmatpush1.msra.mxu0 0.0
        %1047 = vmatprep.mubr.f32.mxu0 0.0
        %1048 = vmatmul.mubr.f32.gmra.mrb[0].mxu0 %v981
        %v1049 = vpop.f32.mrb[0].mxu0
        %v1050 = vadd.f32 0.0, %v1049
        %v1051 = vpop.f32.mrb[0].mxu0
        %1052 = vdwg.mxu0
        %v1054 = vsel %vm650, %v809, 0
        %1056 = vmatprep.subr.mxu0 0.0
        %1057 = vmatpush1.msra.mxu0 %v633
        %1058 = vmatprep.subr.mxu0 0.0
        %1059 = vmatpush1.msra.mxu0 %v634
        %1060 = vmatprep.subr.mxu0 0.0
        %1061 = vmatpush1.msra.mxu0 %v635
        %1062 = vmatprep.subr.mxu0 0.0
        %1063 = vmatpush1.msra.mxu0 %v636
        %1064 = vmatprep.subr.mxu0 0.0
        %1065 = vmatpush1.msra.mxu0 %v637
        %1066 = vmatprep.subr.mxu0 0.0
        %1067 = vmatpush1.msra.mxu0 %v638
        %1068 = vmatprep.subr.mxu0 0.0
        %1069 = vmatpush1.msra.mxu0 %v639
        %1070 = vmatprep.subr.mxu0 0.0
        %1071 = vmatpush1.msra.mxu0 %v640
        %1072 = vmatprep.subr.mxu0 0.0
        %1073 = vmatpush1.msra.mxu0 0.0
        %1074 = vmatprep.subr.mxu0 0.0
        %1075 = vmatpush1.msra.mxu0 0.0
        %1076 = vmatprep.subr.mxu0 0.0
        %1077 = vmatpush1.msra.mxu0 0.0
        %1078 = vmatprep.subr.mxu0 0.0
        %1079 = vmatpush1.msra.mxu0 0.0
        %1080 = vmatprep.subr.mxu0 0.0
        %1081 = vmatpush1.msra.mxu0 0.0
        %1082 = vmatprep.subr.mxu0 0.0
        %1083 = vmatpush1.msra.mxu0 0.0
        %1084 = vmatprep.subr.mxu0 0.0
        %1085 = vmatpush1.msra.mxu0 0.0
        %1086 = vmatprep.subr.mxu0 0.0
        %1087 = vmatpush1.msra.mxu0 0.0
        %1088 = vmatprep.subr.mxu0 0.0
        %1089 = vmatpush1.msra.mxu0 0.0
        %1090 = vmatprep.subr.mxu0 0.0
        %1091 = vmatpush1.msra.mxu0 0.0
        %1092 = vmatprep.subr.mxu0 0.0
        %1093 = vmatpush1.msra.mxu0 0.0
        %1094 = vmatprep.subr.mxu0 0.0
        %1095 = vmatpush1.msra.mxu0 0.0
        %1096 = vmatprep.subr.mxu0 0.0
        %1097 = vmatpush1.msra.mxu0 0.0
        %1098 = vmatprep.subr.mxu0 0.0
        %1099 = vmatpush1.msra.mxu0 0.0
        %1100 = vmatprep.subr.mxu0 0.0
        %1101 = vmatpush1.msra.mxu0 0.0
        %1102 = vmatprep.subr.mxu0 0.0
        %1103 = vmatpush1.msra.mxu0 0.0
        %1104 = vmatprep.subr.mxu0 0.0
        %1105 = vmatpush1.msra.mxu0 0.0
        %1106 = vmatprep.subr.mxu0 0.0
        %1107 = vmatpush1.msra.mxu0 0.0
        %1108 = vmatprep.subr.mxu0 0.0
        %1109 = vmatpush1.msra.mxu0 0.0
        %1110 = vmatprep.subr.mxu0 0.0
        %1111 = vmatpush1.msra.mxu0 0.0
        %1112 = vmatprep.subr.mxu0 0.0
        %1113 = vmatpush1.msra.mxu0 0.0
        %1114 = vmatprep.subr.mxu0 0.0
        %1115 = vmatpush1.msra.mxu0 0.0
        %1116 = vmatprep.subr.mxu0 0.0
        %1117 = vmatpush1.msra.mxu0 0.0
        %1118 = vmatprep.subr.mxu0 0.0
        %1119 = vmatpush1.msra.mxu0 0.0
        %1120 = vmatprep.mubr.f32.mxu0 0.0
        %1121 = vmatmul.mubr.f32.gmra.mrb[0].mxu0 %v1054
        %v1122 = vpop.f32.mrb[0].mxu0
        %v1123 = vadd.f32 %v1050, %v1122
        %v1124 = vpop.f32.mrb[0].mxu0
        %1125 = vdwg.mxu0
        %v1126 = vadd.f32 %v427, %v1123
        %v1127 = vmul.f32 %v1126, %v1126
        %1128 = vadd.xlane.f32.xlu0 %v1127
        %v1129 = vpop.xlane.xlu0 %1128
        %v1130 = vmul.f32 %v1129, %v431
        %v1131 = vadd.f32 %v1130, 1e-06
        %v1132 = vrsqrt.pop %v1131
        %v1133 = vmul.f32 %v1126, %v1132
        %v1134 = vld [vmem:[%s410] sm:$0x1]
        %v1136 = vlaneseq
        %v1137 = vshrl.u32 %v1136, 7
        %v1138 = vsub.s32 0, %v1137
        %v1139 = vrot.slane %v1134, %v1138
        %v1141 = vmul.f32 %v1133, %v1139
        %v1142 = vld [vmem:[%s415] sm:$0xff]
        %v1143 = vld [vmem:[%s415 + $0x8] sm:$0xff]
        %v1144 = vld [vmem:[%s415 + $0x10] sm:$0xff]
        %v1145 = vld [vmem:[%s415 + $0x18] sm:$0xff]
        %v1146 = vld [vmem:[%s415 + $0x20] sm:$0xff]
        %v1147 = vld [vmem:[%s415 + $0x28] sm:$0xff]
        %v1148 = vld [vmem:[%s415 + $0x30] sm:$0xff]
        %v1149 = vld [vmem:[%s415 + $0x38] sm:$0xff]
        %v1150 = vld [vmem:[%s415 + $0x40] sm:$0xff]
        %v1151 = vld [vmem:[%s415 + $0x48] sm:$0xff]
        %v1152 = vld [vmem:[%s415 + $0x50] sm:$0xff]
        %v1153 = vld [vmem:[%s415 + $0x58] sm:$0xff]
        %v1154 = vld [vmem:[%s415 + $0x60] sm:$0xff]
        %v1155 = vld [vmem:[%s415 + $0x68] sm:$0xff]
        %v1156 = vld [vmem:[%s415 + $0x70] sm:$0xff]
        %v1157 = vld [vmem:[%s415 + $0x78] sm:$0xff]
        %v1158 = vld [vmem:[%s415 + $0x80] sm:$0xff]
        %v1159 = vld [vmem:[%s415 + $0x88] sm:$0xff]
        %v1160 = vld [vmem:[%s415 + $0x90] sm:$0xff]
        %v1161 = vld [vmem:[%s415 + $0x98] sm:$0xff]
        %v1162 = vld [vmem:[%s415 + $0xa0] sm:$0xff]
        %v1163 = vld [vmem:[%s415 + $0xa8] sm:$0xff]
        %v1164 = vld [vmem:[%s415 + $0xb0] sm:$0xff]
        %v1165 = vld [vmem:[%s415 + $0xb8] sm:$0xff]
        %v1166 = vld [vmem:[%s415 + $0xc0] sm:$0xff]
        %v1167 = vld [vmem:[%s415 + $0xc8] sm:$0xff]
        %v1168 = vld [vmem:[%s415 + $0xd0] sm:$0xff]
        %v1169 = vld [vmem:[%s415 + $0xd8] sm:$0xff]
        %v1170 = vld [vmem:[%s415 + $0xe0] sm:$0xff]
        %v1171 = vld [vmem:[%s415 + $0xe8] sm:$0xff]
        %v1172 = vld [vmem:[%s415 + $0xf0] sm:$0xff]
        %v1173 = vld [vmem:[%s415 + $0xf8] sm:$0xff]
        %v1174 = vld [vmem:[%s415 + $0x100] sm:$0xff]
        %v1175 = vld [vmem:[%s415 + $0x108] sm:$0xff]
        %v1176 = vld [vmem:[%s415 + $0x110] sm:$0xff]
        %v1177 = vld [vmem:[%s415 + $0x118] sm:$0xff]
        %v1178 = vld [vmem:[%s415 + $0x120] sm:$0xff]
        %v1179 = vld [vmem:[%s415 + $0x128] sm:$0xff]
        %v1180 = vld [vmem:[%s415 + $0x130] sm:$0xff]
        %v1181 = vld [vmem:[%s415 + $0x138] sm:$0xff]
        %v1182 = vld [vmem:[%s415 + $0x140] sm:$0xff]
        %v1183 = vld [vmem:[%s415 + $0x148] sm:$0xff]
        %v1184 = vld [vmem:[%s415 + $0x150] sm:$0xff]
        %v1185 = vld [vmem:[%s415 + $0x158] sm:$0xff]
        %v1186 = vld [vmem:[%s415 + $0x160] sm:$0xff]
        %v1187 = vld [vmem:[%s415 + $0x168] sm:$0xff]
        %v1188 = vld [vmem:[%s415 + $0x170] sm:$0xff]
        %v1189 = vld [vmem:[%s415 + $0x178] sm:$0xff]
        %v1190 = vld [vmem:[%s415 + $0x180] sm:$0xff]
        %v1191 = vld [vmem:[%s415 + $0x188] sm:$0xff]
        %v1192 = vld [vmem:[%s415 + $0x190] sm:$0xff]
        %v1193 = vld [vmem:[%s415 + $0x198] sm:$0xff]
        %v1194 = vld [vmem:[%s415 + $0x1a0] sm:$0xff]
        %v1195 = vld [vmem:[%s415 + $0x1a8] sm:$0xff]
        %v1196 = vld [vmem:[%s415 + $0x1b0] sm:$0xff]
        %v1197 = vld [vmem:[%s415 + $0x1b8] sm:$0xff]
        %v1198 = vld [vmem:[%s415 + $0x1c0] sm:$0xff]
        %v1199 = vld [vmem:[%s415 + $0x1c8] sm:$0xff]
        %v1200 = vld [vmem:[%s415 + $0x1d0] sm:$0xff]
        %v1201 = vld [vmem:[%s415 + $0x1d8] sm:$0xff]
        %v1202 = vld [vmem:[%s415 + $0x1e0] sm:$0xff]
        %v1203 = vld [vmem:[%s415 + $0x1e8] sm:$0xff]
        %v1204 = vld [vmem:[%s415 + $0x1f0] sm:$0xff]
        %v1205 = vld [vmem:[%s415 + $0x1f8] sm:$0xff]
        %1206 = vmatprep.subr.mxu0 %v1143
        %1207 = vmatpush1.msra.mxu0 %v1142
        %1208 = vmatprep.subr.mxu0 %v1147
        %1209 = vmatpush1.msra.mxu0 %v1146
        %1210 = vmatprep.subr.mxu0 %v1151
        %1211 = vmatpush1.msra.mxu0 %v1150
        %1212 = vmatprep.subr.mxu0 %v1155
        %1213 = vmatpush1.msra.mxu0 %v1154
        %1214 = vmatprep.subr.mxu0 %v1159
        %1215 = vmatpush1.msra.mxu0 %v1158
        %1216 = vmatprep.subr.mxu0 %v1163
        %1217 = vmatpush1.msra.mxu0 %v1162
        %1218 = vmatprep.subr.mxu0 %v1167
        %1219 = vmatpush1.msra.mxu0 %v1166
        %1220 = vmatprep.subr.mxu0 %v1171
        %1221 = vmatpush1.msra.mxu0 %v1170
        %1222 = vmatprep.subr.mxu0 %v1175
        %1223 = vmatpush1.msra.mxu0 %v1174
        %1224 = vmatprep.subr.mxu0 %v1179
        %1225 = vmatpush1.msra.mxu0 %v1178
        %1226 = vmatprep.subr.mxu0 %v1183
        %1227 = vmatpush1.msra.mxu0 %v1182
        %1228 = vmatprep.subr.mxu0 %v1187
        %1229 = vmatpush1.msra.mxu0 %v1186
        %1230 = vmatprep.subr.mxu0 %v1191
        %1231 = vmatpush1.msra.mxu0 %v1190
        %1232 = vmatprep.subr.mxu0 %v1195
        %1233 = vmatpush1.msra.mxu0 %v1194
        %1234 = vmatprep.subr.mxu0 %v1199
        %1235 = vmatpush1.msra.mxu0 %v1198
        %1236 = vmatprep.subr.mxu0 %v1203
        %1237 = vmatpush1.msra.mxu0 %v1202
        %1238 = vmatprep.subr.mxu0 0.0
        %1239 = vmatpush1.msra.mxu0 0.0
        %1240 = vmatprep.subr.mxu0 0.0
        %1241 = vmatpush1.msra.mxu0 0.0
        %1242 = vmatprep.subr.mxu0 0.0
        %1243 = vmatpush1.msra.mxu0 0.0
        %1244 = vmatprep.subr.mxu0 0.0
        %1245 = vmatpush1.msra.mxu0 0.0
        %1246 = vmatprep.subr.mxu0 0.0
        %1247 = vmatpush1.msra.mxu0 0.0
        %1248 = vmatprep.subr.mxu0 0.0
        %1249 = vmatpush1.msra.mxu0 0.0
        %1250 = vmatprep.subr.mxu0 0.0
        %1251 = vmatpush1.msra.mxu0 0.0
        %1252 = vmatprep.subr.mxu0 0.0
        %1253 = vmatpush1.msra.mxu0 0.0
        %1254 = vmatprep.subr.mxu0 0.0
        %1255 = vmatpush1.msra.mxu0 0.0
        %1256 = vmatprep.subr.mxu0 0.0
        %1257 = vmatpush1.msra.mxu0 0.0
        %1258 = vmatprep.subr.mxu0 0.0
        %1259 = vmatpush1.msra.mxu0 0.0
        %1260 = vmatprep.subr.mxu0 0.0
        %1261 = vmatpush1.msra.mxu0 0.0
        %1262 = vmatprep.subr.mxu0 0.0
        %1263 = vmatpush1.msra.mxu0 0.0
        %1264 = vmatprep.subr.mxu0 0.0
        %1265 = vmatpush1.msra.mxu0 0.0
        %1266 = vmatprep.subr.mxu0 0.0
        %1267 = vmatpush1.msra.mxu0 0.0
        %1268 = vmatprep.subr.mxu0 0.0
        %1269 = vmatpush1.msra.mxu0 0.0
        %1270 = vmatprep.mubr.f32.mxu0 0.0
        %1271 = vmatmul.mubr.f32.gmra.mrb[0].mxu0 %v1141
        %v1272 = vpop.f32.mrb[0].mxu0
        %v1273 = vadd.f32 0.0, %v1272
        %v1274 = vpop.f32.mrb[0].mxu0
        %v1275 = vadd.f32 0.0, %v1274
        %1276 = vdwg.mxu0
        %1277 = vmatprep.subr.mxu0 %v1145
        %1278 = vmatpush1.msra.mxu0 %v1144
        %1279 = vmatprep.subr.mxu0 %v1149
        %1280 = vmatpush1.msra.mxu0 %v1148
        %1281 = vmatprep.subr.mxu0 %v1153
        %1282 = vmatpush1.msra.mxu0 %v1152
        %1283 = vmatprep.subr.mxu0 %v1157
        %1284 = vmatpush1.msra.mxu0 %v1156
        %1285 = vmatprep.subr.mxu0 %v1161
        %1286 = vmatpush1.msra.mxu0 %v1160
        %1287 = vmatprep.subr.mxu0 %v1165
        %1288 = vmatpush1.msra.mxu0 %v1164
        %1289 = vmatprep.subr.mxu0 %v1169
        %1290 = vmatpush1.msra.mxu0 %v1168
        %1291 = vmatprep.subr.mxu0 %v1173
        %1292 = vmatpush1.msra.mxu0 %v1172
        %1293 = vmatprep.subr.mxu0 %v1177
        %1294 = vmatpush1.msra.mxu0 %v1176
        %1295 = vmatprep.subr.mxu0 %v1181
        %1296 = vmatpush1.msra.mxu0 %v1180
        %1297 = vmatprep.subr.mxu0 %v1185
        %1298 = vmatpush1.msra.mxu0 %v1184
        %1299 = vmatprep.subr.mxu0 %v1189
        %1300 = vmatpush1.msra.mxu0 %v1188
        %1301 = vmatprep.subr.mxu0 %v1193
        %1302 = vmatpush1.msra.mxu0 %v1192
        %1303 = vmatprep.subr.mxu0 %v1197
        %1304 = vmatpush1.msra.mxu0 %v1196
        %1305 = vmatprep.subr.mxu0 %v1201
        %1306 = vmatpush1.msra.mxu0 %v1200
        %1307 = vmatprep.subr.mxu0 %v1205
        %1308 = vmatpush1.msra.mxu0 %v1204
        %1309 = vmatprep.subr.mxu0 0.0
        %1310 = vmatpush1.msra.mxu0 0.0
        %1311 = vmatprep.subr.mxu0 0.0
        %1312 = vmatpush1.msra.mxu0 0.0
        %1313 = vmatprep.subr.mxu0 0.0
        %1314 = vmatpush1.msra.mxu0 0.0
        %1315 = vmatprep.subr.mxu0 0.0
        %1316 = vmatpush1.msra.mxu0 0.0
        %1317 = vmatprep.subr.mxu0 0.0
        %1318 = vmatpush1.msra.mxu0 0.0
        %1319 = vmatprep.subr.mxu0 0.0
        %1320 = vmatpush1.msra.mxu0 0.0
        %1321 = vmatprep.subr.mxu0 0.0
        %1322 = vmatpush1.msra.mxu0 0.0
        %1323 = vmatprep.subr.mxu0 0.0
        %1324 = vmatpush1.msra.mxu0 0.0
        %1325 = vmatprep.subr.mxu0 0.0
        %1326 = vmatpush1.msra.mxu0 0.0
        %1327 = vmatprep.subr.mxu0 0.0
        %1328 = vmatpush1.msra.mxu0 0.0
        %1329 = vmatprep.subr.mxu0 0.0
        %1330 = vmatpush1.msra.mxu0 0.0
        %1331 = vmatprep.subr.mxu0 0.0
        %1332 = vmatpush1.msra.mxu0 0.0
        %1333 = vmatprep.subr.mxu0 0.0
        %1334 = vmatpush1.msra.mxu0 0.0
        %1335 = vmatprep.subr.mxu0 0.0
        %1336 = vmatpush1.msra.mxu0 0.0
        %1337 = vmatprep.subr.mxu0 0.0
        %1338 = vmatpush1.msra.mxu0 0.0
        %1339 = vmatprep.subr.mxu0 0.0
        %1340 = vmatpush1.msra.mxu0 0.0
        %1341 = vmatprep.mubr.f32.mxu0 0.0
        %1342 = vmatmul.mubr.f32.gmra.mrb[0].mxu0 %v1141
        %v1343 = vpop.f32.mrb[0].mxu0
        %v1344 = vadd.f32 0.0, %v1343
        %v1345 = vpop.f32.mrb[0].mxu0
        %v1346 = vadd.f32 0.0, %v1345
        %1347 = vdwg.mxu0
        %v1348 = vmul.f32 %v1344, %v1344
        %v1349 = vmul.f32 %v1346, %v1346
        %v1350 = vmul.f32 %v1344, %v1348
        %v1351 = vmul.f32 %v1346, %v1349
        %v1352 = vmul.f32 %v1350, 0.044715
        %v1353 = vmul.f32 %v1351, 0.044715
        %v1354 = vadd.f32 %v1344, %v1352
        %v1355 = vadd.f32 %v1346, %v1353
        %v1356 = vmul.f32 %v1354, 0.7978846
        %v1357 = vmul.f32 %v1355, 0.7978846
        %v1358 = vtanh.pop %v1356
        %v1359 = vtanh.pop %v1357
        %v1360 = vadd.f32 %v1358, 1.0
        %v1361 = vadd.f32 %v1359, 1.0
        %v1362 = vmul.f32 %v1360, 0.5
        %v1363 = vmul.f32 %v1361, 0.5
        %v1364 = vmul.f32 %v1344, %v1362
        %v1365 = vmul.f32 %v1346, %v1363
        %v1366 = vmul.f32 %v1273, %v1364
        %v1367 = vmul.f32 %v1275, %v1365
        %v1368 = vld [vmem:[%s420] sm:$0xff]
        %v1369 = vld [vmem:[%s420 + $0x8] sm:$0xff]
        %v1370 = vld [vmem:[%s420 + $0x10] sm:$0xff]
        %v1371 = vld [vmem:[%s420 + $0x18] sm:$0xff]
        %v1372 = vld [vmem:[%s420 + $0x20] sm:$0xff]
        %v1373 = vld [vmem:[%s420 + $0x28] sm:$0xff]
        %v1374 = vld [vmem:[%s420 + $0x30] sm:$0xff]
        %v1375 = vld [vmem:[%s420 + $0x38] sm:$0xff]
        %v1376 = vld [vmem:[%s420 + $0x40] sm:$0xff]
        %v1377 = vld [vmem:[%s420 + $0x48] sm:$0xff]
        %v1378 = vld [vmem:[%s420 + $0x50] sm:$0xff]
        %v1379 = vld [vmem:[%s420 + $0x58] sm:$0xff]
        %v1380 = vld [vmem:[%s420 + $0x60] sm:$0xff]
        %v1381 = vld [vmem:[%s420 + $0x68] sm:$0xff]
        %v1382 = vld [vmem:[%s420 + $0x70] sm:$0xff]
        %v1383 = vld [vmem:[%s420 + $0x78] sm:$0xff]
        %v1384 = vld [vmem:[%s420 + $0x80] sm:$0xff]
        %v1385 = vld [vmem:[%s420 + $0x88] sm:$0xff]
        %v1386 = vld [vmem:[%s420 + $0x90] sm:$0xff]
        %v1387 = vld [vmem:[%s420 + $0x98] sm:$0xff]
        %v1388 = vld [vmem:[%s420 + $0xa0] sm:$0xff]
        %v1389 = vld [vmem:[%s420 + $0xa8] sm:$0xff]
        %v1390 = vld [vmem:[%s420 + $0xb0] sm:$0xff]
        %v1391 = vld [vmem:[%s420 + $0xb8] sm:$0xff]
        %v1392 = vld [vmem:[%s420 + $0xc0] sm:$0xff]
        %v1393 = vld [vmem:[%s420 + $0xc8] sm:$0xff]
        %v1394 = vld [vmem:[%s420 + $0xd0] sm:$0xff]
        %v1395 = vld [vmem:[%s420 + $0xd8] sm:$0xff]
        %v1396 = vld [vmem:[%s420 + $0xe0] sm:$0xff]
        %v1397 = vld [vmem:[%s420 + $0xe8] sm:$0xff]
        %v1398 = vld [vmem:[%s420 + $0xf0] sm:$0xff]
        %v1399 = vld [vmem:[%s420 + $0xf8] sm:$0xff]
        %1400 = vmatprep.subr.mxu0 0.0
        %1401 = vmatpush1.msra.mxu0 %v1368
        %1402 = vmatprep.subr.mxu0 0.0
        %1403 = vmatpush1.msra.mxu0 %v1369
        %1404 = vmatprep.subr.mxu0 0.0
        %1405 = vmatpush1.msra.mxu0 %v1370
        %1406 = vmatprep.subr.mxu0 0.0
        %1407 = vmatpush1.msra.mxu0 %v1371
        %1408 = vmatprep.subr.mxu0 0.0
        %1409 = vmatpush1.msra.mxu0 %v1372
        %1410 = vmatprep.subr.mxu0 0.0
        %1411 = vmatpush1.msra.mxu0 %v1373
        %1412 = vmatprep.subr.mxu0 0.0
        %1413 = vmatpush1.msra.mxu0 %v1374
        %1414 = vmatprep.subr.mxu0 0.0
        %1415 = vmatpush1.msra.mxu0 %v1375
        %1416 = vmatprep.subr.mxu0 0.0
        %1417 = vmatpush1.msra.mxu0 %v1376
        %1418 = vmatprep.subr.mxu0 0.0
        %1419 = vmatpush1.msra.mxu0 %v1377
        %1420 = vmatprep.subr.mxu0 0.0
        %1421 = vmatpush1.msra.mxu0 %v1378
        %1422 = vmatprep.subr.mxu0 0.0
        %1423 = vmatpush1.msra.mxu0 %v1379
        %1424 = vmatprep.subr.mxu0 0.0
        %1425 = vmatpush1.msra.mxu0 %v1380
        %1426 = vmatprep.subr.mxu0 0.0
        %1427 = vmatpush1.msra.mxu0 %v1381
        %1428 = vmatprep.subr.mxu0 0.0
        %1429 = vmatpush1.msra.mxu0 %v1382
        %1430 = vmatprep.subr.mxu0 0.0
        %1431 = vmatpush1.msra.mxu0 %v1383
        %1432 = vmatprep.subr.mxu0 0.0
        %1433 = vmatpush1.msra.mxu0 %v1384
        %1434 = vmatprep.subr.mxu0 0.0
        %1435 = vmatpush1.msra.mxu0 %v1385
        %1436 = vmatprep.subr.mxu0 0.0
        %1437 = vmatpush1.msra.mxu0 %v1386
        %1438 = vmatprep.subr.mxu0 0.0
        %1439 = vmatpush1.msra.mxu0 %v1387
        %1440 = vmatprep.subr.mxu0 0.0
        %1441 = vmatpush1.msra.mxu0 %v1388
        %1442 = vmatprep.subr.mxu0 0.0
        %1443 = vmatpush1.msra.mxu0 %v1389
        %1444 = vmatprep.subr.mxu0 0.0
        %1445 = vmatpush1.msra.mxu0 %v1390
        %1446 = vmatprep.subr.mxu0 0.0
        %1447 = vmatpush1.msra.mxu0 %v1391
        %1448 = vmatprep.subr.mxu0 0.0
        %1449 = vmatpush1.msra.mxu0 %v1392
        %1450 = vmatprep.subr.mxu0 0.0
        %1451 = vmatpush1.msra.mxu0 %v1393
        %1452 = vmatprep.subr.mxu0 0.0
        %1453 = vmatpush1.msra.mxu0 %v1394
        %1454 = vmatprep.subr.mxu0 0.0
        %1455 = vmatpush1.msra.mxu0 %v1395
        %1456 = vmatprep.subr.mxu0 0.0
        %1457 = vmatpush1.msra.mxu0 %v1396
        %1458 = vmatprep.subr.mxu0 0.0
        %1459 = vmatpush1.msra.mxu0 %v1397
        %1460 = vmatprep.subr.mxu0 0.0
        %1461 = vmatpush1.msra.mxu0 %v1398
        %1462 = vmatprep.subr.mxu0 0.0
        %1463 = vmatpush1.msra.mxu0 %v1399
        %1464 = vmatprep.mubr.f32.mxu0 %v1367
        %1465 = vmatmul.mubr.f32.gmra.mrb[0].mxu0 %v1366
        %v1466 = vpop.f32.mrb[0].mxu0
        %v1467 = vadd.f32 0.0, %v1466
        %v1468 = vpop.f32.mrb[0].mxu0
        %1469 = vdwg.mxu0
        %v1470 = vadd.f32 %v1126, %v1467
        %1471 = vst [vmem:[%s390] sm:$0xff] %v1470
        %s1472 = sand.u32 %s245, 1
        %s1473 = scalar_lea.sflag [#allocation3], %s1472
        %s1474 = sand.u32 %s245, 1
        %s1475 = smul.addr %s1474, 8
        %s1476 = scalar_lea.vmem [#allocation2], %s1475
        // Predicated region
        $region57: #{vampnet_forward.3} parent=51 // pred_check
          %p1477 = pneg %p255
        $region58: #{vampnet_forward.3} parent=51 // pred_check_branch
          %1479 = sbr.rel (%p1477) target = $region60
        $region59: #{vampnet_forward.3} parent=51 // pred_region
          %s1481 = ssub.s32 128, 128
          %1482 = vsyncadd %s1473, %s1481
          %s1483 = smul.addr %s26, 128
          %s1484 = scalar_lea.hbm %s8, %s1483
          %s1486 = sshll.u32 %s1476, 4
          %s1487 = int_to_ptr.vmem [resolvable:$true] %s1486
          %1489 = dma.vmem_to_hbm [thread:$0]  %s1487, 128, %s1484, %s1473
        $region60: #{vampnet_forward.3} parent=51 // pred_fallthru
          _
      $region52: #{vampnet_forward.3} parent=5 // pred_fallthru
        _
      %p1490 = scmp.le.s32.totalorder 2, %s17
      // Predicated region
      $region61: #{vampnet_forward.3} parent=5 // pred_check
        %p1491 = pneg %p1490
      $region62: #{vampnet_forward.3} parent=5 // pred_check_branch
        %1493 = sbr.rel (%p1491) target = $region64
      $region63: #{vampnet_forward.3} parent=5 // pred_region
        %s1494 = ssub.s32 %s17, 2
        // Predicated region
        $region65: #{vampnet_forward.3} parent=63 // pred_check
          %p1495 = pneg %p261
        $region66: #{vampnet_forward.3} parent=63 // pred_check_branch
          %1497 = sbr.rel (%p1495) target = $region68
        $region67: #{vampnet_forward.3} parent=63 // pred_region
          %s1498 = sand.u32 %s246, 1
          %s1499 = scalar_lea.sflag [#allocation3], %s1498
          %s1500 = sand.u32 %s246, 1
          %s1501 = smul.addr %s1500, 8
          %s1502 = scalar_lea.vmem [#allocation2], %s1501
          %1503 = dma.done %s1499, 128
        $region68: #{vampnet_forward.3} parent=63 // pred_fallthru
          _
      $region64: #{vampnet_forward.3} parent=5 // pred_fallthru
        _
    $region6: #{vampnet_forward.3} parent=1 // loop_footer
      %s21 = sadd.s32 1, %s17
    $region7: #{vampnet_forward.3} parent=1 // loop_footer_branch
      %16 = sbr.rel target = $region3
    $region8: #{vampnet_forward.3} parent=1 // loop_exit
      _
    %1504 = vsyncpa [#allocation3], 1
    %s1505 = scalar_lea.sflag [#allocation3], 1
    %1506 = vsyncpa %s1505, 1

// kernel: vampnet_forward.2
$region0: #{vampnet_forward.2}
  #allocation0 [shape = 'u32[]', space=smem, size = 0x4, offset = 0x4, fixed_abs, tag = 'smem constant byte address 0x4 - core index']
  #allocation1 [shape = 'u32[144,128]{1,0:T(1,128)}', space=vmem, size = 0x12000, scoped, tag = 'internal scratch']
  %s0 = inlined_call_operand.vmem [shape: f32[16,256], index: 0, kind: input, shape index: {}]
  %s1 = inlined_call_operand.vmem [shape: f32[256,64], index: 1, kind: input, shape index: {}]
  %s2 = inlined_call_operand.vmem [shape: f32[1,64], index: 2, kind: input, shape index: {}]
  %s3 = inlined_call_operand.vmem [shape: f32[4,8,128], index: 3, kind: input, shape index: {}]
  %s4 = inlined_call_operand.vmem [shape: f32[4,128,8], index: 4, kind: input, shape index: {}]
  %s5 = inlined_call_operand.vmem [shape: f32[32,128], index: 5, kind: input, shape index: {}]
  %s6 = inlined_call_operand.vmem [shape: f32[1,128], index: 6, kind: input, shape index: {}]
  %s7 = inlined_call_operand.vmem [shape: f32[16,128], index: 7, kind: output, shape index: {}]
  %s8 = sld [smem:[#allocation0]]
  $region38: #{vampnet_forward.2} parent=0
    _
  %s10 = ssub.s32 1, %s8
  %s11 = scalar_select 0, %s10, %s8
  // Predicated region
  $region2: #{vampnet_forward.2} parent=0 // pred_check
    _
  $region3: #{vampnet_forward.2} parent=0 // pred_check_branch
    %13 = sbr.rel (0) target = $region5
  $region4: #{vampnet_forward.2} parent=0 // pred_region
    _
  $region5: #{vampnet_forward.2} parent=0 // pred_fallthru
    _
  // Predicated region
  $region6: #{vampnet_forward.2} parent=0 // pred_check
    _
  $region7: #{vampnet_forward.2} parent=0 // pred_check_branch
    %15 = sbr.rel (0) target = $region9
  $region8: #{vampnet_forward.2} parent=0 // pred_region
    _
  $region9: #{vampnet_forward.2} parent=0 // pred_fallthru
    _
  // Predicated region
  $region10: #{vampnet_forward.2} parent=0 // pred_check
    _
  $region11: #{vampnet_forward.2} parent=0 // pred_check_branch
    %17 = sbr.rel (0) target = $region13
  $region12: #{vampnet_forward.2} parent=0 // pred_region
    _
  $region13: #{vampnet_forward.2} parent=0 // pred_fallthru
    _
  // Predicated region
  $region14: #{vampnet_forward.2} parent=0 // pred_check
    _
  $region15: #{vampnet_forward.2} parent=0 // pred_check_branch
    %19 = sbr.rel (0) target = $region17
  $region16: #{vampnet_forward.2} parent=0 // pred_region
    _
  $region17: #{vampnet_forward.2} parent=0 // pred_fallthru
    _
  // Predicated region
  $region18: #{vampnet_forward.2} parent=0 // pred_check
    _
  $region19: #{vampnet_forward.2} parent=0 // pred_check_branch
    %21 = sbr.rel (0) target = $region21
  $region20: #{vampnet_forward.2} parent=0 // pred_region
    _
  $region21: #{vampnet_forward.2} parent=0 // pred_fallthru
    _
  // Predicated region
  $region22: #{vampnet_forward.2} parent=0 // pred_check
    _
  $region23: #{vampnet_forward.2} parent=0 // pred_check_branch
    %23 = sbr.rel (0) target = $region25
  $region24: #{vampnet_forward.2} parent=0 // pred_region
    _
  $region25: #{vampnet_forward.2} parent=0 // pred_fallthru
    _
  // Predicated region
  $region26: #{vampnet_forward.2} parent=0 // pred_check
    _
  $region27: #{vampnet_forward.2} parent=0 // pred_check_branch
    %25 = sbr.rel (0) target = $region29
  $region28: #{vampnet_forward.2} parent=0 // pred_region
    _
  $region29: #{vampnet_forward.2} parent=0 // pred_fallthru
    _
  %v26 = vld [vmem:[%s0] sm:$0xff]
  %v27 = vld [vmem:[%s0 + $0x8] sm:$0xff]
  %v28 = vld [vmem:[%s0 + $0x10] sm:$0xff]
  %v29 = vld [vmem:[%s0 + $0x18] sm:$0xff]
  %v30 = vld [vmem:[%s1] sm:$0xff]
  %v31 = vld [vmem:[%s1 + $0x8] sm:$0xff]
  %v32 = vld [vmem:[%s1 + $0x10] sm:$0xff]
  %v33 = vld [vmem:[%s1 + $0x18] sm:$0xff]
  %v34 = vld [vmem:[%s1 + $0x20] sm:$0xff]
  %v35 = vld [vmem:[%s1 + $0x28] sm:$0xff]
  %v36 = vld [vmem:[%s1 + $0x30] sm:$0xff]
  %v37 = vld [vmem:[%s1 + $0x38] sm:$0xff]
  %v38 = vld [vmem:[%s1 + $0x40] sm:$0xff]
  %v39 = vld [vmem:[%s1 + $0x48] sm:$0xff]
  %v40 = vld [vmem:[%s1 + $0x50] sm:$0xff]
  %v41 = vld [vmem:[%s1 + $0x58] sm:$0xff]
  %v42 = vld [vmem:[%s1 + $0x60] sm:$0xff]
  %v43 = vld [vmem:[%s1 + $0x68] sm:$0xff]
  %v44 = vld [vmem:[%s1 + $0x70] sm:$0xff]
  %v45 = vld [vmem:[%s1 + $0x78] sm:$0xff]
  %v46 = vld [vmem:[%s1 + $0x80] sm:$0xff]
  %v47 = vld [vmem:[%s1 + $0x88] sm:$0xff]
  %v48 = vld [vmem:[%s1 + $0x90] sm:$0xff]
  %v49 = vld [vmem:[%s1 + $0x98] sm:$0xff]
  %v50 = vld [vmem:[%s1 + $0xa0] sm:$0xff]
  %v51 = vld [vmem:[%s1 + $0xa8] sm:$0xff]
  %v52 = vld [vmem:[%s1 + $0xb0] sm:$0xff]
  %v53 = vld [vmem:[%s1 + $0xb8] sm:$0xff]
  %v54 = vld [vmem:[%s1 + $0xc0] sm:$0xff]
  %v55 = vld [vmem:[%s1 + $0xc8] sm:$0xff]
  %v56 = vld [vmem:[%s1 + $0xd0] sm:$0xff]
  %v57 = vld [vmem:[%s1 + $0xd8] sm:$0xff]
  %v58 = vld [vmem:[%s1 + $0xe0] sm:$0xff]
  %v59 = vld [vmem:[%s1 + $0xe8] sm:$0xff]
  %v60 = vld [vmem:[%s1 + $0xf0] sm:$0xff]
  %v61 = vld [vmem:[%s1 + $0xf8] sm:$0xff]
  %v62 = vld [vmem:[%s2] sm:$0x1]
  %v64 = vlaneseq
  %v65 = vshrl.u32 %v64, 7
  %v66 = vsub.s32 0, %v65
  %v67 = vrot.slane %v62, %v66
  %69 = vmatprep.subr.mxu0 0.0
  %70 = vmatpush1.msra.mxu0 %v30
  %71 = vmatprep.subr.mxu0 0.0
  %72 = vmatpush1.msra.mxu0 %v31
  %73 = vmatprep.subr.mxu0 0.0
  %74 = vmatpush1.msra.mxu0 %v32
  %75 = vmatprep.subr.mxu0 0.0
  %76 = vmatpush1.msra.mxu0 %v33
  %77 = vmatprep.subr.mxu0 0.0
  %78 = vmatpush1.msra.mxu0 %v34
  %79 = vmatprep.subr.mxu0 0.0
  %80 = vmatpush1.msra.mxu0 %v35
  %81 = vmatprep.subr.mxu0 0.0
  %82 = vmatpush1.msra.mxu0 %v36
  %83 = vmatprep.subr.mxu0 0.0
  %84 = vmatpush1.msra.mxu0 %v37
  %85 = vmatprep.subr.mxu0 0.0
  %86 = vmatpush1.msra.mxu0 %v38
  %87 = vmatprep.subr.mxu0 0.0
  %88 = vmatpush1.msra.mxu0 %v39
  %89 = vmatprep.subr.mxu0 0.0
  %90 = vmatpush1.msra.mxu0 %v40
  %91 = vmatprep.subr.mxu0 0.0
  %92 = vmatpush1.msra.mxu0 %v41
  %93 = vmatprep.subr.mxu0 0.0
  %94 = vmatpush1.msra.mxu0 %v42
  %95 = vmatprep.subr.mxu0 0.0
  %96 = vmatpush1.msra.mxu0 %v43
  %97 = vmatprep.subr.mxu0 0.0
  %98 = vmatpush1.msra.mxu0 %v44
  %99 = vmatprep.subr.mxu0 0.0
  %100 = vmatpush1.msra.mxu0 %v45
  %101 = vmatprep.subr.mxu0 0.0
  %102 = vmatpush1.msra.mxu0 %v46
  %103 = vmatprep.subr.mxu0 0.0
  %104 = vmatpush1.msra.mxu0 %v47
  %105 = vmatprep.subr.mxu0 0.0
  %106 = vmatpush1.msra.mxu0 %v48
  %107 = vmatprep.subr.mxu0 0.0
  %108 = vmatpush1.msra.mxu0 %v49
  %109 = vmatprep.subr.mxu0 0.0
  %110 = vmatpush1.msra.mxu0 %v50
  %111 = vmatprep.subr.mxu0 0.0
  %112 = vmatpush1.msra.mxu0 %v51
  %113 = vmatprep.subr.mxu0 0.0
  %114 = vmatpush1.msra.mxu0 %v52
  %115 = vmatprep.subr.mxu0 0.0
  %116 = vmatpush1.msra.mxu0 %v53
  %117 = vmatprep.subr.mxu0 0.0
  %118 = vmatpush1.msra.mxu0 %v54
  %119 = vmatprep.subr.mxu0 0.0
  %120 = vmatpush1.msra.mxu0 %v55
  %121 = vmatprep.subr.mxu0 0.0
  %122 = vmatpush1.msra.mxu0 %v56
  %123 = vmatprep.subr.mxu0 0.0
  %124 = vmatpush1.msra.mxu0 %v57
  %125 = vmatprep.subr.mxu0 0.0
  %126 = vmatpush1.msra.mxu0 %v58
  %127 = vmatprep.subr.mxu0 0.0
  %128 = vmatpush1.msra.mxu0 %v59
  %129 = vmatprep.subr.mxu0 0.0
  %130 = vmatpush1.msra.mxu0 %v60
  %131 = vmatprep.subr.mxu0 0.0
  %132 = vmatpush1.msra.mxu0 %v61
  %133 = vmatprep.mubr.f32.mxu0 %v27
  %134 = vmatmul.mubr.f32.gmra.mrb[0].mxu0 %v26
  %v135 = vpop.f32.mrb[0].mxu0
  %v136 = vadd.f32 %v67, %v135
  %v137 = vpop.f32.mrb[0].mxu0
  %138 = vmatprep.mubr.f32.mxu0 %v29
  %139 = vmatmul.mubr.f32.gmra.mrb[0].mxu0 %v28
  %v140 = vpop.f32.mrb[0].mxu0
  %v141 = vadd.f32 %v67, %v140
  %v142 = vpop.f32.mrb[0].mxu0
  %143 = vdwg.mxu0
  %v144 = vld [vmem:[%s5] sm:$0xff]
  %v145 = vld [vmem:[%s5 + $0x8] sm:$0xff]
  %v146 = vld [vmem:[%s5 + $0x10] sm:$0xff]
  %v147 = vld [vmem:[%s5 + $0x18] sm:$0xff]
  %v148 = vld [vmem:[%s3] sm:$0xff]
  %v149 = vld [vmem:[%s4] sm:$0xff]
  %v150 = vld [vmem:[%s4 + $0x8] sm:$0xff]
  %v151 = vld [vmem:[%s4 + $0x10] sm:$0xff]
  %v152 = vld [vmem:[%s4 + $0x18] sm:$0xff]
  %v153 = vld [vmem:[%s4 + $0x20] sm:$0xff]
  %v154 = vld [vmem:[%s4 + $0x28] sm:$0xff]
  %v155 = vld [vmem:[%s4 + $0x30] sm:$0xff]
  %v156 = vld [vmem:[%s4 + $0x38] sm:$0xff]
  %v157 = vld [vmem:[%s4 + $0x40] sm:$0xff]
  %v158 = vld [vmem:[%s4 + $0x48] sm:$0xff]
  %v159 = vld [vmem:[%s4 + $0x50] sm:$0xff]
  %v160 = vld [vmem:[%s4 + $0x58] sm:$0xff]
  %v161 = vld [vmem:[%s4 + $0x60] sm:$0xff]
  %v162 = vld [vmem:[%s4 + $0x68] sm:$0xff]
  %v163 = vld [vmem:[%s4 + $0x70] sm:$0xff]
  %v164 = vld [vmem:[%s4 + $0x78] sm:$0xff]
  %v165 = vmul.f32 %v148, %v148
  %v166 = vrot.slane %v165, 4
  %v167 = vadd.f32 %v165, %v166
  %v168 = vrot.slane %v167, 2
  %v169 = vadd.f32 %v167, %v168
  %v170 = vrot.slane %v169, 1
  %v171 = vadd.f32 %v169, %v170
  %vm172 = vcmask 64512
  %v174 = vsel %vm172, %v136, 0
  %v177 = vsel %vm172, %v141, 0
  %179 = vmatprep.subr.mxu0 0.0
  %180 = vmatpush1.msra.mxu0 %v148
  %181 = vmatprep.subr.mxu0 0.0
  %182 = vmatpush1.msra.mxu0 0.0
  %183 = vmatprep.subr.mxu0 0.0
  %184 = vmatpush1.msra.mxu0 0.0
  %185 = vmatprep.subr.mxu0 0.0
  %186 = vmatpush1.msra.mxu0 0.0
  %187 = vmatprep.subr.mxu0 0.0
  %188 = vmatpush1.msra.mxu0 0.0
  %189 = vmatprep.subr.mxu0 0.0
  %190 = vmatpush1.msra.mxu0 0.0
  %191 = vmatprep.subr.mxu0 0.0
  %192 = vmatpush1.msra.mxu0 0.0
  %193 = vmatprep.subr.mxu0 0.0
  %194 = vmatpush1.msra.mxu0 0.0
  %195 = vmatprep.subr.mxu0 0.0
  %196 = vmatpush1.msra.mxu0 0.0
  %197 = vmatprep.subr.mxu0 0.0
  %198 = vmatpush1.msra.mxu0 0.0
  %199 = vmatprep.subr.mxu0 0.0
  %200 = vmatpush1.msra.mxu0 0.0
  %201 = vmatprep.subr.mxu0 0.0
  %202 = vmatpush1.msra.mxu0 0.0
  %203 = vmatprep.subr.mxu0 0.0
  %204 = vmatpush1.msra.mxu0 0.0
  %205 = vmatprep.subr.mxu0 0.0
  %206 = vmatpush1.msra.mxu0 0.0
  %207 = vmatprep.subr.mxu0 0.0
  %208 = vmatpush1.msra.mxu0 0.0
  %209 = vmatprep.subr.mxu0 0.0
  %210 = vmatpush1.msra.mxu0 0.0
  %211 = vmatprep.subr.mxu0 0.0
  %212 = vmatpush1.msra.mxu0 0.0
  %213 = vmatprep.subr.mxu0 0.0
  %214 = vmatpush1.msra.mxu0 0.0
  %215 = vmatprep.subr.mxu0 0.0
  %216 = vmatpush1.msra.mxu0 0.0
  %217 = vmatprep.subr.mxu0 0.0
  %218 = vmatpush1.msra.mxu0 0.0
  %219 = vmatprep.subr.mxu0 0.0
  %220 = vmatpush1.msra.mxu0 0.0
  %221 = vmatprep.subr.mxu0 0.0
  %222 = vmatpush1.msra.mxu0 0.0
  %223 = vmatprep.subr.mxu0 0.0
  %224 = vmatpush1.msra.mxu0 0.0
  %225 = vmatprep.subr.mxu0 0.0
  %226 = vmatpush1.msra.mxu0 0.0
  %227 = vmatprep.subr.mxu0 0.0
  %228 = vmatpush1.msra.mxu0 0.0
  %229 = vmatprep.subr.mxu0 0.0
  %230 = vmatpush1.msra.mxu0 0.0
  %231 = vmatprep.subr.mxu0 0.0
  %232 = vmatpush1.msra.mxu0 0.0
  %233 = vmatprep.subr.mxu0 0.0
  %234 = vmatpush1.msra.mxu0 0.0
  %235 = vmatprep.subr.mxu0 0.0
  %236 = vmatpush1.msra.mxu0 0.0
  %237 = vmatprep.subr.mxu0 0.0
  %238 = vmatpush1.msra.mxu0 0.0
  %239 = vmatprep.subr.mxu0 0.0
  %240 = vmatpush1.msra.mxu0 0.0
  %241 = vmatprep.subr.mxu0 0.0
  %242 = vmatpush1.msra.mxu0 0.0
  %243 = vmatprep.mubr.f32.mxu0 0.0
  %244 = vmatmul.mubr.f32.gmra.mrb[0].mxu0 %v174
  %v245 = vpop.f32.mrb[0].mxu0
  %v246 = vadd.f32 0.0, %v245
  %v247 = vpop.f32.mrb[0].mxu0
  %248 = vmatprep.mubr.f32.mxu0 0.0
  %249 = vmatmul.mubr.f32.gmra.mrb[0].mxu0 %v177
  %v250 = vpop.f32.mrb[0].mxu0
  %v251 = vadd.f32 0.0, %v250
  %v252 = vpop.f32.mrb[0].mxu0
  %253 = vdwg.mxu0
  %v254 = vmul.f32 %v246, -2.0
  %v255 = vmul.f32 %v251, -2.0
  %v256 = vadd.f32 %v254, %v171
  %v257 = vadd.f32 %v255, %v171
  %258 = vmin.xlane.f32.xlu0 %v256
  %v259 = vpop.xlane.xlu0 %258
  %260 = vmin.xlane.f32.xlu0 %v257
  %v261 = vpop.xlane.xlu0 %260
  %v262 = vlaneseq
  %v263 = vand.u32 %v262, 127
  %vm264 = vcmp.le.f32.partialorder %v256, %v259
  %vm265 = vcmp.le.f32.partialorder %v257, %v261
  %v266 = vsel %vm264, %v263, 128
  %v267 = vsel %vm265, %v263, 128
  %v268 = vand.u32 %v266, 65535
  %v269 = vshra.s32 %v266, 16
  %v270 = vcvt.s32.f32 %v268
  %v271 = vcvt.s32.f32 %v269
  %272 = vmin.xlane.f32.xlu0 %v271
  %v273 = vpop.xlane.xlu0 %272
  %vm274 = vcmp.eq.f32.partialorder %v271, %v273
  %v275 = vsel %vm274, %v270, inf
  %276 = vmin.xlane.f32.xlu0 %v275
  %v277 = vpop.xlane.xlu0 %276
  %v278 = vcvt.f32.s32 %v277
  %v279 = vcvt.f32.s32 %v273
  %v280 = vshll.u32 %v279, 16
  %v281 = vadd.s32 %v280, %v278
  %v282 = vand.u32 %v267, 65535
  %v283 = vshra.s32 %v267, 16
  %v284 = vcvt.s32.f32 %v282
  %v285 = vcvt.s32.f32 %v283
  %286 = vmin.xlane.f32.xlu0 %v285
  %v287 = vpop.xlane.xlu0 %286
  %vm288 = vcmp.eq.f32.partialorder %v285, %v287
  %v289 = vsel %vm288, %v284, inf
  %290 = vmin.xlane.f32.xlu0 %v289
  %v291 = vpop.xlane.xlu0 %290
  %v292 = vcvt.f32.s32 %v291
  %v293 = vcvt.f32.s32 %v287
  %v294 = vshll.u32 %v293, 16
  %v295 = vadd.s32 %v294, %v292
  %vm296 = vcmp.eq.s32.totalorder %v263, %v281
  %vm297 = vcmp.eq.s32.totalorder %v263, %v295
  %v298 = vsel %vm296, 1, 0
  %v299 = vsel %vm297, 1, 0
  %v300 = vcvt.s32.f32 %v298
  %v301 = vcvt.s32.f32 %v299
  %302 = vmatprep.subr.mxu0 0.0
  %303 = vmatpush1.msra.mxu0 %v149
  %304 = vmatprep.subr.mxu0 0.0
  %305 = vmatpush1.msra.mxu0 %v150
  %306 = vmatprep.subr.mxu0 0.0
  %307 = vmatpush1.msra.mxu0 %v151
  %308 = vmatprep.subr.mxu0 0.0
  %309 = vmatpush1.msra.mxu0 %v152
  %310 = vmatprep.subr.mxu0 0.0
  %311 = vmatpush1.msra.mxu0 %v153
  %312 = vmatprep.subr.mxu0 0.0
  %313 = vmatpush1.msra.mxu0 %v154
  %314 = vmatprep.subr.mxu0 0.0
  %315 = vmatpush1.msra.mxu0 %v155
  %316 = vmatprep.subr.mxu0 0.0
  %317 = vmatpush1.msra.mxu0 %v156
  %318 = vmatprep.subr.mxu0 0.0
  %319 = vmatpush1.msra.mxu0 %v157
  %320 = vmatprep.subr.mxu0 0.0
  %321 = vmatpush1.msra.mxu0 %v158
  %322 = vmatprep.subr.mxu0 0.0
  %323 = vmatpush1.msra.mxu0 %v159
  %324 = vmatprep.subr.mxu0 0.0
  %325 = vmatpush1.msra.mxu0 %v160
  %326 = vmatprep.subr.mxu0 0.0
  %327 = vmatpush1.msra.mxu0 %v161
  %328 = vmatprep.subr.mxu0 0.0
  %329 = vmatpush1.msra.mxu0 %v162
  %330 = vmatprep.subr.mxu0 0.0
  %331 = vmatpush1.msra.mxu0 %v163
  %332 = vmatprep.subr.mxu0 0.0
  %333 = vmatpush1.msra.mxu0 %v164
  %334 = vmatprep.subr.mxu0 0.0
  %335 = vmatpush1.msra.mxu0 0.0
  %336 = vmatprep.subr.mxu0 0.0
  %337 = vmatpush1.msra.mxu0 0.0
  %338 = vmatprep.subr.mxu0 0.0
  %339 = vmatpush1.msra.mxu0 0.0
  %340 = vmatprep.subr.mxu0 0.0
  %341 = vmatpush1.msra.mxu0 0.0
  %342 = vmatprep.subr.mxu0 0.0
  %343 = vmatpush1.msra.mxu0 0.0
  %344 = vmatprep.subr.mxu0 0.0
  %345 = vmatpush1.msra.mxu0 0.0
  %346 = vmatprep.subr.mxu0 0.0
  %347 = vmatpush1.msra.mxu0 0.0
  %348 = vmatprep.subr.mxu0 0.0
  %349 = vmatpush1.msra.mxu0 0.0
  %350 = vmatprep.subr.mxu0 0.0
  %351 = vmatpush1.msra.mxu0 0.0
  %352 = vmatprep.subr.mxu0 0.0
  %353 = vmatpush1.msra.mxu0 0.0
  %354 = vmatprep.subr.mxu0 0.0
  %355 = vmatpush1.msra.mxu0 0.0
  %356 = vmatprep.subr.mxu0 0.0
  %357 = vmatpush1.msra.mxu0 0.0
  %358 = vmatprep.subr.mxu0 0.0
  %359 = vmatpush1.msra.mxu0 0.0
  %360 = vmatprep.subr.mxu0 0.0
  %361 = vmatpush1.msra.mxu0 0.0
  %362 = vmatprep.subr.mxu0 0.0
  %363 = vmatpush1.msra.mxu0 0.0
  %364 = vmatprep.subr.mxu0 0.0
  %365 = vmatpush1.msra.mxu0 0.0
  %366 = vmatprep.mubr.f32.mxu0 0.0
  %367 = vmatmul.mubr.f32.gmra.mrb[0].mxu0 %v300
  %v368 = vpop.f32.mrb[0].mxu0
  %v369 = vadd.f32 0.0, %v368
  %v370 = vpop.f32.mrb[0].mxu0
  %371 = vmatprep.mubr.f32.mxu0 0.0
  %372 = vmatmul.mubr.f32.gmra.mrb[0].mxu0 %v301
  %v373 = vpop.f32.mrb[0].mxu0
  %v374 = vadd.f32 0.0, %v373
  %v375 = vpop.f32.mrb[0].mxu0
  %376 = vdwg.mxu0
  %s377 = scalar_lea.vmem %s3, 8
  %v378 = vld [vmem:[%s377] sm:$0xff]
  %s379 = scalar_lea.vmem %s4, 128
  %v380 = vld [vmem:[%s379] sm:$0xff]
  %v381 = vld [vmem:[%s379 + $0x8] sm:$0xff]
  %v382 = vld [vmem:[%s379 + $0x10] sm:$0xff]
  %v383 = vld [vmem:[%s379 + $0x18] sm:$0xff]
  %v384 = vld [vmem:[%s379 + $0x20] sm:$0xff]
  %v385 = vld [vmem:[%s379 + $0x28] sm:$0xff]
  %v386 = vld [vmem:[%s379 + $0x30] sm:$0xff]
  %v387 = vld [vmem:[%s379 + $0x38] sm:$0xff]
  %v388 = vld [vmem:[%s379 + $0x40] sm:$0xff]
  %v389 = vld [vmem:[%s379 + $0x48] sm:$0xff]
  %v390 = vld [vmem:[%s379 + $0x50] sm:$0xff]
  %v391 = vld [vmem:[%s379 + $0x58] sm:$0xff]
  %v392 = vld [vmem:[%s379 + $0x60] sm:$0xff]
  %v393 = vld [vmem:[%s379 + $0x68] sm:$0xff]
  %v394 = vld [vmem:[%s379 + $0x70] sm:$0xff]
  %v395 = vld [vmem:[%s379 + $0x78] sm:$0xff]
  %v396 = vmul.f32 %v378, %v378
  %v397 = vrot.slane %v396, 4
  %v398 = vadd.f32 %v396, %v397
  %v399 = vrot.slane %v398, 2
  %v400 = vadd.f32 %v398, %v399
  %v401 = vrot.slane %v400, 1
  %v402 = vadd.f32 %v400, %v401
  %403 = vrot.lane.b32.xlu0 %v136, 120
  %v404 = vpop.permute.xlu0 %403
  %405 = vrot.lane.b32.xlu0 %v141, 120
  %v406 = vpop.permute.xlu0 %405
  %v407 = vsel %vm172, %v404, 0
  %v409 = vsel %vm172, %v406, 0
  %411 = vmatprep.subr.mxu0 0.0
  %412 = vmatpush1.msra.mxu0 %v378
  %413 = vmatprep.subr.mxu0 0.0
  %414 = vmatpush1.msra.mxu0 0.0
  %415 = vmatprep.subr.mxu0 0.0
  %416 = vmatpush1.msra.mxu0 0.0
  %417 = vmatprep.subr.mxu0 0.0
  %418 = vmatpush1.msra.mxu0 0.0
  %419 = vmatprep.subr.mxu0 0.0
  %420 = vmatpush1.msra.mxu0 0.0
  %421 = vmatprep.subr.mxu0 0.0
  %422 = vmatpush1.msra.mxu0 0.0
  %423 = vmatprep.subr.mxu0 0.0
  %424 = vmatpush1.msra.mxu0 0.0
  %425 = vmatprep.subr.mxu0 0.0
  %426 = vmatpush1.msra.mxu0 0.0
  %427 = vmatprep.subr.mxu0 0.0
  %428 = vmatpush1.msra.mxu0 0.0
  %429 = vmatprep.subr.mxu0 0.0
  %430 = vmatpush1.msra.mxu0 0.0
  %431 = vmatprep.subr.mxu0 0.0
  %432 = vmatpush1.msra.mxu0 0.0
  %433 = vmatprep.subr.mxu0 0.0
  %434 = vmatpush1.msra.mxu0 0.0
  %435 = vmatprep.subr.mxu0 0.0
  %436 = vmatpush1.msra.mxu0 0.0
  %437 = vmatprep.subr.mxu0 0.0
  %438 = vmatpush1.msra.mxu0 0.0
  %439 = vmatprep.subr.mxu0 0.0
  %440 = vmatpush1.msra.mxu0 0.0
  %441 = vmatprep.subr.mxu0 0.0
  %442 = vmatpush1.msra.mxu0 0.0
  %443 = vmatprep.subr.mxu0 0.0
  %444 = vmatpush1.msra.mxu0 0.0
  %445 = vmatprep.subr.mxu0 0.0
  %446 = vmatpush1.msra.mxu0 0.0
  %447 = vmatprep.subr.mxu0 0.0
  %448 = vmatpush1.msra.mxu0 0.0
  %449 = vmatprep.subr.mxu0 0.0
  %450 = vmatpush1.msra.mxu0 0.0
  %451 = vmatprep.subr.mxu0 0.0
  %452 = vmatpush1.msra.mxu0 0.0
  %453 = vmatprep.subr.mxu0 0.0
  %454 = vmatpush1.msra.mxu0 0.0
  %455 = vmatprep.subr.mxu0 0.0
  %456 = vmatpush1.msra.mxu0 0.0
  %457 = vmatprep.subr.mxu0 0.0
  %458 = vmatpush1.msra.mxu0 0.0
  %459 = vmatprep.subr.mxu0 0.0
  %460 = vmatpush1.msra.mxu0 0.0
  %461 = vmatprep.subr.mxu0 0.0
  %462 = vmatpush1.msra.mxu0 0.0
  %463 = vmatprep.subr.mxu0 0.0
  %464 = vmatpush1.msra.mxu0 0.0
  %465 = vmatprep.subr.mxu0 0.0
  %466 = vmatpush1.msra.mxu0 0.0
  %467 = vmatprep.subr.mxu0 0.0
  %468 = vmatpush1.msra.mxu0 0.0
  %469 = vmatprep.subr.mxu0 0.0
  %470 = vmatpush1.msra.mxu0 0.0
  %471 = vmatprep.subr.mxu0 0.0
  %472 = vmatpush1.msra.mxu0 0.0
  %473 = vmatprep.subr.mxu0 0.0
  %474 = vmatpush1.msra.mxu0 0.0
  %475 = vmatprep.mubr.f32.mxu0 0.0
  %476 = vmatmul.mubr.f32.gmra.mrb[0].mxu0 %v407
  %v477 = vpop.f32.mrb[0].mxu0
  %v478 = vadd.f32 0.0, %v477
  %v479 = vpop.f32.mrb[0].mxu0
  %480 = vmatprep.mubr.f32.mxu0 0.0
  %481 = vmatmul.mubr.f32.gmra.mrb[0].mxu0 %v409
  %v482 = vpop.f32.mrb[0].mxu0
  %v483 = vadd.f32 0.0, %v482
  %v484 = vpop.f32.mrb[0].mxu0
  %485 = vdwg.mxu0
  %v486 = vmul.f32 %v478, -2.0
  %v487 = vmul.f32 %v483, -2.0
  %v488 = vadd.f32 %v486, %v402
  %v489 = vadd.f32 %v487, %v402
  %490 = vmin.xlane.f32.xlu0 %v488
  %v491 = vpop.xlane.xlu0 %490
  %492 = vmin.xlane.f32.xlu0 %v489
  %v493 = vpop.xlane.xlu0 %492
  %vm494 = vcmp.le.f32.partialorder %v488, %v491
  %vm495 = vcmp.le.f32.partialorder %v489, %v493
  %v496 = vsel %vm494, %v263, 128
  %v497 = vsel %vm495, %v263, 128
  %v498 = vand.u32 %v496, 65535
  %v499 = vshra.s32 %v496, 16
  %v500 = vcvt.s32.f32 %v498
  %v501 = vcvt.s32.f32 %v499
  %502 = vmin.xlane.f32.xlu0 %v501
  %v503 = vpop.xlane.xlu0 %502
  %vm504 = vcmp.eq.f32.partialorder %v501, %v503
  %v505 = vsel %vm504, %v500, inf
  %506 = vmin.xlane.f32.xlu0 %v505
  %v507 = vpop.xlane.xlu0 %506
  %v508 = vcvt.f32.s32 %v507
  %v509 = vcvt.f32.s32 %v503
  %v510 = vshll.u32 %v509, 16
  %v511 = vadd.s32 %v510, %v508
  %v512 = vand.u32 %v497, 65535
  %v513 = vshra.s32 %v497, 16
  %v514 = vcvt.s32.f32 %v512
  %v515 = vcvt.s32.f32 %v513
  %516 = vmin.xlane.f32.xlu0 %v515
  %v517 = vpop.xlane.xlu0 %516
  %vm518 = vcmp.eq.f32.partialorder %v515, %v517
  %v519 = vsel %vm518, %v514, inf
  %520 = vmin.xlane.f32.xlu0 %v519
  %v521 = vpop.xlane.xlu0 %520
  %v522 = vcvt.f32.s32 %v521
  %v523 = vcvt.f32.s32 %v517
  %v524 = vshll.u32 %v523, 16
  %v525 = vadd.s32 %v524, %v522
  %vm526 = vcmp.eq.s32.totalorder %v263, %v511
  %vm527 = vcmp.eq.s32.totalorder %v263, %v525
  %v528 = vsel %vm526, 1, 0
  %v529 = vsel %vm527, 1, 0
  %v530 = vcvt.s32.f32 %v528
  %v531 = vcvt.s32.f32 %v529
  %532 = vmatprep.subr.mxu0 0.0
  %533 = vmatpush1.msra.mxu0 %v380
  %534 = vmatprep.subr.mxu0 0.0
  %535 = vmatpush1.msra.mxu0 %v381
  %536 = vmatprep.subr.mxu0 0.0
  %537 = vmatpush1.msra.mxu0 %v382
  %538 = vmatprep.subr.mxu0 0.0
  %539 = vmatpush1.msra.mxu0 %v383
  %540 = vmatprep.subr.mxu0 0.0
  %541 = vmatpush1.msra.mxu0 %v384
  %542 = vmatprep.subr.mxu0 0.0
  %543 = vmatpush1.msra.mxu0 %v385
  %544 = vmatprep.subr.mxu0 0.0
  %545 = vmatpush1.msra.mxu0 %v386
  %546 = vmatprep.subr.mxu0 0.0
  %547 = vmatpush1.msra.mxu0 %v387
  %548 = vmatprep.subr.mxu0 0.0
  %549 = vmatpush1.msra.mxu0 %v388
  %550 = vmatprep.subr.mxu0 0.0
  %551 = vmatpush1.msra.mxu0 %v389
  %552 = vmatprep.subr.mxu0 0.0
  %553 = vmatpush1.msra.mxu0 %v390
  %554 = vmatprep.subr.mxu0 0.0
  %555 = vmatpush1.msra.mxu0 %v391
  %556 = vmatprep.subr.mxu0 0.0
  %557 = vmatpush1.msra.mxu0 %v392
  %558 = vmatprep.subr.mxu0 0.0
  %559 = vmatpush1.msra.mxu0 %v393
  %560 = vmatprep.subr.mxu0 0.0
  %561 = vmatpush1.msra.mxu0 %v394
  %562 = vmatprep.subr.mxu0 0.0
  %563 = vmatpush1.msra.mxu0 %v395
  %564 = vmatprep.subr.mxu0 0.0
  %565 = vmatpush1.msra.mxu0 0.0
  %566 = vmatprep.subr.mxu0 0.0
  %567 = vmatpush1.msra.mxu0 0.0
  %568 = vmatprep.subr.mxu0 0.0
  %569 = vmatpush1.msra.mxu0 0.0
  %570 = vmatprep.subr.mxu0 0.0
  %571 = vmatpush1.msra.mxu0 0.0
  %572 = vmatprep.subr.mxu0 0.0
  %573 = vmatpush1.msra.mxu0 0.0
  %574 = vmatprep.subr.mxu0 0.0
  %575 = vmatpush1.msra.mxu0 0.0
  %576 = vmatprep.subr.mxu0 0.0
  %577 = vmatpush1.msra.mxu0 0.0
  %578 = vmatprep.subr.mxu0 0.0
  %579 = vmatpush1.msra.mxu0 0.0
  %580 = vmatprep.subr.mxu0 0.0
  %581 = vmatpush1.msra.mxu0 0.0
  %582 = vmatprep.subr.mxu0 0.0
  %583 = vmatpush1.msra.mxu0 0.0
  %584 = vmatprep.subr.mxu0 0.0
  %585 = vmatpush1.msra.mxu0 0.0
  %586 = vmatprep.subr.mxu0 0.0
  %587 = vmatpush1.msra.mxu0 0.0
  %588 = vmatprep.subr.mxu0 0.0
  %589 = vmatpush1.msra.mxu0 0.0
  %590 = vmatprep.subr.mxu0 0.0
  %591 = vmatpush1.msra.mxu0 0.0
  %592 = vmatprep.subr.mxu0 0.0
  %593 = vmatpush1.msra.mxu0 0.0
  %594 = vmatprep.subr.mxu0 0.0
  %595 = vmatpush1.msra.mxu0 0.0
  %596 = vmatprep.mubr.f32.mxu0 0.0
  %597 = vmatmul.mubr.f32.gmra.mrb[0].mxu0 %v530
  %v598 = vpop.f32.mrb[0].mxu0
  %v599 = vadd.f32 0.0, %v598
  %v600 = vpop.f32.mrb[0].mxu0
  %601 = vmatprep.mubr.f32.mxu0 0.0
  %602 = vmatmul.mubr.f32.gmra.mrb[0].mxu0 %v531
  %v603 = vpop.f32.mrb[0].mxu0
  %v604 = vadd.f32 0.0, %v603
  %v605 = vpop.f32.mrb[0].mxu0
  %606 = vdwg.mxu0
  %v608 = vsel %vm172, %v599, 0
  %v611 = vsel %vm172, %v604, 0
  %613 = vmatprep.subr.mxu0 0.0
  %614 = vmatpush1.msra.mxu0 %v145
  %615 = vmatprep.subr.mxu0 0.0
  %616 = vmatpush1.msra.mxu0 0.0
  %617 = vmatprep.subr.mxu0 0.0
  %618 = vmatpush1.msra.mxu0 0.0
  %619 = vmatprep.subr.mxu0 0.0
  %620 = vmatpush1.msra.mxu0 0.0
  %621 = vmatprep.subr.mxu0 0.0
  %622 = vmatpush1.msra.mxu0 0.0
  %623 = vmatprep.subr.mxu0 0.0
  %624 = vmatpush1.msra.mxu0 0.0
  %625 = vmatprep.subr.mxu0 0.0
  %626 = vmatpush1.msra.mxu0 0.0
  %627 = vmatprep.subr.mxu0 0.0
  %628 = vmatpush1.msra.mxu0 0.0
  %629 = vmatprep.subr.mxu0 0.0
  %630 = vmatpush1.msra.mxu0 0.0
  %631 = vmatprep.subr.mxu0 0.0
  %632 = vmatpush1.msra.mxu0 0.0
  %633 = vmatprep.subr.mxu0 0.0
  %634 = vmatpush1.msra.mxu0 0.0
  %635 = vmatprep.subr.mxu0 0.0
  %636 = vmatpush1.msra.mxu0 0.0
  %637 = vmatprep.subr.mxu0 0.0
  %638 = vmatpush1.msra.mxu0 0.0
  %639 = vmatprep.subr.mxu0 0.0
  %640 = vmatpush1.msra.mxu0 0.0
  %641 = vmatprep.subr.mxu0 0.0
  %642 = vmatpush1.msra.mxu0 0.0
  %643 = vmatprep.subr.mxu0 0.0
  %644 = vmatpush1.msra.mxu0 0.0
  %645 = vmatprep.subr.mxu0 0.0
  %646 = vmatpush1.msra.mxu0 0.0
  %647 = vmatprep.subr.mxu0 0.0
  %648 = vmatpush1.msra.mxu0 0.0
  %649 = vmatprep.subr.mxu0 0.0
  %650 = vmatpush1.msra.mxu0 0.0
  %651 = vmatprep.subr.mxu0 0.0
  %652 = vmatpush1.msra.mxu0 0.0
  %653 = vmatprep.subr.mxu0 0.0
  %654 = vmatpush1.msra.mxu0 0.0
  %655 = vmatprep.subr.mxu0 0.0
  %656 = vmatpush1.msra.mxu0 0.0
  %657 = vmatprep.subr.mxu0 0.0
  %658 = vmatpush1.msra.mxu0 0.0
  %659 = vmatprep.subr.mxu0 0.0
  %660 = vmatpush1.msra.mxu0 0.0
  %661 = vmatprep.subr.mxu0 0.0
  %662 = vmatpush1.msra.mxu0 0.0
  %663 = vmatprep.subr.mxu0 0.0
  %664 = vmatpush1.msra.mxu0 0.0
  %665 = vmatprep.subr.mxu0 0.0
  %666 = vmatpush1.msra.mxu0 0.0
  %667 = vmatprep.subr.mxu0 0.0
  %668 = vmatpush1.msra.mxu0 0.0
  %669 = vmatprep.subr.mxu0 0.0
  %670 = vmatpush1.msra.mxu0 0.0
  %671 = vmatprep.subr.mxu0 0.0
  %672 = vmatpush1.msra.mxu0 0.0
  %673 = vmatprep.subr.mxu0 0.0
  %674 = vmatpush1.msra.mxu0 0.0
  %675 = vmatprep.subr.mxu0 0.0
  %676 = vmatpush1.msra.mxu0 0.0
  %677 = vmatprep.mubr.f32.mxu0 0.0
  %678 = vmatmul.mubr.f32.gmra.mrb[0].mxu0 %v608
  %v679 = vpop.f32.mrb[0].mxu0
  %v680 = vadd.f32 0.0, %v679
  %v681 = vpop.f32.mrb[0].mxu0
  %682 = vmatprep.mubr.f32.mxu0 0.0
  %683 = vmatmul.mubr.f32.gmra.mrb[0].mxu0 %v611
  %v684 = vpop.f32.mrb[0].mxu0
  %v685 = vadd.f32 0.0, %v684
  %v686 = vpop.f32.mrb[0].mxu0
  %687 = vdwg.mxu0
  %v689 = vsel %vm172, %v369, 0
  %v692 = vsel %vm172, %v374, 0
  %694 = vmatprep.subr.mxu0 0.0
  %695 = vmatpush1.msra.mxu0 %v144
  %696 = vmatprep.subr.mxu0 0.0
  %697 = vmatpush1.msra.mxu0 0.0
  %698 = vmatprep.subr.mxu0 0.0
  %699 = vmatpush1.msra.mxu0 0.0
  %700 = vmatprep.subr.mxu0 0.0
  %701 = vmatpush1.msra.mxu0 0.0
  %702 = vmatprep.subr.mxu0 0.0
  %703 = vmatpush1.msra.mxu0 0.0
  %704 = vmatprep.subr.mxu0 0.0
  %705 = vmatpush1.msra.mxu0 0.0
  %706 = vmatprep.subr.mxu0 0.0
  %707 = vmatpush1.msra.mxu0 0.0
  %708 = vmatprep.subr.mxu0 0.0
  %709 = vmatpush1.msra.mxu0 0.0
  %710 = vmatprep.subr.mxu0 0.0
  %711 = vmatpush1.msra.mxu0 0.0
  %712 = vmatprep.subr.mxu0 0.0
  %713 = vmatpush1.msra.mxu0 0.0
  %714 = vmatprep.subr.mxu0 0.0
  %715 = vmatpush1.msra.mxu0 0.0
  %716 = vmatprep.subr.mxu0 0.0
  %717 = vmatpush1.msra.mxu0 0.0
  %718 = vmatprep.subr.mxu0 0.0
  %719 = vmatpush1.msra.mxu0 0.0
  %720 = vmatprep.subr.mxu0 0.0
  %721 = vmatpush1.msra.mxu0 0.0
  %722 = vmatprep.subr.mxu0 0.0
  %723 = vmatpush1.msra.mxu0 0.0
  %724 = vmatprep.subr.mxu0 0.0
  %725 = vmatpush1.msra.mxu0 0.0
  %726 = vmatprep.subr.mxu0 0.0
  %727 = vmatpush1.msra.mxu0 0.0
  %728 = vmatprep.subr.mxu0 0.0
  %729 = vmatpush1.msra.mxu0 0.0
  %730 = vmatprep.subr.mxu0 0.0
  %731 = vmatpush1.msra.mxu0 0.0
  %732 = vmatprep.subr.mxu0 0.0
  %733 = vmatpush1.msra.mxu0 0.0
  %734 = vmatprep.subr.mxu0 0.0
  %735 = vmatpush1.msra.mxu0 0.0
  %736 = vmatprep.subr.mxu0 0.0
  %737 = vmatpush1.msra.mxu0 0.0
  %738 = vmatprep.subr.mxu0 0.0
  %739 = vmatpush1.msra.mxu0 0.0
  %740 = vmatprep.subr.mxu0 0.0
  %741 = vmatpush1.msra.mxu0 0.0
  %742 = vmatprep.subr.mxu0 0.0
  %743 = vmatpush1.msra.mxu0 0.0
  %744 = vmatprep.subr.mxu0 0.0
  %745 = vmatpush1.msra.mxu0 0.0
  %746 = vmatprep.subr.mxu0 0.0
  %747 = vmatpush1.msra.mxu0 0.0
  %748 = vmatprep.subr.mxu0 0.0
  %749 = vmatpush1.msra.mxu0 0.0
  %750 = vmatprep.subr.mxu0 0.0
  %751 = vmatpush1.msra.mxu0 0.0
  %752 = vmatprep.subr.mxu0 0.0
  %753 = vmatpush1.msra.mxu0 0.0
  %754 = vmatprep.subr.mxu0 0.0
  %755 = vmatpush1.msra.mxu0 0.0
  %756 = vmatprep.subr.mxu0 0.0
  %757 = vmatpush1.msra.mxu0 0.0
  %758 = vmatprep.mubr.f32.mxu0 0.0
  %759 = vmatmul.mubr.f32.gmra.mrb[0].mxu0 %v689
  %v760 = vpop.f32.mrb[0].mxu0
  %v761 = vadd.f32 %v680, %v760
  %v762 = vpop.f32.mrb[0].mxu0
  %763 = vmatprep.mubr.f32.mxu0 0.0
  %764 = vmatmul.mubr.f32.gmra.mrb[0].mxu0 %v692
  %v765 = vpop.f32.mrb[0].mxu0
  %v766 = vadd.f32 %v685, %v765
  %v767 = vpop.f32.mrb[0].mxu0
  %768 = vdwg.mxu0
  %s769 = scalar_lea.vmem %s3, 16
  %v770 = vld [vmem:[%s769] sm:$0xff]
  %s771 = scalar_lea.vmem %s4, 256
  %v772 = vld [vmem:[%s771] sm:$0xff]
  %v773 = vld [vmem:[%s771 + $0x8] sm:$0xff]
  %v774 = vld [vmem:[%s771 + $0x10] sm:$0xff]
  %v775 = vld [vmem:[%s771 + $0x18] sm:$0xff]
  %v776 = vld [vmem:[%s771 + $0x20] sm:$0xff]
  %v777 = vld [vmem:[%s771 + $0x28] sm:$0xff]
  %v778 = vld [vmem:[%s771 + $0x30] sm:$0xff]
  %v779 = vld [vmem:[%s771 + $0x38] sm:$0xff]
  %v780 = vld [vmem:[%s771 + $0x40] sm:$0xff]
  %v781 = vld [vmem:[%s771 + $0x48] sm:$0xff]
  %v782 = vld [vmem:[%s771 + $0x50] sm:$0xff]
  %v783 = vld [vmem:[%s771 + $0x58] sm:$0xff]
  %v784 = vld [vmem:[%s771 + $0x60] sm:$0xff]
  %v785 = vld [vmem:[%s771 + $0x68] sm:$0xff]
  %v786 = vld [vmem:[%s771 + $0x70] sm:$0xff]
  %v787 = vld [vmem:[%s771 + $0x78] sm:$0xff]
  %v788 = vmul.f32 %v770, %v770
  %v789 = vrot.slane %v788, 4
  %v790 = vadd.f32 %v788, %v789
  %v791 = vrot.slane %v790, 2
  %v792 = vadd.f32 %v790, %v791
  %v793 = vrot.slane %v792, 1
  %v794 = vadd.f32 %v792, %v793
  %795 = vrot.lane.b32.xlu0 %v136, 112
  %v796 = vpop.permute.xlu0 %795
  %797 = vrot.lane.b32.xlu0 %v141, 112
  %v798 = vpop.permute.xlu0 %797
  %v799 = vsel %vm172, %v796, 0
  %v801 = vsel %vm172, %v798, 0
  %803 = vmatprep.subr.mxu0 0.0
  %804 = vmatpush1.msra.mxu0 %v770
  %805 = vmatprep.subr.mxu0 0.0
  %806 = vmatpush1.msra.mxu0 0.0
  %807 = vmatprep.subr.mxu0 0.0
  %808 = vmatpush1.msra.mxu0 0.0
  %809 = vmatprep.subr.mxu0 0.0
  %810 = vmatpush1.msra.mxu0 0.0
  %811 = vmatprep.subr.mxu0 0.0
  %812 = vmatpush1.msra.mxu0 0.0
  %813 = vmatprep.subr.mxu0 0.0
  %814 = vmatpush1.msra.mxu0 0.0
  %815 = vmatprep.subr.mxu0 0.0
  %816 = vmatpush1.msra.mxu0 0.0
  %817 = vmatprep.subr.mxu0 0.0
  %818 = vmatpush1.msra.mxu0 0.0
  %819 = vmatprep.subr.mxu0 0.0
  %820 = vmatpush1.msra.mxu0 0.0
  %821 = vmatprep.subr.mxu0 0.0
  %822 = vmatpush1.msra.mxu0 0.0
  %823 = vmatprep.subr.mxu0 0.0
  %824 = vmatpush1.msra.mxu0 0.0
  %825 = vmatprep.subr.mxu0 0.0
  %826 = vmatpush1.msra.mxu0 0.0
  %827 = vmatprep.subr.mxu0 0.0
  %828 = vmatpush1.msra.mxu0 0.0
  %829 = vmatprep.subr.mxu0 0.0
  %830 = vmatpush1.msra.mxu0 0.0
  %831 = vmatprep.subr.mxu0 0.0
  %832 = vmatpush1.msra.mxu0 0.0
  %833 = vmatprep.subr.mxu0 0.0
  %834 = vmatpush1.msra.mxu0 0.0
  %835 = vmatprep.subr.mxu0 0.0
  %836 = vmatpush1.msra.mxu0 0.0
  %837 = vmatprep.subr.mxu0 0.0
  %838 = vmatpush1.msra.mxu0 0.0
  %839 = vmatprep.subr.mxu0 0.0
  %840 = vmatpush1.msra.mxu0 0.0
  %841 = vmatprep.subr.mxu0 0.0
  %842 = vmatpush1.msra.mxu0 0.0
  %843 = vmatprep.subr.mxu0 0.0
  %844 = vmatpush1.msra.mxu0 0.0
  %845 = vmatprep.subr.mxu0 0.0
  %846 = vmatpush1.msra.mxu0 0.0
  %847 = vmatprep.subr.mxu0 0.0
  %848 = vmatpush1.msra.mxu0 0.0
  %849 = vmatprep.subr.mxu0 0.0
  %850 = vmatpush1.msra.mxu0 0.0
  %851 = vmatprep.subr.mxu0 0.0
  %852 = vmatpush1.msra.mxu0 0.0
  %853 = vmatprep.subr.mxu0 0.0
  %854 = vmatpush1.msra.mxu0 0.0
  %855 = vmatprep.subr.mxu0 0.0
  %856 = vmatpush1.msra.mxu0 0.0
  %857 = vmatprep.subr.mxu0 0.0
  %858 = vmatpush1.msra.mxu0 0.0
  %859 = vmatprep.subr.mxu0 0.0
  %860 = vmatpush1.msra.mxu0 0.0
  %861 = vmatprep.subr.mxu0 0.0
  %862 = vmatpush1.msra.mxu0 0.0
  %863 = vmatprep.subr.mxu0 0.0
  %864 = vmatpush1.msra.mxu0 0.0
  %865 = vmatprep.subr.mxu0 0.0
  %866 = vmatpush1.msra.mxu0 0.0
  %867 = vmatprep.mubr.f32.mxu0 0.0
  %868 = vmatmul.mubr.f32.gmra.mrb[0].mxu0 %v799
  %v869 = vpop.f32.mrb[0].mxu0
  %v870 = vadd.f32 0.0, %v869
  %v871 = vpop.f32.mrb[0].mxu0
  %872 = vmatprep.mubr.f32.mxu0 0.0
  %873 = vmatmul.mubr.f32.gmra.mrb[0].mxu0 %v801
  %v874 = vpop.f32.mrb[0].mxu0
  %v875 = vadd.f32 0.0, %v874
  %v876 = vpop.f32.mrb[0].mxu0
  %877 = vdwg.mxu0
  %v878 = vmul.f32 %v870, -2.0
  %v879 = vmul.f32 %v875, -2.0
  %v880 = vadd.f32 %v878, %v794
  %v881 = vadd.f32 %v879, %v794
  %882 = vmin.xlane.f32.xlu0 %v880
  %v883 = vpop.xlane.xlu0 %882
  %884 = vmin.xlane.f32.xlu0 %v881
  %v885 = vpop.xlane.xlu0 %884
  %vm886 = vcmp.le.f32.partialorder %v880, %v883
  %vm887 = vcmp.le.f32.partialorder %v881, %v885
  %v888 = vsel %vm886, %v263, 128
  %v889 = vsel %vm887, %v263, 128
  %v890 = vand.u32 %v888, 65535
  %v891 = vshra.s32 %v888, 16
  %v892 = vcvt.s32.f32 %v890
  %v893 = vcvt.s32.f32 %v891
  %894 = vmin.xlane.f32.xlu0 %v893
  %v895 = vpop.xlane.xlu0 %894
  %vm896 = vcmp.eq.f32.partialorder %v893, %v895
  %v897 = vsel %vm896, %v892, inf
  %898 = vmin.xlane.f32.xlu0 %v897
  %v899 = vpop.xlane.xlu0 %898
  %v900 = vcvt.f32.s32 %v899
  %v901 = vcvt.f32.s32 %v895
  %v902 = vshll.u32 %v901, 16
  %v903 = vadd.s32 %v902, %v900
  %v904 = vand.u32 %v889, 65535
  %v905 = vshra.s32 %v889, 16
  %v906 = vcvt.s32.f32 %v904
  %v907 = vcvt.s32.f32 %v905
  %908 = vmin.xlane.f32.xlu0 %v907
  %v909 = vpop.xlane.xlu0 %908
  %vm910 = vcmp.eq.f32.partialorder %v907, %v909
  %v911 = vsel %vm910, %v906, inf
  %912 = vmin.xlane.f32.xlu0 %v911
  %v913 = vpop.xlane.xlu0 %912
  %v914 = vcvt.f32.s32 %v913
  %v915 = vcvt.f32.s32 %v909
  %v916 = vshll.u32 %v915, 16
  %v917 = vadd.s32 %v916, %v914
  %vm918 = vcmp.eq.s32.totalorder %v263, %v903
  %vm919 = vcmp.eq.s32.totalorder %v263, %v917
  %v920 = vsel %vm918, 1, 0
  %v921 = vsel %vm919, 1, 0
  %v922 = vcvt.s32.f32 %v920
  %v923 = vcvt.s32.f32 %v921
  %924 = vmatprep.subr.mxu0 0.0
  %925 = vmatpush1.msra.mxu0 %v772
  %926 = vmatprep.subr.mxu0 0.0
  %927 = vmatpush1.msra.mxu0 %v773
  %928 = vmatprep.subr.mxu0 0.0
  %929 = vmatpush1.msra.mxu0 %v774
  %930 = vmatprep.subr.mxu0 0.0
  %931 = vmatpush1.msra.mxu0 %v775
  %932 = vmatprep.subr.mxu0 0.0
  %933 = vmatpush1.msra.mxu0 %v776
  %934 = vmatprep.subr.mxu0 0.0
  %935 = vmatpush1.msra.mxu0 %v777
  %936 = vmatprep.subr.mxu0 0.0
  %937 = vmatpush1.msra.mxu0 %v778
  %938 = vmatprep.subr.mxu0 0.0
  %939 = vmatpush1.msra.mxu0 %v779
  %940 = vmatprep.subr.mxu0 0.0
  %941 = vmatpush1.msra.mxu0 %v780
  %942 = vmatprep.subr.mxu0 0.0
  %943 = vmatpush1.msra.mxu0 %v781
  %944 = vmatprep.subr.mxu0 0.0
  %945 = vmatpush1.msra.mxu0 %v782
  %946 = vmatprep.subr.mxu0 0.0
  %947 = vmatpush1.msra.mxu0 %v783
  %948 = vmatprep.subr.mxu0 0.0
  %949 = vmatpush1.msra.mxu0 %v784
  %950 = vmatprep.subr.mxu0 0.0
  %951 = vmatpush1.msra.mxu0 %v785
  %952 = vmatprep.subr.mxu0 0.0
  %953 = vmatpush1.msra.mxu0 %v786
  %954 = vmatprep.subr.mxu0 0.0
  %955 = vmatpush1.msra.mxu0 %v787
  %956 = vmatprep.subr.mxu0 0.0
  %957 = vmatpush1.msra.mxu0 0.0
  %958 = vmatprep.subr.mxu0 0.0
  %959 = vmatpush1.msra.mxu0 0.0
  %960 = vmatprep.subr.mxu0 0.0
  %961 = vmatpush1.msra.mxu0 0.0
  %962 = vmatprep.subr.mxu0 0.0
  %963 = vmatpush1.msra.mxu0 0.0
  %964 = vmatprep.subr.mxu0 0.0
  %965 = vmatpush1.msra.mxu0 0.0
  %966 = vmatprep.subr.mxu0 0.0
  %967 = vmatpush1.msra.mxu0 0.0
  %968 = vmatprep.subr.mxu0 0.0
  %969 = vmatpush1.msra.mxu0 0.0
  %970 = vmatprep.subr.mxu0 0.0
  %971 = vmatpush1.msra.mxu0 0.0
  %972 = vmatprep.subr.mxu0 0.0
  %973 = vmatpush1.msra.mxu0 0.0
  %974 = vmatprep.subr.mxu0 0.0
  %975 = vmatpush1.msra.mxu0 0.0
  %976 = vmatprep.subr.mxu0 0.0
  %977 = vmatpush1.msra.mxu0 0.0
  %978 = vmatprep.subr.mxu0 0.0
  %979 = vmatpush1.msra.mxu0 0.0
  %980 = vmatprep.subr.mxu0 0.0
  %981 = vmatpush1.msra.mxu0 0.0
  %982 = vmatprep.subr.mxu0 0.0
  %983 = vmatpush1.msra.mxu0 0.0
  %984 = vmatprep.subr.mxu0 0.0
  %985 = vmatpush1.msra.mxu0 0.0
  %986 = vmatprep.subr.mxu0 0.0
  %987 = vmatpush1.msra.mxu0 0.0
  %988 = vmatprep.mubr.f32.mxu0 0.0
  %989 = vmatmul.mubr.f32.gmra.mrb[0].mxu0 %v922
  %v990 = vpop.f32.mrb[0].mxu0
  %v991 = vadd.f32 0.0, %v990
  %v992 = vpop.f32.mrb[0].mxu0
  %993 = vmatprep.mubr.f32.mxu0 0.0
  %994 = vmatmul.mubr.f32.gmra.mrb[0].mxu0 %v923
  %v995 = vpop.f32.mrb[0].mxu0
  %v996 = vadd.f32 0.0, %v995
  %v997 = vpop.f32.mrb[0].mxu0
  %998 = vdwg.mxu0
  %v1000 = vsel %vm172, %v991, 0
  %v1003 = vsel %vm172, %v996, 0
  %1005 = vmatprep.subr.mxu0 0.0
  %1006 = vmatpush1.msra.mxu0 %v146
  %1007 = vmatprep.subr.mxu0 0.0
  %1008 = vmatpush1.msra.mxu0 0.0
  %1009 = vmatprep.subr.mxu0 0.0
  %1010 = vmatpush1.msra.mxu0 0.0
  %1011 = vmatprep.subr.mxu0 0.0
  %1012 = vmatpush1.msra.mxu0 0.0
  %1013 = vmatprep.subr.mxu0 0.0
  %1014 = vmatpush1.msra.mxu0 0.0
  %1015 = vmatprep.subr.mxu0 0.0
  %1016 = vmatpush1.msra.mxu0 0.0
  %1017 = vmatprep.subr.mxu0 0.0
  %1018 = vmatpush1.msra.mxu0 0.0
  %1019 = vmatprep.subr.mxu0 0.0
  %1020 = vmatpush1.msra.mxu0 0.0
  %1021 = vmatprep.subr.mxu0 0.0
  %1022 = vmatpush1.msra.mxu0 0.0
  %1023 = vmatprep.subr.mxu0 0.0
  %1024 = vmatpush1.msra.mxu0 0.0
  %1025 = vmatprep.subr.mxu0 0.0
  %1026 = vmatpush1.msra.mxu0 0.0
  %1027 = vmatprep.subr.mxu0 0.0
  %1028 = vmatpush1.msra.mxu0 0.0
  %1029 = vmatprep.subr.mxu0 0.0
  %1030 = vmatpush1.msra.mxu0 0.0
  %1031 = vmatprep.subr.mxu0 0.0
  %1032 = vmatpush1.msra.mxu0 0.0
  %1033 = vmatprep.subr.mxu0 0.0
  %1034 = vmatpush1.msra.mxu0 0.0
  %1035 = vmatprep.subr.mxu0 0.0
  %1036 = vmatpush1.msra.mxu0 0.0
  %1037 = vmatprep.subr.mxu0 0.0
  %1038 = vmatpush1.msra.mxu0 0.0
  %1039 = vmatprep.subr.mxu0 0.0
  %1040 = vmatpush1.msra.mxu0 0.0
  %1041 = vmatprep.subr.mxu0 0.0
  %1042 = vmatpush1.msra.mxu0 0.0
  %1043 = vmatprep.subr.mxu0 0.0
  %1044 = vmatpush1.msra.mxu0 0.0
  %1045 = vmatprep.subr.mxu0 0.0
  %1046 = vmatpush1.msra.mxu0 0.0
  %1047 = vmatprep.subr.mxu0 0.0
  %1048 = vmatpush1.msra.mxu0 0.0
  %1049 = vmatprep.subr.mxu0 0.0
  %1050 = vmatpush1.msra.mxu0 0.0
  %1051 = vmatprep.subr.mxu0 0.0
  %1052 = vmatpush1.msra.mxu0 0.0
  %1053 = vmatprep.subr.mxu0 0.0
  %1054 = vmatpush1.msra.mxu0 0.0
  %1055 = vmatprep.subr.mxu0 0.0
  %1056 = vmatpush1.msra.mxu0 0.0
  %1057 = vmatprep.subr.mxu0 0.0
  %1058 = vmatpush1.msra.mxu0 0.0
  %1059 = vmatprep.subr.mxu0 0.0
  %1060 = vmatpush1.msra.mxu0 0.0
  %1061 = vmatprep.subr.mxu0 0.0
  %1062 = vmatpush1.msra.mxu0 0.0
  %1063 = vmatprep.subr.mxu0 0.0
  %1064 = vmatpush1.msra.mxu0 0.0
  %1065 = vmatprep.subr.mxu0 0.0
  %1066 = vmatpush1.msra.mxu0 0.0
  %1067 = vmatprep.subr.mxu0 0.0
  %1068 = vmatpush1.msra.mxu0 0.0
  %1069 = vmatprep.mubr.f32.mxu0 0.0
  %1070 = vmatmul.mubr.f32.gmra.mrb[0].mxu0 %v1000
  %v1071 = vpop.f32.mrb[0].mxu0
  %v1072 = vadd.f32 0.0, %v1071
  %v1073 = vpop.f32.mrb[0].mxu0
  %1074 = vmatprep.mubr.f32.mxu0 0.0
  %1075 = vmatmul.mubr.f32.gmra.mrb[0].mxu0 %v1003
  %v1076 = vpop.f32.mrb[0].mxu0
  %v1077 = vadd.f32 0.0, %v1076
  %v1078 = vpop.f32.mrb[0].mxu0
  %1079 = vdwg.mxu0
  %v1080 = vadd.f32 %v761, %v1072
  %v1081 = vadd.f32 %v766, %v1077
  %s1082 = scalar_lea.vmem %s3, 24
  %v1083 = vld [vmem:[%s1082] sm:$0xff]
  %s1084 = scalar_lea.vmem %s4, 384
  %v1085 = vld [vmem:[%s1084] sm:$0xff]
  %v1086 = vld [vmem:[%s1084 + $0x8] sm:$0xff]
  %v1087 = vld [vmem:[%s1084 + $0x10] sm:$0xff]
  %v1088 = vld [vmem:[%s1084 + $0x18] sm:$0xff]
  %v1089 = vld [vmem:[%s1084 + $0x20] sm:$0xff]
  %v1090 = vld [vmem:[%s1084 + $0x28] sm:$0xff]
  %v1091 = vld [vmem:[%s1084 + $0x30] sm:$0xff]
  %v1092 = vld [vmem:[%s1084 + $0x38] sm:$0xff]
  %v1093 = vld [vmem:[%s1084 + $0x40] sm:$0xff]
  %v1094 = vld [vmem:[%s1084 + $0x48] sm:$0xff]
  %v1095 = vld [vmem:[%s1084 + $0x50] sm:$0xff]
  %v1096 = vld [vmem:[%s1084 + $0x58] sm:$0xff]
  %v1097 = vld [vmem:[%s1084 + $0x60] sm:$0xff]
  %v1098 = vld [vmem:[%s1084 + $0x68] sm:$0xff]
  %v1099 = vld [vmem:[%s1084 + $0x70] sm:$0xff]
  %v1100 = vld [vmem:[%s1084 + $0x78] sm:$0xff]
  %v1101 = vmul.f32 %v1083, %v1083
  %v1102 = vrot.slane %v1101, 4
  %v1103 = vadd.f32 %v1101, %v1102
  %v1104 = vrot.slane %v1103, 2
  %v1105 = vadd.f32 %v1103, %v1104
  %v1106 = vrot.slane %v1105, 1
  %v1107 = vadd.f32 %v1105, %v1106
  %1108 = vrot.lane.b32.xlu0 %v136, 104
  %v1109 = vpop.permute.xlu0 %1108
  %1110 = vrot.lane.b32.xlu0 %v141, 104
  %v1111 = vpop.permute.xlu0 %1110
  %v1112 = vsel %vm172, %v1109, 0
  %v1114 = vsel %vm172, %v1111, 0
  %1116 = vmatprep.subr.mxu0 0.0
  %1117 = vmatpush1.msra.mxu0 %v1083
  %1118 = vmatprep.subr.mxu0 0.0
  %1119 = vmatpush1.msra.mxu0 0.0
  %1120 = vmatprep.subr.mxu0 0.0
  %1121 = vmatpush1.msra.mxu0 0.0
  %1122 = vmatprep.subr.mxu0 0.0
  %1123 = vmatpush1.msra.mxu0 0.0
  %1124 = vmatprep.subr.mxu0 0.0
  %1125 = vmatpush1.msra.mxu0 0.0
  %1126 = vmatprep.subr.mxu0 0.0
  %1127 = vmatpush1.msra.mxu0 0.0
  %1128 = vmatprep.subr.mxu0 0.0
  %1129 = vmatpush1.msra.mxu0 0.0
  %1130 = vmatprep.subr.mxu0 0.0
  %1131 = vmatpush1.msra.mxu0 0.0
  %1132 = vmatprep.subr.mxu0 0.0
  %1133 = vmatpush1.msra.mxu0 0.0
  %1134 = vmatprep.subr.mxu0 0.0
  %1135 = vmatpush1.msra.mxu0 0.0
  %1136 = vmatprep.subr.mxu0 0.0
  %1137 = vmatpush1.msra.mxu0 0.0
  %1138 = vmatprep.subr.mxu0 0.0
  %1139 = vmatpush1.msra.mxu0 0.0
  %1140 = vmatprep.subr.mxu0 0.0
  %1141 = vmatpush1.msra.mxu0 0.0
  %1142 = vmatprep.subr.mxu0 0.0
  %1143 = vmatpush1.msra.mxu0 0.0
  %1144 = vmatprep.subr.mxu0 0.0
  %1145 = vmatpush1.msra.mxu0 0.0
  %1146 = vmatprep.subr.mxu0 0.0
  %1147 = vmatpush1.msra.mxu0 0.0
  %1148 = vmatprep.subr.mxu0 0.0
  %1149 = vmatpush1.msra.mxu0 0.0
  %1150 = vmatprep.subr.mxu0 0.0
  %1151 = vmatpush1.msra.mxu0 0.0
  %1152 = vmatprep.subr.mxu0 0.0
  %1153 = vmatpush1.msra.mxu0 0.0
  %1154 = vmatprep.subr.mxu0 0.0
  %1155 = vmatpush1.msra.mxu0 0.0
  %1156 = vmatprep.subr.mxu0 0.0
  %1157 = vmatpush1.msra.mxu0 0.0
  %1158 = vmatprep.subr.mxu0 0.0
  %1159 = vmatpush1.msra.mxu0 0.0
  %1160 = vmatprep.subr.mxu0 0.0
  %1161 = vmatpush1.msra.mxu0 0.0
  %1162 = vmatprep.subr.mxu0 0.0
  %1163 = vmatpush1.msra.mxu0 0.0
  %1164 = vmatprep.subr.mxu0 0.0
  %1165 = vmatpush1.msra.mxu0 0.0
  %1166 = vmatprep.subr.mxu0 0.0
  %1167 = vmatpush1.msra.mxu0 0.0
  %1168 = vmatprep.subr.mxu0 0.0
  %1169 = vmatpush1.msra.mxu0 0.0
  %1170 = vmatprep.subr.mxu0 0.0
  %1171 = vmatpush1.msra.mxu0 0.0
  %1172 = vmatprep.subr.mxu0 0.0
  %1173 = vmatpush1.msra.mxu0 0.0
  %1174 = vmatprep.subr.mxu0 0.0
  %1175 = vmatpush1.msra.mxu0 0.0
  %1176 = vmatprep.subr.mxu0 0.0
  %1177 = vmatpush1.msra.mxu0 0.0
  %1178 = vmatprep.subr.mxu0 0.0
  %1179 = vmatpush1.msra.mxu0 0.0
  %1180 = vmatprep.mubr.f32.mxu0 0.0
  %1181 = vmatmul.mubr.f32.gmra.mrb[0].mxu0 %v1112
  %v1182 = vpop.f32.mrb[0].mxu0
  %v1183 = vadd.f32 0.0, %v1182
  %v1184 = vpop.f32.mrb[0].mxu0
  %1185 = vmatprep.mubr.f32.mxu0 0.0
  %1186 = vmatmul.mubr.f32.gmra.mrb[0].mxu0 %v1114
  %v1187 = vpop.f32.mrb[0].mxu0
  %v1188 = vadd.f32 0.0, %v1187
  %v1189 = vpop.f32.mrb[0].mxu0
  %1190 = vdwg.mxu0
  %v1191 = vmul.f32 %v1183, -2.0
  %v1192 = vmul.f32 %v1188, -2.0
  %v1193 = vadd.f32 %v1191, %v1107
  %v1194 = vadd.f32 %v1192, %v1107
  %1195 = vmin.xlane.f32.xlu0 %v1193
  %v1196 = vpop.xlane.xlu0 %1195
  %1197 = vmin.xlane.f32.xlu0 %v1194
  %v1198 = vpop.xlane.xlu0 %1197
  %vm1199 = vcmp.le.f32.partialorder %v1193, %v1196
  %vm1200 = vcmp.le.f32.partialorder %v1194, %v1198
  %v1201 = vsel %vm1199, %v263, 128
  %v1202 = vsel %vm1200, %v263, 128
  %v1203 = vand.u32 %v1201, 65535
  %v1204 = vshra.s32 %v1201, 16
  %v1205 = vcvt.s32.f32 %v1203
  %v1206 = vcvt.s32.f32 %v1204
  %1207 = vmin.xlane.f32.xlu0 %v1206
  %v1208 = vpop.xlane.xlu0 %1207
  %vm1209 = vcmp.eq.f32.partialorder %v1206, %v1208
  %v1210 = vsel %vm1209, %v1205, inf
  %1211 = vmin.xlane.f32.xlu0 %v1210
  %v1212 = vpop.xlane.xlu0 %1211
  %v1213 = vcvt.f32.s32 %v1212
  %v1214 = vcvt.f32.s32 %v1208
  %v1215 = vshll.u32 %v1214, 16
  %v1216 = vadd.s32 %v1215, %v1213
  %v1217 = vand.u32 %v1202, 65535
  %v1218 = vshra.s32 %v1202, 16
  %v1219 = vcvt.s32.f32 %v1217
  %v1220 = vcvt.s32.f32 %v1218
  %1221 = vmin.xlane.f32.xlu0 %v1220
  %v1222 = vpop.xlane.xlu0 %1221
  %vm1223 = vcmp.eq.f32.partialorder %v1220, %v1222
  %v1224 = vsel %vm1223, %v1219, inf
  %1225 = vmin.xlane.f32.xlu0 %v1224
  %v1226 = vpop.xlane.xlu0 %1225
  %v1227 = vcvt.f32.s32 %v1226
  %v1228 = vcvt.f32.s32 %v1222
  %v1229 = vshll.u32 %v1228, 16
  %v1230 = vadd.s32 %v1229, %v1227
  %vm1231 = vcmp.eq.s32.totalorder %v263, %v1216
  %vm1232 = vcmp.eq.s32.totalorder %v263, %v1230
  %v1233 = vsel %vm1231, 1, 0
  %v1234 = vsel %vm1232, 1, 0
  %v1235 = vcvt.s32.f32 %v1233
  %v1236 = vcvt.s32.f32 %v1234
  %1237 = vmatprep.subr.mxu0 0.0
  %1238 = vmatpush1.msra.mxu0 %v1085
  %1239 = vmatprep.subr.mxu0 0.0
  %1240 = vmatpush1.msra.mxu0 %v1086
  %1241 = vmatprep.subr.mxu0 0.0
  %1242 = vmatpush1.msra.mxu0 %v1087
  %1243 = vmatprep.subr.mxu0 0.0
  %1244 = vmatpush1.msra.mxu0 %v1088
  %1245 = vmatprep.subr.mxu0 0.0
  %1246 = vmatpush1.msra.mxu0 %v1089
  %1247 = vmatprep.subr.mxu0 0.0
  %1248 = vmatpush1.msra.mxu0 %v1090
  %1249 = vmatprep.subr.mxu0 0.0
  %1250 = vmatpush1.msra.mxu0 %v1091
  %1251 = vmatprep.subr.mxu0 0.0
  %1252 = vmatpush1.msra.mxu0 %v1092
  %1253 = vmatprep.subr.mxu0 0.0
  %1254 = vmatpush1.msra.mxu0 %v1093
  %1255 = vmatprep.subr.mxu0 0.0
  %1256 = vmatpush1.msra.mxu0 %v1094
  %1257 = vmatprep.subr.mxu0 0.0
  %1258 = vmatpush1.msra.mxu0 %v1095
  %1259 = vmatprep.subr.mxu0 0.0
  %1260 = vmatpush1.msra.mxu0 %v1096
  %1261 = vmatprep.subr.mxu0 0.0
  %1262 = vmatpush1.msra.mxu0 %v1097
  %1263 = vmatprep.subr.mxu0 0.0
  %1264 = vmatpush1.msra.mxu0 %v1098
  %1265 = vmatprep.subr.mxu0 0.0
  %1266 = vmatpush1.msra.mxu0 %v1099
  %1267 = vmatprep.subr.mxu0 0.0
  %1268 = vmatpush1.msra.mxu0 %v1100
  %1269 = vmatprep.subr.mxu0 0.0
  %1270 = vmatpush1.msra.mxu0 0.0
  %1271 = vmatprep.subr.mxu0 0.0
  %1272 = vmatpush1.msra.mxu0 0.0
  %1273 = vmatprep.subr.mxu0 0.0
  %1274 = vmatpush1.msra.mxu0 0.0
  %1275 = vmatprep.subr.mxu0 0.0
  %1276 = vmatpush1.msra.mxu0 0.0
  %1277 = vmatprep.subr.mxu0 0.0
  %1278 = vmatpush1.msra.mxu0 0.0
  %1279 = vmatprep.subr.mxu0 0.0
  %1280 = vmatpush1.msra.mxu0 0.0
  %1281 = vmatprep.subr.mxu0 0.0
  %1282 = vmatpush1.msra.mxu0 0.0
  %1283 = vmatprep.subr.mxu0 0.0
  %1284 = vmatpush1.msra.mxu0 0.0
  %1285 = vmatprep.subr.mxu0 0.0
  %1286 = vmatpush1.msra.mxu0 0.0
  %1287 = vmatprep.subr.mxu0 0.0
  %1288 = vmatpush1.msra.mxu0 0.0
  %1289 = vmatprep.subr.mxu0 0.0
  %1290 = vmatpush1.msra.mxu0 0.0
  %1291 = vmatprep.subr.mxu0 0.0
  %1292 = vmatpush1.msra.mxu0 0.0
  %1293 = vmatprep.subr.mxu0 0.0
  %1294 = vmatpush1.msra.mxu0 0.0
  %1295 = vmatprep.subr.mxu0 0.0
  %1296 = vmatpush1.msra.mxu0 0.0
  %1297 = vmatprep.subr.mxu0 0.0
  %1298 = vmatpush1.msra.mxu0 0.0
  %1299 = vmatprep.subr.mxu0 0.0
  %1300 = vmatpush1.msra.mxu0 0.0
  %1301 = vmatprep.mubr.f32.mxu0 0.0
  %1302 = vmatmul.mubr.f32.gmra.mrb[0].mxu0 %v1235
  %v1303 = vpop.f32.mrb[0].mxu0
  %v1304 = vadd.f32 0.0, %v1303
  %v1305 = vpop.f32.mrb[0].mxu0
  %1306 = vmatprep.mubr.f32.mxu0 0.0
  %1307 = vmatmul.mubr.f32.gmra.mrb[0].mxu0 %v1236
  %v1308 = vpop.f32.mrb[0].mxu0
  %v1309 = vadd.f32 0.0, %v1308
  %v1310 = vpop.f32.mrb[0].mxu0
  %1311 = vdwg.mxu0
  %v1313 = vsel %vm172, %v1304, 0
  %v1316 = vsel %vm172, %v1309, 0
  %1318 = vmatprep.subr.mxu0 0.0
  %1319 = vmatpush1.msra.mxu0 %v147
  %1320 = vmatprep.subr.mxu0 0.0
  %1321 = vmatpush1.msra.mxu0 0.0
  %1322 = vmatprep.subr.mxu0 0.0
  %1323 = vmatpush1.msra.mxu0 0.0
  %1324 = vmatprep.subr.mxu0 0.0
  %1325 = vmatpush1.msra.mxu0 0.0
  %1326 = vmatprep.subr.mxu0 0.0
  %1327 = vmatpush1.msra.mxu0 0.0
  %1328 = vmatprep.subr.mxu0 0.0
  %1329 = vmatpush1.msra.mxu0 0.0
  %1330 = vmatprep.subr.mxu0 0.0
  %1331 = vmatpush1.msra.mxu0 0.0
  %1332 = vmatprep.subr.mxu0 0.0
  %1333 = vmatpush1.msra.mxu0 0.0
  %1334 = vmatprep.subr.mxu0 0.0
  %1335 = vmatpush1.msra.mxu0 0.0
  %1336 = vmatprep.subr.mxu0 0.0
  %1337 = vmatpush1.msra.mxu0 0.0
  %1338 = vmatprep.subr.mxu0 0.0
  %1339 = vmatpush1.msra.mxu0 0.0
  %1340 = vmatprep.subr.mxu0 0.0
  %1341 = vmatpush1.msra.mxu0 0.0
  %1342 = vmatprep.subr.mxu0 0.0
  %1343 = vmatpush1.msra.mxu0 0.0
  %1344 = vmatprep.subr.mxu0 0.0
  %1345 = vmatpush1.msra.mxu0 0.0
  %1346 = vmatprep.subr.mxu0 0.0
  %1347 = vmatpush1.msra.mxu0 0.0
  %1348 = vmatprep.subr.mxu0 0.0
  %1349 = vmatpush1.msra.mxu0 0.0
  %1350 = vmatprep.subr.mxu0 0.0
  %1351 = vmatpush1.msra.mxu0 0.0
  %1352 = vmatprep.subr.mxu0 0.0
  %1353 = vmatpush1.msra.mxu0 0.0
  %1354 = vmatprep.subr.mxu0 0.0
  %1355 = vmatpush1.msra.mxu0 0.0
  %1356 = vmatprep.subr.mxu0 0.0
  %1357 = vmatpush1.msra.mxu0 0.0
  %1358 = vmatprep.subr.mxu0 0.0
  %1359 = vmatpush1.msra.mxu0 0.0
  %1360 = vmatprep.subr.mxu0 0.0
  %1361 = vmatpush1.msra.mxu0 0.0
  %1362 = vmatprep.subr.mxu0 0.0
  %1363 = vmatpush1.msra.mxu0 0.0
  %1364 = vmatprep.subr.mxu0 0.0
  %1365 = vmatpush1.msra.mxu0 0.0
  %1366 = vmatprep.subr.mxu0 0.0
  %1367 = vmatpush1.msra.mxu0 0.0
  %1368 = vmatprep.subr.mxu0 0.0
  %1369 = vmatpush1.msra.mxu0 0.0
  %1370 = vmatprep.subr.mxu0 0.0
  %1371 = vmatpush1.msra.mxu0 0.0
  %1372 = vmatprep.subr.mxu0 0.0
  %1373 = vmatpush1.msra.mxu0 0.0
  %1374 = vmatprep.subr.mxu0 0.0
  %1375 = vmatpush1.msra.mxu0 0.0
  %1376 = vmatprep.subr.mxu0 0.0
  %1377 = vmatpush1.msra.mxu0 0.0
  %1378 = vmatprep.subr.mxu0 0.0
  %1379 = vmatpush1.msra.mxu0 0.0
  %1380 = vmatprep.subr.mxu0 0.0
  %1381 = vmatpush1.msra.mxu0 0.0
  %1382 = vmatprep.mubr.f32.mxu0 0.0
  %1383 = vmatmul.mubr.f32.gmra.mrb[0].mxu0 %v1313
  %v1384 = vpop.f32.mrb[0].mxu0
  %v1385 = vadd.f32 0.0, %v1384
  %v1386 = vpop.f32.mrb[0].mxu0
  %1387 = vmatprep.mubr.f32.mxu0 0.0
  %1388 = vmatmul.mubr.f32.gmra.mrb[0].mxu0 %v1316
  %v1389 = vpop.f32.mrb[0].mxu0
  %v1390 = vadd.f32 0.0, %v1389
  %v1391 = vpop.f32.mrb[0].mxu0
  %1392 = vdwg.mxu0
  %v1393 = vadd.f32 %v1080, %v1385
  %v1394 = vadd.f32 %v1081, %v1390
  %v1395 = vld [vmem:[%s6] sm:$0x1]
  %v1397 = vlaneseq
  %v1398 = vshrl.u32 %v1397, 7
  %v1399 = vsub.s32 0, %v1398
  %v1400 = vrot.slane %v1395, %v1399
  %v1402 = vadd.f32 %v1393, %v1400
  %v1403 = vadd.f32 %v1394, %v1400
  %1404 = vst [vmem:[%s7] sm:$0xff] %v1402
  %1405 = vst [vmem:[%s7 + $0x8] sm:$0xff] %v1403
  // Predicated region
  $region30: #{vampnet_forward.2} parent=0 // pred_check
    _
  $region31: #{vampnet_forward.2} parent=0 // pred_check_branch
    %1407 = sbr.rel (0) target = $region33
  $region32: #{vampnet_forward.2} parent=0 // pred_region
    _
  $region33: #{vampnet_forward.2} parent=0 // pred_fallthru
    _
  // Predicated region
  $region34: #{vampnet_forward.2} parent=0 // pred_check
    _
  $region35: #{vampnet_forward.2} parent=0 // pred_check_branch
    %1409 = sbr.rel (0) target = $region37
  $region36: #{vampnet_forward.2} parent=0 // pred_region
    _
  $region37: #{vampnet_forward.2} parent=0 // pred_fallthru
    _

</llo_original>
